<compile_context>
chip_gen: v7x
topology: tpu7x:2x2x1
jax: 0.10.0
libtpu: 0.0.40
codegen_flags: <defaults>
</compile_context>

<pallas_src>
import functools

import jax
import jax.numpy as jnp
import numpy as np
from jax import lax
from jax.experimental import pallas as pl
from jax.experimental.pallas import tpu as pltpu

EPS = 1e-5  # torch.nn.InstanceNorm2d default


# ----------------------------- kernel helpers ------------------------------ #

def _im2col_3x3(ref, H, W):
    """(H*W, 9*C) im2col matrix of an already zero-padded (H+2, W+2, C) ref."""
    cols = []
    for ky in range(3):
        for kx in range(3):
            patch = ref[ky:ky + H, kx:kx + W, :]
            cols.append(patch.reshape(H * W, patch.shape[-1]))
    return jnp.concatenate(cols, axis=-1)


def _instance_norm_relu(a, gamma, beta):
    """InstanceNorm2d(affine=True) + ReLU on a flattened (H*W, C) map (f32)."""
    mean = jnp.mean(a, axis=0, keepdims=True)
    var = jnp.mean((a - mean) ** 2, axis=0, keepdims=True)   # biased var (torch)
    y = (a - mean) * lax.rsqrt(var + EPS)
    return jnp.maximum(y * gamma + beta, 0.0)


# --------------------------------- kernel ---------------------------------- #

def dense_block_kernel(pmx_ref, wa_ref, wb_ref, wc_ref, vec_ref, bt_ref, p_ref,
                       out_ref, pad_c1, pad_c2,
                       *, H, W, Cin, F, Cout):
    H2, W2 = H // 2, W // 2

    # --- maintain the 1-pixel zero halo of the intermediate feature maps.
    # Only the border is written (interior is fully overwritten below); done
    # every grid step so it stays correct under "parallel" megacore sharding.
    zrow = jnp.zeros((1, W + 2, F), jnp.float32)
    zcol = jnp.zeros((H + 2, 1, F), jnp.float32)
    for buf in (pad_c1, pad_c2):
        buf[0:1, :, :] = zrow
        buf[H + 1:H + 2, :, :] = zrow
        buf[:, 0:1, :] = zcol
        buf[:, W + 1:W + 2, :] = zcol

    # packed per-channel vectors: rows = [b1, g1, be1, b2, g2, be2]
    b1, g1, be1 = vec_ref[0:1, :], vec_ref[1:2, :], vec_ref[2:3, :]
    b2, g2, be2 = vec_ref[3:4, :], vec_ref[4:5, :], vec_ref[5:6, :]

    # im2col of the input image: precomputed in the wrapper (bf16, lane-dense).
    pm_x = pmx_ref[0]                                   # (HW, 9*Cin)

    # Fused matmul over pm_x -> columns [a1 (F) | a2_x (F) | t_x (Cout)].
    ya = jnp.dot(pm_x, wa_ref[...], preferred_element_type=jnp.float32)

    # conv1 = ConvX(x): InstanceNorm + ReLU on the first F columns.
    a1 = ya[:, 0:F] + b1
    h1 = _instance_norm_relu(a1, g1, be1)
    pad_c1[1:H + 1, 1:W + 1, :] = h1.reshape(H, W, F)

    pm_c1 = _im2col_3x3(pad_c1, H, W).astype(jnp.bfloat16)       # (HW, 9*F)
    # Fused matmul over pm_c1 -> columns [a2_c1 (F) | t_c1 (Cout)].
    yb = jnp.dot(pm_c1, wb_ref[...], preferred_element_type=jnp.float32)

    # conv2 = ConvX(concat([x, conv1])): concat realized as column sums.
    a2 = ya[:, F:2 * F] + yb[:, 0:F] + b2
    h2 = _instance_norm_relu(a2, g2, be2)
    pad_c2[1:H + 1, 1:W + 1, :] = h2.reshape(H, W, F)

    pm_c2 = _im2col_3x3(pad_c2, H, W).astype(jnp.bfloat16)       # (HW, 9*F)
    yc = jnp.dot(pm_c2, wc_ref[...], preferred_element_type=jnp.float32)

    # transition conv over concat([x, conv1, conv2]) (no norm, no activation)
    t_full = ya[:, 2 * F:2 * F + Cout] + yb[:, F:F + Cout] + yc + bt_ref[...]

    # AvgPool2d(2,2) commuted through the linear transition conv: one small
    # exact f32 matmul with the constant 0.25 pooling matrix (no strided reads,
    # no extra scratch buffers).
    t_pool = jnp.dot(p_ref[...], t_full, preferred_element_type=jnp.float32)
    out_ref[0] = t_pool.reshape(H2, W2, Cout).astype(out_ref.dtype)


# --------------------------------- wrapper --------------------------------- #

def dense_block_forward(x_nchw, params):
    """Pallas forward of dense_block (num_conv=2, bn_in='in', down_sample=True).

    x_nchw: (N, Cin, H, W) float32.  Returns (N, Cout, H//2, W//2) float32.
    """
    x = jnp.transpose(x_nchw, (0, 2, 3, 1)).astype(jnp.float32)   # NCHW -> NHWC
    N, H, W, Cin = x.shape
    F = params["w1"].shape[-1]
    Cout = params["wt"].shape[-1]
    H2, W2 = H // 2, W // 2
    HW = H * W

    # spatial zero-pad + x-side im2col hoisted to XLA: done once, and the
    # kernel's input DMA becomes lane-dense (9*Cin lanes per row).
    xpad = jnp.pad(x, ((0, 0), (1, 1), (1, 1), (0, 0)))
    cols = []
    for ky in range(3):
        for kx in range(3):
            cols.append(xpad[:, ky:ky + H, kx:kx + W, :].reshape(N, HW, Cin))
    pm_x = jnp.concatenate(cols, axis=-1).astype(jnp.bfloat16)    # (N, HW, 9*Cin)

    def flat(w):                      # (3,3,C,F) -> (9*C, F), (ky,kx,c) row order
        return w.reshape(-1, w.shape[-1])

    # Fused-output weight slabs (bf16); column order matches the kernel slicing.
    wA = jnp.concatenate([flat(params["w1"]),                       # -> a1
                          flat(params["w2"][:, :, :Cin, :]),        # -> a2 (x part)
                          flat(params["wt"][:, :, :Cin, :])],       # -> t  (x part)
                         axis=1).astype(jnp.bfloat16)               # (9Cin, 2F+Cout)
    wB = jnp.concatenate([flat(params["w2"][:, :, Cin:, :]),        # -> a2 (c1 part)
                          flat(params["wt"][:, :, Cin:Cin + F, :])],  # -> t (c1 part)
                         axis=1).astype(jnp.bfloat16)               # (9F, F+Cout)
    wC = flat(params["wt"][:, :, Cin + F:, :]).astype(jnp.bfloat16)  # (9F, Cout)

    vecF = jnp.concatenate([params["b1"], params["g1"], params["be1"],
                            params["b2"], params["g2"], params["be2"]],
                           axis=0)                                  # (6, F) f32
    bt = params["bt"]                                               # (1, Cout) f32

    # Constant 2x2/stride-2 average-pooling matrix over row-major (y, x) pixels.
    rows = np.arange(H2 * W2)
    oi, oj = rows // W2, rows % W2
    P = np.zeros((H2 * W2, HW), np.float32)
    for dy in range(2):
        for dx in range(2):
            P[rows, (2 * oi + dy) * W + (2 * oj + dx)] = 0.25
    P = jnp.asarray(P)                                              # (H2*W2, HW)

    kernel = functools.partial(dense_block_kernel,
                               H=H, W=W, Cin=Cin, F=F, Cout=Cout)

    def const_spec(arr):
        nd = arr.ndim
        return pl.BlockSpec(arr.shape, lambda b, _n=nd: (0,) * _n)

    out_nhwc = pl.pallas_call(
        kernel,
        out_shape=jax.ShapeDtypeStruct((N, H2, W2, Cout), jnp.float32),
        grid=(N,),
        in_specs=[pl.BlockSpec((1, HW, 9 * Cin), lambda b: (b, 0, 0)),
                  const_spec(wA), const_spec(wB), const_spec(wC),
                  const_spec(vecF), const_spec(bt), const_spec(P)],
        out_specs=pl.BlockSpec((1, H2, W2, Cout), lambda b: (b, 0, 0, 0)),
        scratch_shapes=[
            pltpu.VMEM((H + 2, W + 2, F), jnp.float32),   # padded conv1 out
            pltpu.VMEM((H + 2, W + 2, F), jnp.float32),   # padded conv2 out
        ],
        compiler_params=pltpu.CompilerParams(
            dimension_semantics=("parallel",)),           # v7x: 2 TCs, batch-parallel
    )(pm_x, wA, wB, wC, vecF, bt, P)

    return jnp.transpose(out_nhwc, (0, 3, 1, 2))          # NHWC -> NCHW


# ------------------------------ pure-JAX reference -------------------------- #

def _conv_ref(x_nhwc, w_hwio, b):
    y = lax.conv_general_dilated(
        x_nhwc, w_hwio, window_strides=(1, 1), padding=((1, 1), (1, 1)),
        dimension_numbers=("NHWC", "HWIO", "NHWC"))
    return y + b.reshape(1, 1, 1, -1)


def _in_relu_ref(y, gamma, beta):
    mean = jnp.mean(y, axis=(1, 2), keepdims=True)
    var = jnp.mean((y - mean) ** 2, axis=(1, 2), keepdims=True)
    y = (y - mean) / jnp.sqrt(var + EPS)
    y = y * gamma.reshape(1, 1, 1, -1) + beta.reshape(1, 1, 1, -1)
    return jnp.maximum(y, 0.0)


def dense_block_reference(x_nchw, params):
    x = jnp.transpose(x_nchw, (0, 2, 3, 1)).astype(jnp.float32)
    c1 = _in_relu_ref(_conv_ref(x, params["w1"], params["b1"]),
                      params["g1"], params["be1"])
    x2 = jnp.concatenate([x, c1], axis=-1)
    c2 = _in_relu_ref(_conv_ref(x2, params["w2"], params["b2"]),
                      params["g2"], params["be2"])
    x3 = jnp.concatenate([x, c1, c2], axis=-1)
    t = _conv_ref(x3, params["wt"], params["bt"])
    N, H, W, C = t.shape
    pooled = t.reshape(N, H // 2, 2, W // 2, 2, C).mean(axis=(2, 4))
    return jnp.transpose(pooled, (0, 3, 1, 2))


# --------------------------------- params ---------------------------------- #

def init_params(key, Cin, F, Cout):
    ks = jax.random.split(key, 10)
    p = {}
    p["w1"] = 0.1 * jax.random.normal(ks[0], (3, 3, Cin, F), jnp.float32)
    p["b1"] = 0.05 * jax.random.normal(ks[1], (1, F), jnp.float32)
    p["g1"] = 1.0 + 0.1 * jax.random.normal(ks[2], (1, F), jnp.float32)
    p["be1"] = 0.05 * jax.random.normal(ks[3], (1, F), jnp.float32)
    p["w2"] = 0.1 * jax.random.normal(ks[4], (3, 3, Cin + F, F), jnp.float32)
    p["b2"] = 0.05 * jax.random.normal(ks[5], (1, F), jnp.float32)
    p["g2"] = 1.0 + 0.1 * jax.random.normal(ks[6], (1, F), jnp.float32)
    p["be2"] = 0.05 * jax.random.normal(ks[7], (1, F), jnp.float32)
    p["wt"] = 0.1 * jax.random.normal(ks[8], (3, 3, Cin + 2 * F, Cout), jnp.float32)
    p["bt"] = 0.05 * jax.random.normal(ks[9], (1, Cout), jnp.float32)
    return p


# ---------------------------------- main ------------------------------------ #

if __name__ == "__main__":
    N, Cin, H, W = 2, 4, 16, 16
    F, Cout = 8, 8

    key = jax.random.PRNGKey(0)
    kx, kp = jax.random.split(key)
    x = jax.random.normal(kx, (N, Cin, H, W), jnp.float32)
    params = init_params(kp, Cin, F, Cout)

    out = dense_block_forward(x, params)
    out = jax.block_until_ready(out)

    assert out.shape == (N, Cout, H // 2, W // 2), out.shape

    ref = dense_block_reference(x, params)
    np.testing.assert_allclose(np.asarray(out), np.asarray(ref),
                               rtol=2e-2, atol=2e-2)

    print("KERNEL_OK")
</pallas_src>

<mosaic_0001>
module attributes {stable_mosaic.version = 11 : i64} {
  func.func @dense_block_kernel(%arg0: i32, %arg1: memref<1x256x36xbf16, #tpu.memory_space<vmem>>, %arg2: memref<36x24xbf16, #tpu.memory_space<vmem>>, %arg3: memref<72x16xbf16, #tpu.memory_space<vmem>>, %arg4: memref<72x8xbf16, #tpu.memory_space<vmem>>, %arg5: memref<6x8xf32, #tpu.memory_space<vmem>>, %arg6: memref<1x8xf32, #tpu.memory_space<vmem>>, %arg7: memref<64x256xf32, #tpu.memory_space<vmem>>, %arg8: memref<1x8x8x8xf32, #tpu.memory_space<vmem>>, %arg9: memref<18x18x8xf32, #tpu.memory_space<vmem>>, %arg10: memref<18x18x8xf32, #tpu.memory_space<vmem>>) attributes {dimension_semantics = [#tpu.dimension_semantics<parallel>], iteration_bounds = array<i64: 2>, scalar_prefetch = 0 : i64, scratch_operands = 2 : i64, tpu.core_type = #tpu.core_type<tc>, window_params = [{transform_indices = @transform_0, window_bounds = array<i64: 1, 256, 36>}, {pipeline_mode = #tpu.pipeline_mode<synchronous>, transform_indices = @transform_1, window_bounds = array<i64: 36, 24>}, {pipeline_mode = #tpu.pipeline_mode<synchronous>, transform_indices = @transform_2, window_bounds = array<i64: 72, 16>}, {pipeline_mode = #tpu.pipeline_mode<synchronous>, transform_indices = @transform_3, window_bounds = array<i64: 72, 8>}, {pipeline_mode = #tpu.pipeline_mode<synchronous>, transform_indices = @transform_4, window_bounds = array<i64: 6, 8>}, {pipeline_mode = #tpu.pipeline_mode<synchronous>, transform_indices = @transform_5, window_bounds = array<i64: 1, 8>}, {pipeline_mode = #tpu.pipeline_mode<synchronous>, transform_indices = @transform_6, window_bounds = array<i64: 64, 256>}, {transform_indices = @transform_7, window_bounds = array<i64: 1, 8, 8, 8>}]} {
    %cst = arith.constant 0.000000e+00 : f32
    %0 = vector.broadcast %cst : f32 to vector<1x18x8xf32>
    %cst_0 = arith.constant 0.000000e+00 : f32
    %1 = vector.broadcast %cst_0 : f32 to vector<18x1x8xf32>
    %c0 = arith.constant 0 : index
    %c0_1 = arith.constant 0 : index
    %c0_2 = arith.constant 0 : index
    %2 = vector.load %arg9[%c0, %c0_1, %c0_2] : memref<18x18x8xf32, #tpu.memory_space<vmem>>, vector<1x18x8xf32>
    tpu.vector_store %arg9[%c0, %c0_1, %c0_2], %0 {strides = array<i32>} : memref<18x18x8xf32, #tpu.memory_space<vmem>>, vector<1x18x8xf32>,
    %c17 = arith.constant 17 : index
    %c0_3 = arith.constant 0 : index
    %c0_4 = arith.constant 0 : index
    %3 = vector.load %arg9[%c17, %c0_3, %c0_4] : memref<18x18x8xf32, #tpu.memory_space<vmem>>, vector<1x18x8xf32>
    tpu.vector_store %arg9[%c17, %c0_3, %c0_4], %0 {strides = array<i32>} : memref<18x18x8xf32, #tpu.memory_space<vmem>>, vector<1x18x8xf32>,
    %c0_5 = arith.constant 0 : index
    %c0_6 = arith.constant 0 : index
    %c0_7 = arith.constant 0 : index
    %4 = vector.load %arg9[%c0_5, %c0_6, %c0_7] : memref<18x18x8xf32, #tpu.memory_space<vmem>>, vector<18x1x8xf32>
    tpu.vector_store %arg9[%c0_5, %c0_6, %c0_7], %1 {strides = array<i32>} : memref<18x18x8xf32, #tpu.memory_space<vmem>>, vector<18x1x8xf32>,
    %c0_8 = arith.constant 0 : index
    %c17_9 = arith.constant 17 : index
    %c0_10 = arith.constant 0 : index
    %5 = vector.load %arg9[%c0_8, %c17_9, %c0_10] : memref<18x18x8xf32, #tpu.memory_space<vmem>>, vector<18x1x8xf32>
    tpu.vector_store %arg9[%c0_8, %c17_9, %c0_10], %1 {strides = array<i32>} : memref<18x18x8xf32, #tpu.memory_space<vmem>>, vector<18x1x8xf32>,
    %c0_11 = arith.constant 0 : index
    %c0_12 = arith.constant 0 : index
    %c0_13 = arith.constant 0 : index
    %6 = vector.load %arg10[%c0_11, %c0_12, %c0_13] : memref<18x18x8xf32, #tpu.memory_space<vmem>>, vector<1x18x8xf32>
    tpu.vector_store %arg10[%c0_11, %c0_12, %c0_13], %0 {strides = array<i32>} : memref<18x18x8xf32, #tpu.memory_space<vmem>>, vector<1x18x8xf32>,
    %c17_14 = arith.constant 17 : index
    %c0_15 = arith.constant 0 : index
    %c0_16 = arith.constant 0 : index
    %7 = vector.load %arg10[%c17_14, %c0_15, %c0_16] : memref<18x18x8xf32, #tpu.memory_space<vmem>>, vector<1x18x8xf32>
    tpu.vector_store %arg10[%c17_14, %c0_15, %c0_16], %0 {strides = array<i32>} : memref<18x18x8xf32, #tpu.memory_space<vmem>>, vector<1x18x8xf32>,
    %c0_17 = arith.constant 0 : index
    %c0_18 = arith.constant 0 : index
    %c0_19 = arith.constant 0 : index
    %8 = vector.load %arg10[%c0_17, %c0_18, %c0_19] : memref<18x18x8xf32, #tpu.memory_space<vmem>>, vector<18x1x8xf32>
    tpu.vector_store %arg10[%c0_17, %c0_18, %c0_19], %1 {strides = array<i32>} : memref<18x18x8xf32, #tpu.memory_space<vmem>>, vector<18x1x8xf32>,
    %c0_20 = arith.constant 0 : index
    %c17_21 = arith.constant 17 : index
    %c0_22 = arith.constant 0 : index
    %9 = vector.load %arg10[%c0_20, %c17_21, %c0_22] : memref<18x18x8xf32, #tpu.memory_space<vmem>>, vector<18x1x8xf32>
    tpu.vector_store %arg10[%c0_20, %c17_21, %c0_22], %1 {strides = array<i32>} : memref<18x18x8xf32, #tpu.memory_space<vmem>>, vector<18x1x8xf32>,
    %c0_23 = arith.constant 0 : index
    %c0_24 = arith.constant 0 : index
    %10 = vector.load %arg5[%c0_23, %c0_24] : memref<6x8xf32, #tpu.memory_space<vmem>>, vector<1x8xf32>
    %c1 = arith.constant 1 : index
    %c0_25 = arith.constant 0 : index
    %11 = vector.load %arg5[%c1, %c0_25] : memref<6x8xf32, #tpu.memory_space<vmem>>, vector<1x8xf32>
    %c2 = arith.constant 2 : index
    %c0_26 = arith.constant 0 : index
    %12 = vector.load %arg5[%c2, %c0_26] : memref<6x8xf32, #tpu.memory_space<vmem>>, vector<1x8xf32>
    %c3 = arith.constant 3 : index
    %c0_27 = arith.constant 0 : index
    %13 = vector.load %arg5[%c3, %c0_27] : memref<6x8xf32, #tpu.memory_space<vmem>>, vector<1x8xf32>
    %c4 = arith.constant 4 : index
    %c0_28 = arith.constant 0 : index
    %14 = vector.load %arg5[%c4, %c0_28] : memref<6x8xf32, #tpu.memory_space<vmem>>, vector<1x8xf32>
    %c5 = arith.constant 5 : index
    %c0_29 = arith.constant 0 : index
    %15 = vector.load %arg5[%c5, %c0_29] : memref<6x8xf32, #tpu.memory_space<vmem>>, vector<1x8xf32>
    %c0_30 = arith.constant 0 : index
    %c0_31 = arith.constant 0 : index
    %c0_32 = arith.constant 0 : index
    %16 = vector.load %arg1[%c0_30, %c0_31, %c0_32] : memref<1x256x36xbf16, #tpu.memory_space<vmem>>, vector<1x256x36xbf16>
    %17 = vector.shape_cast %16 : vector<1x256x36xbf16> to vector<256x36xbf16>
    %c0_33 = arith.constant 0 : index
    %c0_34 = arith.constant 0 : index
    %18 = vector.load %arg2[%c0_33, %c0_34] : memref<36x24xbf16, #tpu.memory_space<vmem>>, vector<36x24xbf16>
    %cst_35 = arith.constant dense<0.000000e+00> : vector<256x24xf32>
    %19 = tpu.matmul %17, %18, %cst_35 {dimension_numbers = #tpu.dot_dimension_numbers<[1], [0], [0], [1], [0, 0, 1, 1], [], []>} : vector<256x36xbf16>, vector<36x24xbf16>, vector<256x24xf32> -> vector<256x24xf32>
    %20 = vector.extract_strided_slice %19 {offsets = [0, 0], sizes = [256, 8], strides = [1, 1]} : vector<256x24xf32> to vector<256x8xf32>
    %21 = vector.broadcast %10 : vector<1x8xf32> to vector<256x8xf32>
    %22 = arith.addf %20, %21 : vector<256x8xf32>
    %cst_36 = arith.constant dense<0.000000e+00> : vector<8xf32>
    %23 = vector.multi_reduction <add>, %22, %cst_36 [0] : vector<256x8xf32> to vector<8xf32>
    %24 = vector.shape_cast %23 : vector<8xf32> to vector<1x8xf32>
    %cst_37 = arith.constant 2.560000e+02 : f32
    %25 = vector.broadcast %cst_37 : f32 to vector<1x8xf32>
    %26 = arith.divf %24, %25 : vector<1x8xf32>
    %27 = vector.broadcast %26 : vector<1x8xf32> to vector<256x8xf32>
    %28 = arith.subf %22, %27 : vector<256x8xf32>
    %29 = arith.mulf %28, %28 : vector<256x8xf32>
    %cst_38 = arith.constant dense<0.000000e+00> : vector<8xf32>
    %30 = vector.multi_reduction <add>, %29, %cst_38 [0] : vector<256x8xf32> to vector<8xf32>
    %31 = vector.shape_cast %30 : vector<8xf32> to vector<1x8xf32>
    %cst_39 = arith.constant 2.560000e+02 : f32
    %32 = vector.broadcast %cst_39 : f32 to vector<1x8xf32>
    %33 = arith.divf %31, %32 : vector<1x8xf32>
    %34 = vector.broadcast %26 : vector<1x8xf32> to vector<256x8xf32>
    %35 = arith.subf %22, %34 : vector<256x8xf32>
    %cst_40 = arith.constant 9.99999974E-6 : f32
    %36 = vector.broadcast %cst_40 : f32 to vector<1x8xf32>
    %37 = arith.addf %33, %36 : vector<1x8xf32>
    %38 = math.rsqrt %37 : vector<1x8xf32>
    %39 = vector.broadcast %38 : vector<1x8xf32> to vector<256x8xf32>
    %40 = arith.mulf %35, %39 : vector<256x8xf32>
    %41 = vector.broadcast %11 : vector<1x8xf32> to vector<256x8xf32>
    %42 = arith.mulf %40, %41 : vector<256x8xf32>
    %43 = vector.broadcast %12 : vector<1x8xf32> to vector<256x8xf32>
    %44 = arith.addf %42, %43 : vector<256x8xf32>
    %cst_41 = arith.constant 0.000000e+00 : f32
    %45 = vector.broadcast %cst_41 : f32 to vector<256x8xf32>
    %46 = arith.maximumf %44, %45 : vector<256x8xf32>
    %47 = vector.shape_cast %46 : vector<256x8xf32> to vector<16x16x8xf32>
    %c1_42 = arith.constant 1 : index
    %c1_43 = arith.constant 1 : index
    %c0_44 = arith.constant 0 : index
    %48 = vector.load %arg9[%c1_42, %c1_43, %c0_44] : memref<18x18x8xf32, #tpu.memory_space<vmem>>, vector<16x16x8xf32>
    tpu.vector_store %arg9[%c1_42, %c1_43, %c0_44], %47 {strides = array<i32>} : memref<18x18x8xf32, #tpu.memory_space<vmem>>, vector<16x16x8xf32>,
    %c0_45 = arith.constant 0 : index
    %c0_46 = arith.constant 0 : index
    %c0_47 = arith.constant 0 : index
    %49 = vector.load %arg9[%c0_45, %c0_46, %c0_47] : memref<18x18x8xf32, #tpu.memory_space<vmem>>, vector<16x16x8xf32>
    %50 = vector.shape_cast %49 : vector<16x16x8xf32> to vector<256x8xf32>
    %c0_48 = arith.constant 0 : index
    %c1_49 = arith.constant 1 : index
    %c0_50 = arith.constant 0 : index
    %51 = vector.load %arg9[%c0_48, %c1_49, %c0_50] : memref<18x18x8xf32, #tpu.memory_space<vmem>>, vector<16x16x8xf32>
    %52 = vector.shape_cast %51 : vector<16x16x8xf32> to vector<256x8xf32>
    %c0_51 = arith.constant 0 : index
    %c2_52 = arith.constant 2 : index
    %c0_53 = arith.constant 0 : index
    %53 = vector.load %arg9[%c0_51, %c2_52, %c0_53] : memref<18x18x8xf32, #tpu.memory_space<vmem>>, vector<16x16x8xf32>
    %54 = vector.shape_cast %53 : vector<16x16x8xf32> to vector<256x8xf32>
    %c1_54 = arith.constant 1 : index
    %c0_55 = arith.constant 0 : index
    %c0_56 = arith.constant 0 : index
    %55 = vector.load %arg9[%c1_54, %c0_55, %c0_56] : memref<18x18x8xf32, #tpu.memory_space<vmem>>, vector<16x16x8xf32>
    %56 = vector.shape_cast %55 : vector<16x16x8xf32> to vector<256x8xf32>
    %c1_57 = arith.constant 1 : index
    %c1_58 = arith.constant 1 : index
    %c0_59 = arith.constant 0 : index
    %57 = vector.load %arg9[%c1_57, %c1_58, %c0_59] : memref<18x18x8xf32, #tpu.memory_space<vmem>>, vector<16x16x8xf32>
    %58 = vector.shape_cast %57 : vector<16x16x8xf32> to vector<256x8xf32>
    %c1_60 = arith.constant 1 : index
    %c2_61 = arith.constant 2 : index
    %c0_62 = arith.constant 0 : index
    %59 = vector.load %arg9[%c1_60, %c2_61, %c0_62] : memref<18x18x8xf32, #tpu.memory_space<vmem>>, vector<16x16x8xf32>
    %60 = vector.shape_cast %59 : vector<16x16x8xf32> to vector<256x8xf32>
    %c2_63 = arith.constant 2 : index
    %c0_64 = arith.constant 0 : index
    %c0_65 = arith.constant 0 : index
    %61 = vector.load %arg9[%c2_63, %c0_64, %c0_65] : memref<18x18x8xf32, #tpu.memory_space<vmem>>, vector<16x16x8xf32>
    %62 = vector.shape_cast %61 : vector<16x16x8xf32> to vector<256x8xf32>
    %c2_66 = arith.constant 2 : index
    %c1_67 = arith.constant 1 : index
    %c0_68 = arith.constant 0 : index
    %63 = vector.load %arg9[%c2_66, %c1_67, %c0_68] : memref<18x18x8xf32, #tpu.memory_space<vmem>>, vector<16x16x8xf32>
    %64 = vector.shape_cast %63 : vector<16x16x8xf32> to vector<256x8xf32>
    %c2_69 = arith.constant 2 : index
    %c2_70 = arith.constant 2 : index
    %c0_71 = arith.constant 0 : index
    %65 = vector.load %arg9[%c2_69, %c2_70, %c0_71] : memref<18x18x8xf32, #tpu.memory_space<vmem>>, vector<16x16x8xf32>
    %66 = vector.shape_cast %65 : vector<16x16x8xf32> to vector<256x8xf32>
    %67 = tpu.concatenate %50, %52, %54, %56, %58, %60, %62, %64, %66 in 1 : vector<256x8xf32>, vector<256x8xf32>, vector<256x8xf32>, vector<256x8xf32>, vector<256x8xf32>, vector<256x8xf32>, vector<256x8xf32>, vector<256x8xf32>, vector<256x8xf32> -> vector<256x72xf32>
    %68 = arith.truncf %67 : vector<256x72xf32> to vector<256x72xbf16>
    %c0_72 = arith.constant 0 : index
    %c0_73 = arith.constant 0 : index
    %69 = vector.load %arg3[%c0_72, %c0_73] : memref<72x16xbf16, #tpu.memory_space<vmem>>, vector<72x16xbf16>
    %cst_74 = arith.constant dense<0.000000e+00> : vector<256x16xf32>
    %70 = tpu.matmul %68, %69, %cst_74 {dimension_numbers = #tpu.dot_dimension_numbers<[1], [0], [0], [1], [0, 0, 1, 1], [], []>} : vector<256x72xbf16>, vector<72x16xbf16>, vector<256x16xf32> -> vector<256x16xf32>
    %71 = vector.extract_strided_slice %19 {offsets = [0, 8], sizes = [256, 8], strides = [1, 1]} : vector<256x24xf32> to vector<256x8xf32>
    %72 = vector.extract_strided_slice %70 {offsets = [0, 0], sizes = [256, 8], strides = [1, 1]} : vector<256x16xf32> to vector<256x8xf32>
    %73 = arith.addf %71, %72 : vector<256x8xf32>
    %74 = vector.broadcast %13 : vector<1x8xf32> to vector<256x8xf32>
    %75 = arith.addf %73, %74 : vector<256x8xf32>
    %cst_75 = arith.constant dense<0.000000e+00> : vector<8xf32>
    %76 = vector.multi_reduction <add>, %75, %cst_75 [0] : vector<256x8xf32> to vector<8xf32>
    %77 = vector.shape_cast %76 : vector<8xf32> to vector<1x8xf32>
    %cst_76 = arith.constant 2.560000e+02 : f32
    %78 = vector.broadcast %cst_76 : f32 to vector<1x8xf32>
    %79 = arith.divf %77, %78 : vector<1x8xf32>
    %80 = vector.broadcast %79 : vector<1x8xf32> to vector<256x8xf32>
    %81 = arith.subf %75, %80 : vector<256x8xf32>
    %82 = arith.mulf %81, %81 : vector<256x8xf32>
    %cst_77 = arith.constant dense<0.000000e+00> : vector<8xf32>
    %83 = vector.multi_reduction <add>, %82, %cst_77 [0] : vector<256x8xf32> to vector<8xf32>
    %84 = vector.shape_cast %83 : vector<8xf32> to vector<1x8xf32>
    %cst_78 = arith.constant 2.560000e+02 : f32
    %85 = vector.broadcast %cst_78 : f32 to vector<1x8xf32>
    %86 = arith.divf %84, %85 : vector<1x8xf32>
    %87 = vector.broadcast %79 : vector<1x8xf32> to vector<256x8xf32>
    %88 = arith.subf %75, %87 : vector<256x8xf32>
    %cst_79 = arith.constant 9.99999974E-6 : f32
    %89 = vector.broadcast %cst_79 : f32 to vector<1x8xf32>
    %90 = arith.addf %86, %89 : vector<1x8xf32>
    %91 = math.rsqrt %90 : vector<1x8xf32>
    %92 = vector.broadcast %91 : vector<1x8xf32> to vector<256x8xf32>
    %93 = arith.mulf %88, %92 : vector<256x8xf32>
    %94 = vector.broadcast %14 : vector<1x8xf32> to vector<256x8xf32>
    %95 = arith.mulf %93, %94 : vector<256x8xf32>
    %96 = vector.broadcast %15 : vector<1x8xf32> to vector<256x8xf32>
    %97 = arith.addf %95, %96 : vector<256x8xf32>
    %cst_80 = arith.constant 0.000000e+00 : f32
    %98 = vector.broadcast %cst_80 : f32 to vector<256x8xf32>
    %99 = arith.maximumf %97, %98 : vector<256x8xf32>
    %100 = vector.shape_cast %99 : vector<256x8xf32> to vector<16x16x8xf32>
    %c1_81 = arith.constant 1 : index
    %c1_82 = arith.constant 1 : index
    %c0_83 = arith.constant 0 : index
    %101 = vector.load %arg10[%c1_81, %c1_82, %c0_83] : memref<18x18x8xf32, #tpu.memory_space<vmem>>, vector<16x16x8xf32>
    tpu.vector_store %arg10[%c1_81, %c1_82, %c0_83], %100 {strides = array<i32>} : memref<18x18x8xf32, #tpu.memory_space<vmem>>, vector<16x16x8xf32>,
    %c0_84 = arith.constant 0 : index
    %c0_85 = arith.constant 0 : index
    %c0_86 = arith.constant 0 : index
    %102 = vector.load %arg10[%c0_84, %c0_85, %c0_86] : memref<18x18x8xf32, #tpu.memory_space<vmem>>, vector<16x16x8xf32>
    %103 = vector.shape_cast %102 : vector<16x16x8xf32> to vector<256x8xf32>
    %c0_87 = arith.constant 0 : index
    %c1_88 = arith.constant 1 : index
    %c0_89 = arith.constant 0 : index
    %104 = vector.load %arg10[%c0_87, %c1_88, %c0_89] : memref<18x18x8xf32, #tpu.memory_space<vmem>>, vector<16x16x8xf32>
    %105 = vector.shape_cast %104 : vector<16x16x8xf32> to vector<256x8xf32>
    %c0_90 = arith.constant 0 : index
    %c2_91 = arith.constant 2 : index
    %c0_92 = arith.constant 0 : index
    %106 = vector.load %arg10[%c0_90, %c2_91, %c0_92] : memref<18x18x8xf32, #tpu.memory_space<vmem>>, vector<16x16x8xf32>
    %107 = vector.shape_cast %106 : vector<16x16x8xf32> to vector<256x8xf32>
    %c1_93 = arith.constant 1 : index
    %c0_94 = arith.constant 0 : index
    %c0_95 = arith.constant 0 : index
    %108 = vector.load %arg10[%c1_93, %c0_94, %c0_95] : memref<18x18x8xf32, #tpu.memory_space<vmem>>, vector<16x16x8xf32>
    %109 = vector.shape_cast %108 : vector<16x16x8xf32> to vector<256x8xf32>
    %c1_96 = arith.constant 1 : index
    %c1_97 = arith.constant 1 : index
    %c0_98 = arith.constant 0 : index
    %110 = vector.load %arg10[%c1_96, %c1_97, %c0_98] : memref<18x18x8xf32, #tpu.memory_space<vmem>>, vector<16x16x8xf32>
    %111 = vector.shape_cast %110 : vector<16x16x8xf32> to vector<256x8xf32>
    %c1_99 = arith.constant 1 : index
    %c2_100 = arith.constant 2 : index
    %c0_101 = arith.constant 0 : index
    %112 = vector.load %arg10[%c1_99, %c2_100, %c0_101] : memref<18x18x8xf32, #tpu.memory_space<vmem>>, vector<16x16x8xf32>
    %113 = vector.shape_cast %112 : vector<16x16x8xf32> to vector<256x8xf32>
    %c2_102 = arith.constant 2 : index
    %c0_103 = arith.constant 0 : index
    %c0_104 = arith.constant 0 : index
    %114 = vector.load %arg10[%c2_102, %c0_103, %c0_104] : memref<18x18x8xf32, #tpu.memory_space<vmem>>, vector<16x16x8xf32>
    %115 = vector.shape_cast %114 : vector<16x16x8xf32> to vector<256x8xf32>
    %c2_105 = arith.constant 2 : index
    %c1_106 = arith.constant 1 : index
    %c0_107 = arith.constant 0 : index
    %116 = vector.load %arg10[%c2_105, %c1_106, %c0_107] : memref<18x18x8xf32, #tpu.memory_space<vmem>>, vector<16x16x8xf32>
    %117 = vector.shape_cast %116 : vector<16x16x8xf32> to vector<256x8xf32>
    %c2_108 = arith.constant 2 : index
    %c2_109 = arith.constant 2 : index
    %c0_110 = arith.constant 0 : index
    %118 = vector.load %arg10[%c2_108, %c2_109, %c0_110] : memref<18x18x8xf32, #tpu.memory_space<vmem>>, vector<16x16x8xf32>
    %119 = vector.shape_cast %118 : vector<16x16x8xf32> to vector<256x8xf32>
    %120 = tpu.concatenate %103, %105, %107, %109, %111, %113, %115, %117, %119 in 1 : vector<256x8xf32>, vector<256x8xf32>, vector<256x8xf32>, vector<256x8xf32>, vector<256x8xf32>, vector<256x8xf32>, vector<256x8xf32>, vector<256x8xf32>, vector<256x8xf32> -> vector<256x72xf32>
    %121 = arith.truncf %120 : vector<256x72xf32> to vector<256x72xbf16>
    %c0_111 = arith.constant 0 : index
    %c0_112 = arith.constant 0 : index
    %122 = vector.load %arg4[%c0_111, %c0_112] : memref<72x8xbf16, #tpu.memory_space<vmem>>, vector<72x8xbf16>
    %cst_113 = arith.constant dense<0.000000e+00> : vector<256x8xf32>
    %123 = tpu.matmul %121, %122, %cst_113 {dimension_numbers = #tpu.dot_dimension_numbers<[1], [0], [0], [1], [0, 0, 1, 1], [], []>} : vector<256x72xbf16>, vector<72x8xbf16>, vector<256x8xf32> -> vector<256x8xf32>
    %124 = vector.extract_strided_slice %19 {offsets = [0, 16], sizes = [256, 8], strides = [1, 1]} : vector<256x24xf32> to vector<256x8xf32>
    %125 = vector.extract_strided_slice %70 {offsets = [0, 8], sizes = [256, 8], strides = [1, 1]} : vector<256x16xf32> to vector<256x8xf32>
    %126 = arith.addf %124, %125 : vector<256x8xf32>
    %127 = arith.addf %126, %123 : vector<256x8xf32>
    %c0_114 = arith.constant 0 : index
    %c0_115 = arith.constant 0 : index
    %128 = vector.load %arg6[%c0_114, %c0_115] : memref<1x8xf32, #tpu.memory_space<vmem>>, vector<1x8xf32>
    %129 = vector.broadcast %128 : vector<1x8xf32> to vector<256x8xf32>
    %130 = arith.addf %127, %129 : vector<256x8xf32>
    %c0_116 = arith.constant 0 : index
    %c0_117 = arith.constant 0 : index
    %131 = vector.load %arg7[%c0_116, %c0_117] : memref<64x256xf32, #tpu.memory_space<vmem>>, vector<64x256xf32>
    %cst_118 = arith.constant dense<0.000000e+00> : vector<64x8xf32>
    %132 = tpu.matmul %131, %130, %cst_118 {dimension_numbers = #tpu.dot_dimension_numbers<[1], [0], [0], [1], [0, 0, 1, 1], [], []>} : vector<64x256xf32>, vector<256x8xf32>, vector<64x8xf32> -> vector<64x8xf32>
    %133 = vector.shape_cast %132 : vector<64x8xf32> to vector<8x8x8xf32>
    %c0_119 = arith.constant 0 : index
    %c0_120 = arith.constant 0 : index
    %c0_121 = arith.constant 0 : index
    %c0_122 = arith.constant 0 : index
    %134 = vector.load %arg8[%c0_119, %c0_120, %c0_121, %c0_122] : memref<1x8x8x8xf32, #tpu.memory_space<vmem>>, vector<1x8x8x8xf32>
    %135 = vector.shape_cast %134 : vector<1x8x8x8xf32> to vector<8x8x8xf32>
    %136 = vector.shape_cast %133 : vector<8x8x8xf32> to vector<1x8x8x8xf32>
    tpu.vector_store %arg8[%c0_119, %c0_120, %c0_121, %c0_122], %136 {strides = array<i32>} : memref<1x8x8x8xf32, #tpu.memory_space<vmem>>, vector<1x8x8x8xf32>,
    return
  }
  func.func @transform_0(%arg0: i32) -> (i32, i32, i32) {
    %c0_i32 = arith.constant 0 : i32
    %c0_i32_0 = arith.constant 0 : i32
    %c0_i32_1 = arith.constant 0 : i32
    return %arg0, %c0_i32, %c0_i32_0 : i32, i32, i32
  }
  func.func @transform_1(%arg0: i32) -> (i32, i32) {
    %c0_i32 = arith.constant 0 : i32
    %c0_i32_0 = arith.constant 0 : i32
    %c0_i32_1 = arith.constant 0 : i32
    return %c0_i32, %c0_i32_0 : i32, i32
  }
  func.func @transform_2(%arg0: i32) -> (i32, i32) {
    %c0_i32 = arith.constant 0 : i32
    %c0_i32_0 = arith.constant 0 : i32
    %c0_i32_1 = arith.constant 0 : i32
    return %c0_i32, %c0_i32_0 : i32, i32
  }
  func.func @transform_3(%arg0: i32) -> (i32, i32) {
    %c0_i32 = arith.constant 0 : i32
    %c0_i32_0 = arith.constant 0 : i32
    %c0_i32_1 = arith.constant 0 : i32
    return %c0_i32, %c0_i32_0 : i32, i32
  }
  func.func @transform_4(%arg0: i32) -> (i32, i32) {
    %c0_i32 = arith.constant 0 : i32
    %c0_i32_0 = arith.constant 0 : i32
    %c0_i32_1 = arith.constant 0 : i32
    return %c0_i32, %c0_i32_0 : i32, i32
  }
  func.func @transform_5(%arg0: i32) -> (i32, i32) {
    %c0_i32 = arith.constant 0 : i32
    %c0_i32_0 = arith.constant 0 : i32
    %c0_i32_1 = arith.constant 0 : i32
    return %c0_i32, %c0_i32_0 : i32, i32
  }
  func.func @transform_6(%arg0: i32) -> (i32, i32) {
    %c0_i32 = arith.constant 0 : i32
    %c0_i32_0 = arith.constant 0 : i32
    %c0_i32_1 = arith.constant 0 : i32
    return %c0_i32, %c0_i32_0 : i32, i32
  }
  func.func @transform_7(%arg0: i32) -> (i32, i32, i32, i32) {
    %c0_i32 = arith.constant 0 : i32
    %c0_i32_0 = arith.constant 0 : i32
    %c0_i32_1 = arith.constant 0 : i32
    %c0_i32_2 = arith.constant 0 : i32
    return %arg0, %c0_i32, %c0_i32_0, %c0_i32_1 : i32, i32, i32, i32
  }
}

</mosaic_0001>

<llo_original>
// kernel: tpu_custom_call.1
$region0: #{tpu_custom_call.1}
  #allocation0 [shape = 'u32[]', space=smem, size = 0x4, offset = 0x4, fixed_abs, tag = 'smem constant byte address 0x4 - core index']
  #allocation1 [shape = 'u32[144,128]{1,0:T(1,128)}', space=vmem, size = 0x12000, scoped, tag = 'internal scratch']
  #allocation2 [shape = 'f32[18,18,8]{2,1,0:T(8,128)}', space=vmem, size = 0x36000, scoped, tag = 'scratch operand']
  #allocation3 [shape = 'f32[18,18,8]{2,1,0:T(8,128)}', space=vmem, size = 0x36000, scoped, tag = 'scratch operand']
  %s0 = inlined_call_operand.vmem [shape: bf16[2,256,36], index: 0, kind: input, shape index: {}]
  %s1 = inlined_call_operand.vmem [shape: bf16[36,24], index: 1, kind: input, shape index: {}]
  %s2 = inlined_call_operand.vmem [shape: bf16[72,16], index: 2, kind: input, shape index: {}]
  %s3 = inlined_call_operand.vmem [shape: bf16[72,8], index: 3, kind: input, shape index: {}]
  %s4 = inlined_call_operand.vmem [shape: f32[6,8], index: 4, kind: input, shape index: {}]
  %s5 = inlined_call_operand.vmem [shape: f32[1,8], index: 5, kind: input, shape index: {}]
  %s6 = inlined_call_operand.vmem [shape: f32[64,256], index: 6, kind: input, shape index: {}]
  %s7 = inlined_call_operand.hbm [shape: f32[2,8,8,8], index: 7, kind: output, shape index: {}]
  %s8 = sld [smem:[#allocation0]]
  $region61: #{tpu_custom_call.1} parent=0
    _
  %s10 = ssub.s32 1, %s8
  %s11 = scalar_select 0, %s10, %s8
  $region1: #{tpu_custom_call.1} parent=0
    #allocation4 [shape = 'u8[65536]{0}', space=vmem, size = 0x10000, scoped, tag = 'output window, operand 0']
    #allocation5 [shape = 's32[2]{0}', space=sflag, size = 0x8, scoped, tag = 'scoped memory for tpu_custom_call.1']
    %12 = vsyncpa [#allocation5], 0
    %s13 = scalar_lea.sflag [#allocation5], 1
    %14 = vsyncpa %s13, 0
    loop: start=0, step=1, limit=4
    $region2: #{tpu_custom_call.1} parent=1 // loop_pre_header
      _
    $region3: #{tpu_custom_call.1} parent=1 // loop_header
      %s16 = sphi 0, %s20
      %p17 = scmp.ge.s32.totalorder %s16, 4
      %s26 = sphi 0, %s28
      %s29 = sphi 0, %s26
      %s30 = sphi 0, %s29
      %s46 = sphi 0, %s30
      %s50 = sphi 0, %s50
      %s52 = sphi 0, %s50
      %s53 = sphi 0, %s52
      %s67 = sphi 0, %s53
      %s71 = sphi 0, %s71
      %s73 = sphi 0, %s71
      %s74 = sphi 0, %s73
      %s88 = sphi 0, %s74
      %s92 = sphi 0, %s92
      %s94 = sphi 0, %s92
      %s95 = sphi 0, %s94
      %s109 = sphi 0, %s95
      %s113 = sphi 0, %s113
      %s115 = sphi 0, %s113
      %s116 = sphi 0, %s115
      %s130 = sphi 0, %s116
      %s134 = sphi 0, %s134
      %s136 = sphi 0, %s134
      %s137 = sphi 0, %s136
      %s151 = sphi 0, %s137
      %s155 = sphi 0, %s155
      %s157 = sphi 0, %s155
      %s158 = sphi 0, %s157
      %s172 = sphi 0, %s158
      %s178 = sphi 0, %s180
      %s181 = sphi 0, %s178
      %s182 = sphi 0, %s181
      %s198 = sphi 0, %s182
    $region4: #{tpu_custom_call.1} parent=1 // loop_header_branch
      %19 = sbr.rel (%p17) target = $region8
    $region5: #{tpu_custom_call.1} parent=1 // loop_body
      %s21 = ssub.s32 %s16, 1
      %s22 = ssub.s32 %s16, 2
      %s23 = sadd.s32 %s16, 1
      %s24 = ssub.s32 %s16, %s23
      %p25 = scmp.eq.s32.totalorder %s24, 0
      %s27 = sadd.s32 %s26, 1
      %s28 = scalar_select %p25, %s26, %s27
      %p31 = pneg %p25
      %p32 = scmp.eq.s32.totalorder %s16, 1
      %p33 = por %p31, %p32
      %p34 = scmp.ne.s32.totalorder %s26, %s29
      %p35 = scmp.eq.s32.totalorder %s16, 0
      %p36 = por %p34, %p35
      %p37 = scmp.ne.s32.totalorder %s26, %s29
      %p38 = scmp.eq.s32.totalorder %s21, 1
      %p39 = por %p37, %p38
      %p40 = scmp.ne.s32.totalorder %s29, %s30
      %p41 = scmp.eq.s32.totalorder %s21, 0
      %p42 = por %p40, %p41
      %p43 = scmp.ne.s32.totalorder %s29, %s30
      %p44 = scmp.eq.s32.totalorder %s22, 1
      %p45 = por %p43, %p44
      %p47 = scmp.ne.s32.totalorder %s30, %s46
      %p48 = scmp.eq.s32.totalorder %s22, 0
      %p49 = por %p47, %p48
      %s51 = sadd.s32 %s50, 1
      %p54 = scmp.eq.s32.totalorder %s16, 1
      %p55 = scmp.ne.s32.totalorder %s50, %s52
      %p56 = scmp.eq.s32.totalorder %s16, 0
      %p57 = por %p55, %p56
      %p58 = scmp.ne.s32.totalorder %s50, %s52
      %p59 = scmp.eq.s32.totalorder %s21, 1
      %p60 = por %p58, %p59
      %p61 = scmp.ne.s32.totalorder %s52, %s53
      %p62 = scmp.eq.s32.totalorder %s21, 0
      %p63 = por %p61, %p62
      %p64 = scmp.ne.s32.totalorder %s52, %s53
      %p65 = scmp.eq.s32.totalorder %s22, 1
      %p66 = por %p64, %p65
      %p68 = scmp.ne.s32.totalorder %s53, %s67
      %p69 = scmp.eq.s32.totalorder %s22, 0
      %p70 = por %p68, %p69
      %s72 = sadd.s32 %s71, 1
      %p75 = scmp.eq.s32.totalorder %s16, 1
      %p76 = scmp.ne.s32.totalorder %s71, %s73
      %p77 = scmp.eq.s32.totalorder %s16, 0
      %p78 = por %p76, %p77
      %p79 = scmp.ne.s32.totalorder %s71, %s73
      %p80 = scmp.eq.s32.totalorder %s21, 1
      %p81 = por %p79, %p80
      %p82 = scmp.ne.s32.totalorder %s73, %s74
      %p83 = scmp.eq.s32.totalorder %s21, 0
      %p84 = por %p82, %p83
      %p85 = scmp.ne.s32.totalorder %s73, %s74
      %p86 = scmp.eq.s32.totalorder %s22, 1
      %p87 = por %p85, %p86
      %p89 = scmp.ne.s32.totalorder %s74, %s88
      %p90 = scmp.eq.s32.totalorder %s22, 0
      %p91 = por %p89, %p90
      %s93 = sadd.s32 %s92, 1
      %p96 = scmp.eq.s32.totalorder %s16, 1
      %p97 = scmp.ne.s32.totalorder %s92, %s94
      %p98 = scmp.eq.s32.totalorder %s16, 0
      %p99 = por %p97, %p98
      %p100 = scmp.ne.s32.totalorder %s92, %s94
      %p101 = scmp.eq.s32.totalorder %s21, 1
      %p102 = por %p100, %p101
      %p103 = scmp.ne.s32.totalorder %s94, %s95
      %p104 = scmp.eq.s32.totalorder %s21, 0
      %p105 = por %p103, %p104
      %p106 = scmp.ne.s32.totalorder %s94, %s95
      %p107 = scmp.eq.s32.totalorder %s22, 1
      %p108 = por %p106, %p107
      %p110 = scmp.ne.s32.totalorder %s95, %s109
      %p111 = scmp.eq.s32.totalorder %s22, 0
      %p112 = por %p110, %p111
      %s114 = sadd.s32 %s113, 1
      %p117 = scmp.eq.s32.totalorder %s16, 1
      %p118 = scmp.ne.s32.totalorder %s113, %s115
      %p119 = scmp.eq.s32.totalorder %s16, 0
      %p120 = por %p118, %p119
      %p121 = scmp.ne.s32.totalorder %s113, %s115
      %p122 = scmp.eq.s32.totalorder %s21, 1
      %p123 = por %p121, %p122
      %p124 = scmp.ne.s32.totalorder %s115, %s116
      %p125 = scmp.eq.s32.totalorder %s21, 0
      %p126 = por %p124, %p125
      %p127 = scmp.ne.s32.totalorder %s115, %s116
      %p128 = scmp.eq.s32.totalorder %s22, 1
      %p129 = por %p127, %p128
      %p131 = scmp.ne.s32.totalorder %s116, %s130
      %p132 = scmp.eq.s32.totalorder %s22, 0
      %p133 = por %p131, %p132
      %s135 = sadd.s32 %s134, 1
      %p138 = scmp.eq.s32.totalorder %s16, 1
      %p139 = scmp.ne.s32.totalorder %s134, %s136
      %p140 = scmp.eq.s32.totalorder %s16, 0
      %p141 = por %p139, %p140
      %p142 = scmp.ne.s32.totalorder %s134, %s136
      %p143 = scmp.eq.s32.totalorder %s21, 1
      %p144 = por %p142, %p143
      %p145 = scmp.ne.s32.totalorder %s136, %s137
      %p146 = scmp.eq.s32.totalorder %s21, 0
      %p147 = por %p145, %p146
      %p148 = scmp.ne.s32.totalorder %s136, %s137
      %p149 = scmp.eq.s32.totalorder %s22, 1
      %p150 = por %p148, %p149
      %p152 = scmp.ne.s32.totalorder %s137, %s151
      %p153 = scmp.eq.s32.totalorder %s22, 0
      %p154 = por %p152, %p153
      %s156 = sadd.s32 %s155, 1
      %p159 = scmp.eq.s32.totalorder %s16, 1
      %p160 = scmp.ne.s32.totalorder %s155, %s157
      %p161 = scmp.eq.s32.totalorder %s16, 0
      %p162 = por %p160, %p161
      %p163 = scmp.ne.s32.totalorder %s155, %s157
      %p164 = scmp.eq.s32.totalorder %s21, 1
      %p165 = por %p163, %p164
      %p166 = scmp.ne.s32.totalorder %s157, %s158
      %p167 = scmp.eq.s32.totalorder %s21, 0
      %p168 = por %p166, %p167
      %p169 = scmp.ne.s32.totalorder %s157, %s158
      %p170 = scmp.eq.s32.totalorder %s22, 1
      %p171 = por %p169, %p170
      %p173 = scmp.ne.s32.totalorder %s158, %s172
      %p174 = scmp.eq.s32.totalorder %s22, 0
      %p175 = por %p173, %p174
      %s176 = ssub.s32 %s16, %s23
      %p177 = scmp.eq.s32.totalorder %s176, 0
      %s179 = sadd.s32 %s178, 1
      %s180 = scalar_select %p177, %s178, %s179
      %p183 = pneg %p177
      %p184 = scmp.eq.s32.totalorder %s16, 1
      %p185 = por %p183, %p184
      %p186 = scmp.ne.s32.totalorder %s178, %s181
      %p187 = scmp.eq.s32.totalorder %s16, 0
      %p188 = por %p186, %p187
      %p189 = scmp.ne.s32.totalorder %s178, %s181
      %p190 = scmp.eq.s32.totalorder %s21, 1
      %p191 = por %p189, %p190
      %p192 = scmp.ne.s32.totalorder %s181, %s182
      %p193 = scmp.eq.s32.totalorder %s21, 0
      %p194 = por %p192, %p193
      %p195 = scmp.ne.s32.totalorder %s181, %s182
      %p196 = scmp.eq.s32.totalorder %s22, 1
      %p197 = por %p195, %p196
      %p199 = scmp.ne.s32.totalorder %s182, %s198
      %p200 = scmp.eq.s32.totalorder %s22, 0
      %p201 = por %p199, %p200
      %p202 = scmp.le.s32.totalorder 1, %s16
      %p203 = scmp.lt.s32.totalorder %s16, 3
      %p204 = pnand %p202, %p203
      %p205 = pneg %p204
      // Predicated region
      $region9: #{tpu_custom_call.1} parent=5 // pred_check
        _
      $region10: #{tpu_custom_call.1} parent=5 // pred_check_branch
        %207 = sbr.rel (%p204) target = $region12
      $region11: #{tpu_custom_call.1} parent=5 // pred_region
        %s208 = ssub.s32 %s16, 1
        // Predicated region
        $region13: #{tpu_custom_call.1} parent=11 // pred_check
          %p209 = pneg %p63
        $region14: #{tpu_custom_call.1} parent=11 // pred_check_branch
          %211 = sbr.rel (%p209) target = $region16
        $region15: #{tpu_custom_call.1} parent=11 // pred_region
          _
        $region16: #{tpu_custom_call.1} parent=11 // pred_fallthru
          _
        // Predicated region
        $region17: #{tpu_custom_call.1} parent=11 // pred_check
          %p212 = pneg %p84
        $region18: #{tpu_custom_call.1} parent=11 // pred_check_branch
          %214 = sbr.rel (%p212) target = $region20
        $region19: #{tpu_custom_call.1} parent=11 // pred_region
          _
        $region20: #{tpu_custom_call.1} parent=11 // pred_fallthru
          _
        // Predicated region
        $region21: #{tpu_custom_call.1} parent=11 // pred_check
          %p215 = pneg %p105
        $region22: #{tpu_custom_call.1} parent=11 // pred_check_branch
          %217 = sbr.rel (%p215) target = $region24
        $region23: #{tpu_custom_call.1} parent=11 // pred_region
          _
        $region24: #{tpu_custom_call.1} parent=11 // pred_fallthru
          _
        // Predicated region
        $region25: #{tpu_custom_call.1} parent=11 // pred_check
          %p218 = pneg %p126
        $region26: #{tpu_custom_call.1} parent=11 // pred_check_branch
          %220 = sbr.rel (%p218) target = $region28
        $region27: #{tpu_custom_call.1} parent=11 // pred_region
          _
        $region28: #{tpu_custom_call.1} parent=11 // pred_fallthru
          _
        // Predicated region
        $region29: #{tpu_custom_call.1} parent=11 // pred_check
          %p221 = pneg %p147
        $region30: #{tpu_custom_call.1} parent=11 // pred_check_branch
          %223 = sbr.rel (%p221) target = $region32
        $region31: #{tpu_custom_call.1} parent=11 // pred_region
          _
        $region32: #{tpu_custom_call.1} parent=11 // pred_fallthru
          _
        // Predicated region
        $region33: #{tpu_custom_call.1} parent=11 // pred_check
          %p224 = pneg %p168
        $region34: #{tpu_custom_call.1} parent=11 // pred_check_branch
          %226 = sbr.rel (%p224) target = $region36
        $region35: #{tpu_custom_call.1} parent=11 // pred_region
          _
        $region36: #{tpu_custom_call.1} parent=11 // pred_fallthru
          _
      $region12: #{tpu_custom_call.1} parent=5 // pred_fallthru
        _
      %p227 = scmp.lt.s32.totalorder %s16, 2
      // Predicated region
      $region37: #{tpu_custom_call.1} parent=5 // pred_check
        %p228 = pneg %p227
      $region38: #{tpu_custom_call.1} parent=5 // pred_check_branch
        %230 = sbr.rel (%p228) target = $region40
      $region39: #{tpu_custom_call.1} parent=5 // pred_region
        // Predicated region
        $region41: #{tpu_custom_call.1} parent=39 // pred_check
          %p231 = pneg %p36
        $region42: #{tpu_custom_call.1} parent=39 // pred_check_branch
          %233 = sbr.rel (%p231) target = $region44
        $region43: #{tpu_custom_call.1} parent=39 // pred_region
          %p234 = scmp.lt.s32.totalorder %s16, 1
          %s235 = scalar_select %p234, %s16, 1
          %s236 = smul.addr %s235, 32
          %s237 = smul.addr %s236, 4
          %s238 = scalar_lea.vmem %s0, %s237
        $region44: #{tpu_custom_call.1} parent=39 // pred_fallthru
          _
      $region40: #{tpu_custom_call.1} parent=5 // pred_fallthru
        _
      %p239 = scmp.le.s32.totalorder 1, %s16
      %p240 = scmp.lt.s32.totalorder %s16, 3
      %p241 = pnand %p239, %p240
      %p242 = pneg %p241
      // Predicated region
      $region45: #{tpu_custom_call.1} parent=5 // pred_check
        _
      $region46: #{tpu_custom_call.1} parent=5 // pred_check_branch
        %244 = sbr.rel (%p241) target = $region48
      $region47: #{tpu_custom_call.1} parent=5 // pred_region
        %s245 = ssub.s32 %s16, 1
        %p246 = scmp.lt.s32.totalorder %s21, 1
        %s247 = scalar_select %p246, %s21, 1
        %s248 = smul.addr %s247, 32
        %s249 = smul.addr %s248, 4
        %s250 = scalar_lea.vmem %s0, %s249
        %p251 = pneg %p42
        %p252 = pneg %p39
        %p253 = pneg %p63
        %p254 = pneg %p60
        %p255 = pneg %p84
        %p256 = pneg %p81
        %p257 = pneg %p105
        %p258 = pneg %p102
        %p259 = pneg %p126
        %p260 = pneg %p123
        %p261 = pneg %p147
        %p262 = pneg %p144
        %p263 = pneg %p168
        %p264 = pneg %p165
        %p265 = pneg %p194
        %p266 = pneg %p191
        %s267 = sand.u32 %s181, 1
        %s268 = scalar_lea.sflag [#allocation5], %s267
        %s269 = sand.u32 %s181, 1
        %s270 = smul.addr %s269, 64
        %s271 = scalar_lea.vmem [#allocation4], %s270
        %p272 = scmp.lt.s32.totalorder %s21, 1
        %s273 = scalar_select %p272, %s21, 1
        %s274 = smul.addr %s273, 32
        %s275 = smul.addr %s274, 4
        %s276 = scalar_lea.vmem %s0, %s275
        %vm278 = vcmask 64512
        %279 = vst.msk [vmem:[#allocation2] sm:$0xff] %vm278, 0.0
        %280 = vst.msk [vmem:[#allocation2 + $0x8] sm:$0xff] %vm278, 0.0
        %vm281 = vcmask 58368
        %282 = vst.msk [vmem:[#allocation2 + $0x10] sm:$0x3] %vm281, 0.0
        %s283 = scalar_lea.vmem [#allocation2], 408
        %284 = vst.msk [vmem:[%s283] sm:$0xff] %vm278, 0.0
        %285 = vst.msk [vmem:[%s283 + $0x8] sm:$0xff] %vm278, 0.0
        %286 = vst.msk [vmem:[%s283 + $0x10] sm:$0x3] %vm281, 0.0
        %vm287 = vcmask 57344
        %288 = vst.msk [vmem:[#allocation2] sm:$0x1] %vm287, 0.0
        %289 = vst.msk [vmem:[#allocation2 + $0x18] sm:$0x1] %vm287, 0.0
        %290 = vst.msk [vmem:[#allocation2 + $0x30] sm:$0x1] %vm287, 0.0
        %291 = vst.msk [vmem:[#allocation2 + $0x48] sm:$0x1] %vm287, 0.0
        %292 = vst.msk [vmem:[#allocation2 + $0x60] sm:$0x1] %vm287, 0.0
        %293 = vst.msk [vmem:[#allocation2 + $0x78] sm:$0x1] %vm287, 0.0
        %294 = vst.msk [vmem:[#allocation2 + $0x90] sm:$0x1] %vm287, 0.0
        %295 = vst.msk [vmem:[#allocation2 + $0xa8] sm:$0x1] %vm287, 0.0
        %296 = vst.msk [vmem:[#allocation2 + $0xc0] sm:$0x1] %vm287, 0.0
        %297 = vst.msk [vmem:[#allocation2 + $0xd8] sm:$0x1] %vm287, 0.0
        %298 = vst.msk [vmem:[#allocation2 + $0xf0] sm:$0x1] %vm287, 0.0
        %299 = vst.msk [vmem:[#allocation2 + $0x108] sm:$0x1] %vm287, 0.0
        %300 = vst.msk [vmem:[#allocation2 + $0x120] sm:$0x1] %vm287, 0.0
        %301 = vst.msk [vmem:[#allocation2 + $0x138] sm:$0x1] %vm287, 0.0
        %302 = vst.msk [vmem:[#allocation2 + $0x150] sm:$0x1] %vm287, 0.0
        %303 = vst.msk [vmem:[#allocation2 + $0x168] sm:$0x1] %vm287, 0.0
        %304 = vst.msk [vmem:[#allocation2 + $0x180] sm:$0x1] %vm287, 0.0
        %305 = vst.msk [vmem:[#allocation2 + $0x198] sm:$0x1] %vm287, 0.0
        %306 = vst.msk [vmem:[#allocation2 + $0x11] sm:$0x1] %vm287, 0.0
        %307 = vst.msk [vmem:[#allocation2 + $0x29] sm:$0x1] %vm287, 0.0
        %308 = vst.msk [vmem:[#allocation2 + $0x41] sm:$0x1] %vm287, 0.0
        %309 = vst.msk [vmem:[#allocation2 + $0x59] sm:$0x1] %vm287, 0.0
        %310 = vst.msk [vmem:[#allocation2 + $0x71] sm:$0x1] %vm287, 0.0
        %311 = vst.msk [vmem:[#allocation2 + $0x89] sm:$0x1] %vm287, 0.0
        %312 = vst.msk [vmem:[#allocation2 + $0xa1] sm:$0x1] %vm287, 0.0
        %313 = vst.msk [vmem:[#allocation2 + $0xb9] sm:$0x1] %vm287, 0.0
        %314 = vst.msk [vmem:[#allocation2 + $0xd1] sm:$0x1] %vm287, 0.0
        %315 = vst.msk [vmem:[#allocation2 + $0xe9] sm:$0x1] %vm287, 0.0
        %316 = vst.msk [vmem:[#allocation2 + $0x101] sm:$0x1] %vm287, 0.0
        %317 = vst.msk [vmem:[#allocation2 + $0x119] sm:$0x1] %vm287, 0.0
        %318 = vst.msk [vmem:[#allocation2 + $0x131] sm:$0x1] %vm287, 0.0
        %319 = vst.msk [vmem:[#allocation2 + $0x149] sm:$0x1] %vm287, 0.0
        %320 = vst.msk [vmem:[#allocation2 + $0x161] sm:$0x1] %vm287, 0.0
        %321 = vst.msk [vmem:[#allocation2 + $0x179] sm:$0x1] %vm287, 0.0
        %322 = vst.msk [vmem:[#allocation2 + $0x191] sm:$0x1] %vm287, 0.0
        %323 = vst.msk [vmem:[#allocation2 + $0x1a9] sm:$0x1] %vm287, 0.0
        %324 = vst.msk [vmem:[#allocation3] sm:$0xff] %vm278, 0.0
        %325 = vst.msk [vmem:[#allocation3 + $0x8] sm:$0xff] %vm278, 0.0
        %326 = vst.msk [vmem:[#allocation3 + $0x10] sm:$0x3] %vm281, 0.0
        %s327 = scalar_lea.vmem [#allocation3], 408
        %328 = vst.msk [vmem:[%s327] sm:$0xff] %vm278, 0.0
        %329 = vst.msk [vmem:[%s327 + $0x8] sm:$0xff] %vm278, 0.0
        %330 = vst.msk [vmem:[%s327 + $0x10] sm:$0x3] %vm281, 0.0
        %331 = vst.msk [vmem:[#allocation3] sm:$0x1] %vm287, 0.0
        %332 = vst.msk [vmem:[#allocation3 + $0x18] sm:$0x1] %vm287, 0.0
        %333 = vst.msk [vmem:[#allocation3 + $0x30] sm:$0x1] %vm287, 0.0
        %334 = vst.msk [vmem:[#allocation3 + $0x48] sm:$0x1] %vm287, 0.0
        %335 = vst.msk [vmem:[#allocation3 + $0x60] sm:$0x1] %vm287, 0.0
        %336 = vst.msk [vmem:[#allocation3 + $0x78] sm:$0x1] %vm287, 0.0
        %337 = vst.msk [vmem:[#allocation3 + $0x90] sm:$0x1] %vm287, 0.0
        %338 = vst.msk [vmem:[#allocation3 + $0xa8] sm:$0x1] %vm287, 0.0
        %339 = vst.msk [vmem:[#allocation3 + $0xc0] sm:$0x1] %vm287, 0.0
        %340 = vst.msk [vmem:[#allocation3 + $0xd8] sm:$0x1] %vm287, 0.0
        %341 = vst.msk [vmem:[#allocation3 + $0xf0] sm:$0x1] %vm287, 0.0
        %342 = vst.msk [vmem:[#allocation3 + $0x108] sm:$0x1] %vm287, 0.0
        %343 = vst.msk [vmem:[#allocation3 + $0x120] sm:$0x1] %vm287, 0.0
        %344 = vst.msk [vmem:[#allocation3 + $0x138] sm:$0x1] %vm287, 0.0
        %345 = vst.msk [vmem:[#allocation3 + $0x150] sm:$0x1] %vm287, 0.0
        %346 = vst.msk [vmem:[#allocation3 + $0x168] sm:$0x1] %vm287, 0.0
        %347 = vst.msk [vmem:[#allocation3 + $0x180] sm:$0x1] %vm287, 0.0
        %348 = vst.msk [vmem:[#allocation3 + $0x198] sm:$0x1] %vm287, 0.0
        %349 = vst.msk [vmem:[#allocation3 + $0x11] sm:$0x1] %vm287, 0.0
        %350 = vst.msk [vmem:[#allocation3 + $0x29] sm:$0x1] %vm287, 0.0
        %351 = vst.msk [vmem:[#allocation3 + $0x41] sm:$0x1] %vm287, 0.0
        %352 = vst.msk [vmem:[#allocation3 + $0x59] sm:$0x1] %vm287, 0.0
        %353 = vst.msk [vmem:[#allocation3 + $0x71] sm:$0x1] %vm287, 0.0
        %354 = vst.msk [vmem:[#allocation3 + $0x89] sm:$0x1] %vm287, 0.0
        %355 = vst.msk [vmem:[#allocation3 + $0xa1] sm:$0x1] %vm287, 0.0
        %356 = vst.msk [vmem:[#allocation3 + $0xb9] sm:$0x1] %vm287, 0.0
        %357 = vst.msk [vmem:[#allocation3 + $0xd1] sm:$0x1] %vm287, 0.0
        %358 = vst.msk [vmem:[#allocation3 + $0xe9] sm:$0x1] %vm287, 0.0
        %359 = vst.msk [vmem:[#allocation3 + $0x101] sm:$0x1] %vm287, 0.0
        %360 = vst.msk [vmem:[#allocation3 + $0x119] sm:$0x1] %vm287, 0.0
        %361 = vst.msk [vmem:[#allocation3 + $0x131] sm:$0x1] %vm287, 0.0
        %362 = vst.msk [vmem:[#allocation3 + $0x149] sm:$0x1] %vm287, 0.0
        %363 = vst.msk [vmem:[#allocation3 + $0x161] sm:$0x1] %vm287, 0.0
        %364 = vst.msk [vmem:[#allocation3 + $0x179] sm:$0x1] %vm287, 0.0
        %365 = vst.msk [vmem:[#allocation3 + $0x191] sm:$0x1] %vm287, 0.0
        %366 = vst.msk [vmem:[#allocation3 + $0x1a9] sm:$0x1] %vm287, 0.0
        %v367 = vld [vmem:[%s4] sm:$0x1]
        %v368 = vld [vmem:[%s4 + $0x1] sm:$0x1]
        %v369 = vld [vmem:[%s4 + $0x2] sm:$0x1]
        %v370 = vld [vmem:[%s4 + $0x3] sm:$0x1]
        %v371 = vld [vmem:[%s4 + $0x4] sm:$0x1]
        %v372 = vld [vmem:[%s4 + $0x5] sm:$0x1]
        %v373 = vld [vmem:[%s276] sm:$0xf]
        %v374 = vld [vmem:[%s276 + $0x4] sm:$0xf]
        %v375 = vld [vmem:[%s276 + $0x8] sm:$0xf]
        %v376 = vld [vmem:[%s276 + $0xc] sm:$0xf]
        %v377 = vld [vmem:[%s276 + $0x10] sm:$0xf]
        %v378 = vld [vmem:[%s276 + $0x14] sm:$0xf]
        %v379 = vld [vmem:[%s276 + $0x18] sm:$0xf]
        %v380 = vld [vmem:[%s276 + $0x1c] sm:$0xf]
        %v381 = vld [vmem:[%s276 + $0x20] sm:$0xf]
        %v382 = vld [vmem:[%s276 + $0x24] sm:$0xf]
        %v383 = vld [vmem:[%s276 + $0x28] sm:$0xf]
        %v384 = vld [vmem:[%s276 + $0x2c] sm:$0xf]
        %v385 = vld [vmem:[%s276 + $0x30] sm:$0xf]
        %v386 = vld [vmem:[%s276 + $0x34] sm:$0xf]
        %v387 = vld [vmem:[%s276 + $0x38] sm:$0xf]
        %v388 = vld [vmem:[%s276 + $0x3c] sm:$0xf]
        %v389 = vld [vmem:[%s276 + $0x40] sm:$0xf]
        %v390 = vld [vmem:[%s276 + $0x44] sm:$0xf]
        %v391 = vld [vmem:[%s276 + $0x48] sm:$0xf]
        %v392 = vld [vmem:[%s276 + $0x4c] sm:$0xf]
        %v393 = vld [vmem:[%s276 + $0x50] sm:$0xf]
        %v394 = vld [vmem:[%s276 + $0x54] sm:$0xf]
        %v395 = vld [vmem:[%s276 + $0x58] sm:$0xf]
        %v396 = vld [vmem:[%s276 + $0x5c] sm:$0xf]
        %v397 = vld [vmem:[%s276 + $0x60] sm:$0xf]
        %v398 = vld [vmem:[%s276 + $0x64] sm:$0xf]
        %v399 = vld [vmem:[%s276 + $0x68] sm:$0xf]
        %v400 = vld [vmem:[%s276 + $0x6c] sm:$0xf]
        %v401 = vld [vmem:[%s276 + $0x70] sm:$0xf]
        %v402 = vld [vmem:[%s276 + $0x74] sm:$0xf]
        %v403 = vld [vmem:[%s276 + $0x78] sm:$0xf]
        %v404 = vld [vmem:[%s276 + $0x7c] sm:$0xf]
        %v405 = vld [vmem:[%s1] sm:$0xf]
        %v406 = vld [vmem:[%s1 + $0x4] sm:$0xf]
        %v407 = vld [vmem:[%s1 + $0x8] sm:$0xf]
        %v408 = vld [vmem:[%s1 + $0xc] sm:$0xf]
        %v409 = vld [vmem:[%s1 + $0x10] sm:$0x3]
        %v442 = vunpack.c.l.b16 %v373
        %v443 = vunpack.c.l.b16 %v374
        %v444 = vunpack.c.l.b16 %v375
        %v445 = vunpack.c.l.b16 %v376
        %v446 = vunpack.c.l.b16 %v377
        %v447 = vunpack.c.l.b16 %v378
        %v448 = vunpack.c.l.b16 %v379
        %v449 = vunpack.c.l.b16 %v380
        %v450 = vunpack.c.l.b16 %v381
        %v451 = vunpack.c.l.b16 %v382
        %v452 = vunpack.c.l.b16 %v383
        %v453 = vunpack.c.l.b16 %v384
        %v454 = vunpack.c.l.b16 %v385
        %v455 = vunpack.c.l.b16 %v386
        %v456 = vunpack.c.l.b16 %v387
        %v457 = vunpack.c.l.b16 %v388
        %v458 = vunpack.c.l.b16 %v389
        %v459 = vunpack.c.l.b16 %v390
        %v460 = vunpack.c.l.b16 %v391
        %v461 = vunpack.c.l.b16 %v392
        %v462 = vunpack.c.l.b16 %v393
        %v463 = vunpack.c.l.b16 %v394
        %v464 = vunpack.c.l.b16 %v395
        %v465 = vunpack.c.l.b16 %v396
        %v466 = vunpack.c.l.b16 %v397
        %v467 = vunpack.c.l.b16 %v398
        %v468 = vunpack.c.l.b16 %v399
        %v469 = vunpack.c.l.b16 %v400
        %v470 = vunpack.c.l.b16 %v401
        %v471 = vunpack.c.l.b16 %v402
        %v472 = vunpack.c.l.b16 %v403
        %v473 = vunpack.c.l.b16 %v404
        %v474 = vpack.c.b16 %v443, %v442
        %v475 = vpack.c.b16 %v445, %v444
        %v476 = vpack.c.b16 %v447, %v446
        %v477 = vpack.c.b16 %v449, %v448
        %v478 = vpack.c.b16 %v451, %v450
        %v479 = vpack.c.b16 %v453, %v452
        %v480 = vpack.c.b16 %v455, %v454
        %v481 = vpack.c.b16 %v457, %v456
        %v482 = vpack.c.b16 %v459, %v458
        %v483 = vpack.c.b16 %v461, %v460
        %v484 = vpack.c.b16 %v463, %v462
        %v485 = vpack.c.b16 %v465, %v464
        %v486 = vpack.c.b16 %v467, %v466
        %v487 = vpack.c.b16 %v469, %v468
        %v488 = vpack.c.b16 %v471, %v470
        %v489 = vpack.c.b16 %v473, %v472
        %v495 = vunpack.c.l.b16 %v405
        %v496 = vunpack.c.l.b16 %v406
        %v497 = vunpack.c.l.b16 %v407
        %v498 = vunpack.c.l.b16 %v408
        %v499 = vunpack.c.l.b16 %v409
        %v500 = vpack.c.b16 %v496, %v495
        %v501 = vpack.c.b16 %v498, %v497
        %v502 = vpack.c.b16 %v499, %v499
        %vm505 = vcmask 293888
        %v507 = vsel %vm505, %v474, 0
        %v510 = vsel %vm505, %v475, 0
        %v513 = vsel %vm505, %v476, 0
        %v516 = vsel %vm505, %v477, 0
        %v519 = vsel %vm505, %v478, 0
        %v522 = vsel %vm505, %v479, 0
        %v525 = vsel %vm505, %v480, 0
        %v528 = vsel %vm505, %v481, 0
        %v531 = vsel %vm505, %v482, 0
        %v534 = vsel %vm505, %v483, 0
        %v537 = vsel %vm505, %v484, 0
        %v540 = vsel %vm505, %v485, 0
        %v543 = vsel %vm505, %v486, 0
        %v546 = vsel %vm505, %v487, 0
        %v549 = vsel %vm505, %v488, 0
        %v552 = vsel %vm505, %v489, 0
        %vm554 = vcmask 1041408
        %v556 = vsel %vm554, %v502, 0
        %558 = vmatprep.subr.bf16.mxu0 0
        %559 = vmatpush1.bf16.msra.mxu0 %v500
        %560 = vmatprep.subr.bf16.mxu0 0
        %561 = vmatpush1.bf16.msra.mxu0 %v501
        %562 = vmatprep.subr.bf16.mxu0 0
        %563 = vmatpush1.bf16.msra.mxu0 %v556
        %564 = vmatprep.subr.bf16.mxu0 0
        %565 = vmatpush1.bf16.msra.mxu0 0
        %566 = vmatprep.subr.bf16.mxu0 0
        %567 = vmatpush1.bf16.msra.mxu0 0
        %568 = vmatprep.subr.bf16.mxu0 0
        %569 = vmatpush1.bf16.msra.mxu0 0
        %570 = vmatprep.subr.bf16.mxu0 0
        %571 = vmatpush1.bf16.msra.mxu0 0
        %572 = vmatprep.subr.bf16.mxu0 0
        %573 = vmatpush1.bf16.msra.mxu0 0
        %574 = vmatprep.subr.bf16.mxu0 0
        %575 = vmatpush1.bf16.msra.mxu0 0
        %576 = vmatprep.subr.bf16.mxu0 0
        %577 = vmatpush1.bf16.msra.mxu0 0
        %578 = vmatprep.subr.bf16.mxu0 0
        %579 = vmatpush1.bf16.msra.mxu0 0
        %580 = vmatprep.subr.bf16.mxu0 0
        %581 = vmatpush1.bf16.msra.mxu0 0
        %582 = vmatprep.subr.bf16.mxu0 0
        %583 = vmatpush1.bf16.msra.mxu0 0
        %584 = vmatprep.subr.bf16.mxu0 0
        %585 = vmatpush1.bf16.msra.mxu0 0
        %586 = vmatprep.subr.bf16.mxu0 0
        %587 = vmatpush1.bf16.msra.mxu0 0
        %588 = vmatprep.subr.bf16.mxu0 0
        %589 = vmatpush1.bf16.msra.mxu0 0
        %590 = vmatprep.mubr.bf16.mxu0 0
        %591 = vmatmul.mubr.bf16.gmra.mrb[0].mxu0 %v507
        %v592 = vpop.f32.mrb[0].mxu0
        %v593 = vadd.f32 0.0, %v592
        %v594 = vpop.f32.mrb[0].mxu0
        %v595 = vpop.f32.mrb[0].mxu0
        %v596 = vadd.f32 0.0, %v595
        %v597 = vpop.f32.mrb[0].mxu0
        %598 = vmatprep.mubr.bf16.mxu0 0
        %599 = vmatmul.mubr.bf16.gmra.mrb[0].mxu0 %v510
        %v600 = vpop.f32.mrb[0].mxu0
        %v601 = vadd.f32 0.0, %v600
        %v602 = vpop.f32.mrb[0].mxu0
        %v603 = vpop.f32.mrb[0].mxu0
        %v604 = vadd.f32 0.0, %v603
        %v605 = vpop.f32.mrb[0].mxu0
        %606 = vmatprep.mubr.bf16.mxu0 0
        %607 = vmatmul.mubr.bf16.gmra.mrb[0].mxu0 %v513
        %v608 = vpop.f32.mrb[0].mxu0
        %v609 = vadd.f32 0.0, %v608
        %v610 = vpop.f32.mrb[0].mxu0
        %v611 = vpop.f32.mrb[0].mxu0
        %v612 = vadd.f32 0.0, %v611
        %v613 = vpop.f32.mrb[0].mxu0
        %614 = vmatprep.mubr.bf16.mxu0 0
        %615 = vmatmul.mubr.bf16.gmra.mrb[0].mxu0 %v516
        %v616 = vpop.f32.mrb[0].mxu0
        %v617 = vadd.f32 0.0, %v616
        %v618 = vpop.f32.mrb[0].mxu0
        %v619 = vpop.f32.mrb[0].mxu0
        %v620 = vadd.f32 0.0, %v619
        %v621 = vpop.f32.mrb[0].mxu0
        %622 = vmatprep.mubr.bf16.mxu0 0
        %623 = vmatmul.mubr.bf16.gmra.mrb[0].mxu0 %v519
        %v624 = vpop.f32.mrb[0].mxu0
        %v625 = vadd.f32 0.0, %v624
        %v626 = vpop.f32.mrb[0].mxu0
        %v627 = vpop.f32.mrb[0].mxu0
        %v628 = vadd.f32 0.0, %v627
        %v629 = vpop.f32.mrb[0].mxu0
        %630 = vmatprep.mubr.bf16.mxu0 0
        %631 = vmatmul.mubr.bf16.gmra.mrb[0].mxu0 %v522
        %v632 = vpop.f32.mrb[0].mxu0
        %v633 = vadd.f32 0.0, %v632
        %v634 = vpop.f32.mrb[0].mxu0
        %v635 = vpop.f32.mrb[0].mxu0
        %v636 = vadd.f32 0.0, %v635
        %v637 = vpop.f32.mrb[0].mxu0
        %638 = vmatprep.mubr.bf16.mxu0 0
        %639 = vmatmul.mubr.bf16.gmra.mrb[0].mxu0 %v525
        %v640 = vpop.f32.mrb[0].mxu0
        %v641 = vadd.f32 0.0, %v640
        %v642 = vpop.f32.mrb[0].mxu0
        %v643 = vpop.f32.mrb[0].mxu0
        %v644 = vadd.f32 0.0, %v643
        %v645 = vpop.f32.mrb[0].mxu0
        %646 = vmatprep.mubr.bf16.mxu0 0
        %647 = vmatmul.mubr.bf16.gmra.mrb[0].mxu0 %v528
        %v648 = vpop.f32.mrb[0].mxu0
        %v649 = vadd.f32 0.0, %v648
        %v650 = vpop.f32.mrb[0].mxu0
        %v651 = vpop.f32.mrb[0].mxu0
        %v652 = vadd.f32 0.0, %v651
        %v653 = vpop.f32.mrb[0].mxu0
        %654 = vmatprep.mubr.bf16.mxu0 0
        %655 = vmatmul.mubr.bf16.gmra.mrb[0].mxu0 %v531
        %v656 = vpop.f32.mrb[0].mxu0
        %v657 = vadd.f32 0.0, %v656
        %v658 = vpop.f32.mrb[0].mxu0
        %v659 = vpop.f32.mrb[0].mxu0
        %v660 = vadd.f32 0.0, %v659
        %v661 = vpop.f32.mrb[0].mxu0
        %662 = vmatprep.mubr.bf16.mxu0 0
        %663 = vmatmul.mubr.bf16.gmra.mrb[0].mxu0 %v534
        %v664 = vpop.f32.mrb[0].mxu0
        %v665 = vadd.f32 0.0, %v664
        %v666 = vpop.f32.mrb[0].mxu0
        %v667 = vpop.f32.mrb[0].mxu0
        %v668 = vadd.f32 0.0, %v667
        %v669 = vpop.f32.mrb[0].mxu0
        %670 = vmatprep.mubr.bf16.mxu0 0
        %671 = vmatmul.mubr.bf16.gmra.mrb[0].mxu0 %v537
        %v672 = vpop.f32.mrb[0].mxu0
        %v673 = vadd.f32 0.0, %v672
        %v674 = vpop.f32.mrb[0].mxu0
        %v675 = vpop.f32.mrb[0].mxu0
        %v676 = vadd.f32 0.0, %v675
        %v677 = vpop.f32.mrb[0].mxu0
        %678 = vmatprep.mubr.bf16.mxu0 0
        %679 = vmatmul.mubr.bf16.gmra.mrb[0].mxu0 %v540
        %v680 = vpop.f32.mrb[0].mxu0
        %v681 = vadd.f32 0.0, %v680
        %v682 = vpop.f32.mrb[0].mxu0
        %v683 = vpop.f32.mrb[0].mxu0
        %v684 = vadd.f32 0.0, %v683
        %v685 = vpop.f32.mrb[0].mxu0
        %686 = vmatprep.mubr.bf16.mxu0 0
        %687 = vmatmul.mubr.bf16.gmra.mrb[0].mxu0 %v543
        %v688 = vpop.f32.mrb[0].mxu0
        %v689 = vadd.f32 0.0, %v688
        %v690 = vpop.f32.mrb[0].mxu0
        %v691 = vpop.f32.mrb[0].mxu0
        %v692 = vadd.f32 0.0, %v691
        %v693 = vpop.f32.mrb[0].mxu0
        %694 = vmatprep.mubr.bf16.mxu0 0
        %695 = vmatmul.mubr.bf16.gmra.mrb[0].mxu0 %v546
        %v696 = vpop.f32.mrb[0].mxu0
        %v697 = vadd.f32 0.0, %v696
        %v698 = vpop.f32.mrb[0].mxu0
        %v699 = vpop.f32.mrb[0].mxu0
        %v700 = vadd.f32 0.0, %v699
        %v701 = vpop.f32.mrb[0].mxu0
        %702 = vmatprep.mubr.bf16.mxu0 0
        %703 = vmatmul.mubr.bf16.gmra.mrb[0].mxu0 %v549
        %v704 = vpop.f32.mrb[0].mxu0
        %v705 = vadd.f32 0.0, %v704
        %v706 = vpop.f32.mrb[0].mxu0
        %v707 = vpop.f32.mrb[0].mxu0
        %v708 = vadd.f32 0.0, %v707
        %v709 = vpop.f32.mrb[0].mxu0
        %710 = vmatprep.mubr.bf16.mxu0 0
        %711 = vmatmul.mubr.bf16.gmra.mrb[0].mxu0 %v552
        %v712 = vpop.f32.mrb[0].mxu0
        %v713 = vadd.f32 0.0, %v712
        %v714 = vpop.f32.mrb[0].mxu0
        %v715 = vpop.f32.mrb[0].mxu0
        %v716 = vadd.f32 0.0, %v715
        %v717 = vpop.f32.mrb[0].mxu0
        %718 = vdwg.mxu0
        %v719 = vlaneseq
        %v720 = vshrl.u32 %v719, 7
        %v721 = vsub.s32 0, %v720
        %v722 = vrot.slane %v367, %v721
        %v723 = vadd.f32 %v593, %v722
        %v724 = vadd.f32 %v596, %v722
        %v725 = vadd.f32 %v601, %v722
        %v726 = vadd.f32 %v604, %v722
        %v727 = vadd.f32 %v609, %v722
        %v728 = vadd.f32 %v612, %v722
        %v729 = vadd.f32 %v617, %v722
        %v730 = vadd.f32 %v620, %v722
        %v731 = vadd.f32 %v625, %v722
        %v732 = vadd.f32 %v628, %v722
        %v733 = vadd.f32 %v633, %v722
        %v734 = vadd.f32 %v636, %v722
        %v735 = vadd.f32 %v641, %v722
        %v736 = vadd.f32 %v644, %v722
        %v737 = vadd.f32 %v649, %v722
        %v738 = vadd.f32 %v652, %v722
        %v739 = vadd.f32 %v657, %v722
        %v740 = vadd.f32 %v660, %v722
        %v741 = vadd.f32 %v665, %v722
        %v742 = vadd.f32 %v668, %v722
        %v743 = vadd.f32 %v673, %v722
        %v744 = vadd.f32 %v676, %v722
        %v745 = vadd.f32 %v681, %v722
        %v746 = vadd.f32 %v684, %v722
        %v747 = vadd.f32 %v689, %v722
        %v748 = vadd.f32 %v692, %v722
        %v749 = vadd.f32 %v697, %v722
        %v750 = vadd.f32 %v700, %v722
        %v751 = vadd.f32 %v705, %v722
        %v752 = vadd.f32 %v708, %v722
        %v753 = vadd.f32 %v713, %v722
        %v754 = vadd.f32 %v716, %v722
        %v755 = vsel %vm278, %v723, 0.0
        %v756 = vsel %vm278, %v724, 0.0
        %v757 = vadd.f32 %v755, %v756
        %v758 = vsel %vm278, %v725, 0.0
        %v759 = vadd.f32 %v757, %v758
        %v760 = vsel %vm278, %v726, 0.0
        %v761 = vadd.f32 %v759, %v760
        %v762 = vsel %vm278, %v727, 0.0
        %v763 = vadd.f32 %v761, %v762
        %v764 = vsel %vm278, %v728, 0.0
        %v765 = vadd.f32 %v763, %v764
        %v766 = vsel %vm278, %v729, 0.0
        %v767 = vadd.f32 %v765, %v766
        %v768 = vsel %vm278, %v730, 0.0
        %v769 = vadd.f32 %v767, %v768
        %v770 = vsel %vm278, %v731, 0.0
        %v771 = vadd.f32 %v769, %v770
        %v772 = vsel %vm278, %v732, 0.0
        %v773 = vadd.f32 %v771, %v772
        %v774 = vsel %vm278, %v733, 0.0
        %v775 = vadd.f32 %v773, %v774
        %v776 = vsel %vm278, %v734, 0.0
        %v777 = vadd.f32 %v775, %v776
        %v778 = vsel %vm278, %v735, 0.0
        %v779 = vadd.f32 %v777, %v778
        %v780 = vsel %vm278, %v736, 0.0
        %v781 = vadd.f32 %v779, %v780
        %v782 = vsel %vm278, %v737, 0.0
        %v783 = vadd.f32 %v781, %v782
        %v784 = vsel %vm278, %v738, 0.0
        %v785 = vadd.f32 %v783, %v784
        %v786 = vsel %vm278, %v739, 0.0
        %v787 = vadd.f32 %v785, %v786
        %v788 = vsel %vm278, %v740, 0.0
        %v789 = vadd.f32 %v787, %v788
        %v790 = vsel %vm278, %v741, 0.0
        %v791 = vadd.f32 %v789, %v790
        %v792 = vsel %vm278, %v742, 0.0
        %v793 = vadd.f32 %v791, %v792
        %v794 = vsel %vm278, %v743, 0.0
        %v795 = vadd.f32 %v793, %v794
        %v796 = vsel %vm278, %v744, 0.0
        %v797 = vadd.f32 %v795, %v796
        %v798 = vsel %vm278, %v745, 0.0
        %v799 = vadd.f32 %v797, %v798
        %v800 = vsel %vm278, %v746, 0.0
        %v801 = vadd.f32 %v799, %v800
        %v802 = vsel %vm278, %v747, 0.0
        %v803 = vadd.f32 %v801, %v802
        %v804 = vsel %vm278, %v748, 0.0
        %v805 = vadd.f32 %v803, %v804
        %v806 = vsel %vm278, %v749, 0.0
        %v807 = vadd.f32 %v805, %v806
        %v808 = vsel %vm278, %v750, 0.0
        %v809 = vadd.f32 %v807, %v808
        %v810 = vsel %vm278, %v751, 0.0
        %v811 = vadd.f32 %v809, %v810
        %v812 = vsel %vm278, %v752, 0.0
        %v813 = vadd.f32 %v811, %v812
        %v814 = vsel %vm278, %v753, 0.0
        %v815 = vadd.f32 %v813, %v814
        %v816 = vsel %vm278, %v754, 0.0
        %v817 = vadd.f32 %v815, %v816
        %v818 = vrot.slane %v817, 4
        %v819 = vadd.f32 %v817, %v818
        %v820 = vrot.slane %v819, 2
        %v821 = vadd.f32 %v819, %v820
        %v822 = vrot.slane %v821, 1
        %v823 = vadd.f32 %v821, %v822
        %v824 = vrcp.pop 256.0
        %v825 = vmul.f32 %v823, %v824
        %v826 = vsub.f32 %v723, %v825
        %v827 = vsub.f32 %v724, %v825
        %v828 = vsub.f32 %v725, %v825
        %v829 = vsub.f32 %v726, %v825
        %v830 = vsub.f32 %v727, %v825
        %v831 = vsub.f32 %v728, %v825
        %v832 = vsub.f32 %v729, %v825
        %v833 = vsub.f32 %v730, %v825
        %v834 = vsub.f32 %v731, %v825
        %v835 = vsub.f32 %v732, %v825
        %v836 = vsub.f32 %v733, %v825
        %v837 = vsub.f32 %v734, %v825
        %v838 = vsub.f32 %v735, %v825
        %v839 = vsub.f32 %v736, %v825
        %v840 = vsub.f32 %v737, %v825
        %v841 = vsub.f32 %v738, %v825
        %v842 = vsub.f32 %v739, %v825
        %v843 = vsub.f32 %v740, %v825
        %v844 = vsub.f32 %v741, %v825
        %v845 = vsub.f32 %v742, %v825
        %v846 = vsub.f32 %v743, %v825
        %v847 = vsub.f32 %v744, %v825
        %v848 = vsub.f32 %v745, %v825
        %v849 = vsub.f32 %v746, %v825
        %v850 = vsub.f32 %v747, %v825
        %v851 = vsub.f32 %v748, %v825
        %v852 = vsub.f32 %v749, %v825
        %v853 = vsub.f32 %v750, %v825
        %v854 = vsub.f32 %v751, %v825
        %v855 = vsub.f32 %v752, %v825
        %v856 = vsub.f32 %v753, %v825
        %v857 = vsub.f32 %v754, %v825
        %v858 = vmul.f32 %v826, %v826
        %v859 = vmul.f32 %v827, %v827
        %v860 = vmul.f32 %v828, %v828
        %v861 = vmul.f32 %v829, %v829
        %v862 = vmul.f32 %v830, %v830
        %v863 = vmul.f32 %v831, %v831
        %v864 = vmul.f32 %v832, %v832
        %v865 = vmul.f32 %v833, %v833
        %v866 = vmul.f32 %v834, %v834
        %v867 = vmul.f32 %v835, %v835
        %v868 = vmul.f32 %v836, %v836
        %v869 = vmul.f32 %v837, %v837
        %v870 = vmul.f32 %v838, %v838
        %v871 = vmul.f32 %v839, %v839
        %v872 = vmul.f32 %v840, %v840
        %v873 = vmul.f32 %v841, %v841
        %v874 = vmul.f32 %v842, %v842
        %v875 = vmul.f32 %v843, %v843
        %v876 = vmul.f32 %v844, %v844
        %v877 = vmul.f32 %v845, %v845
        %v878 = vmul.f32 %v846, %v846
        %v879 = vmul.f32 %v847, %v847
        %v880 = vmul.f32 %v848, %v848
        %v881 = vmul.f32 %v849, %v849
        %v882 = vmul.f32 %v850, %v850
        %v883 = vmul.f32 %v851, %v851
        %v884 = vmul.f32 %v852, %v852
        %v885 = vmul.f32 %v853, %v853
        %v886 = vmul.f32 %v854, %v854
        %v887 = vmul.f32 %v855, %v855
        %v888 = vmul.f32 %v856, %v856
        %v889 = vmul.f32 %v857, %v857
        %v890 = vsel %vm278, %v858, 0.0
        %v891 = vsel %vm278, %v859, 0.0
        %v892 = vadd.f32 %v890, %v891
        %v893 = vsel %vm278, %v860, 0.0
        %v894 = vadd.f32 %v892, %v893
        %v895 = vsel %vm278, %v861, 0.0
        %v896 = vadd.f32 %v894, %v895
        %v897 = vsel %vm278, %v862, 0.0
        %v898 = vadd.f32 %v896, %v897
        %v899 = vsel %vm278, %v863, 0.0
        %v900 = vadd.f32 %v898, %v899
        %v901 = vsel %vm278, %v864, 0.0
        %v902 = vadd.f32 %v900, %v901
        %v903 = vsel %vm278, %v865, 0.0
        %v904 = vadd.f32 %v902, %v903
        %v905 = vsel %vm278, %v866, 0.0
        %v906 = vadd.f32 %v904, %v905
        %v907 = vsel %vm278, %v867, 0.0
        %v908 = vadd.f32 %v906, %v907
        %v909 = vsel %vm278, %v868, 0.0
        %v910 = vadd.f32 %v908, %v909
        %v911 = vsel %vm278, %v869, 0.0
        %v912 = vadd.f32 %v910, %v911
        %v913 = vsel %vm278, %v870, 0.0
        %v914 = vadd.f32 %v912, %v913
        %v915 = vsel %vm278, %v871, 0.0
        %v916 = vadd.f32 %v914, %v915
        %v917 = vsel %vm278, %v872, 0.0
        %v918 = vadd.f32 %v916, %v917
        %v919 = vsel %vm278, %v873, 0.0
        %v920 = vadd.f32 %v918, %v919
        %v921 = vsel %vm278, %v874, 0.0
        %v922 = vadd.f32 %v920, %v921
        %v923 = vsel %vm278, %v875, 0.0
        %v924 = vadd.f32 %v922, %v923
        %v925 = vsel %vm278, %v876, 0.0
        %v926 = vadd.f32 %v924, %v925
        %v927 = vsel %vm278, %v877, 0.0
        %v928 = vadd.f32 %v926, %v927
        %v929 = vsel %vm278, %v878, 0.0
        %v930 = vadd.f32 %v928, %v929
        %v931 = vsel %vm278, %v879, 0.0
        %v932 = vadd.f32 %v930, %v931
        %v933 = vsel %vm278, %v880, 0.0
        %v934 = vadd.f32 %v932, %v933
        %v935 = vsel %vm278, %v881, 0.0
        %v936 = vadd.f32 %v934, %v935
        %v937 = vsel %vm278, %v882, 0.0
        %v938 = vadd.f32 %v936, %v937
        %v939 = vsel %vm278, %v883, 0.0
        %v940 = vadd.f32 %v938, %v939
        %v941 = vsel %vm278, %v884, 0.0
        %v942 = vadd.f32 %v940, %v941
        %v943 = vsel %vm278, %v885, 0.0
        %v944 = vadd.f32 %v942, %v943
        %v945 = vsel %vm278, %v886, 0.0
        %v946 = vadd.f32 %v944, %v945
        %v947 = vsel %vm278, %v887, 0.0
        %v948 = vadd.f32 %v946, %v947
        %v949 = vsel %vm278, %v888, 0.0
        %v950 = vadd.f32 %v948, %v949
        %v951 = vsel %vm278, %v889, 0.0
        %v952 = vadd.f32 %v950, %v951
        %v953 = vrot.slane %v952, 4
        %v954 = vadd.f32 %v952, %v953
        %v955 = vrot.slane %v954, 2
        %v956 = vadd.f32 %v954, %v955
        %v957 = vrot.slane %v956, 1
        %v958 = vadd.f32 %v956, %v957
        %v959 = vmul.f32 %v958, %v824
        %v960 = vadd.f32 %v959, 1e-05
        %v961 = vrsqrt.pop %v960
        %v962 = vmul.f32 %v826, %v961
        %v963 = vmul.f32 %v827, %v961
        %v964 = vmul.f32 %v828, %v961
        %v965 = vmul.f32 %v829, %v961
        %v966 = vmul.f32 %v830, %v961
        %v967 = vmul.f32 %v831, %v961
        %v968 = vmul.f32 %v832, %v961
        %v969 = vmul.f32 %v833, %v961
        %v970 = vmul.f32 %v834, %v961
        %v971 = vmul.f32 %v835, %v961
        %v972 = vmul.f32 %v836, %v961
        %v973 = vmul.f32 %v837, %v961
        %v974 = vmul.f32 %v838, %v961
        %v975 = vmul.f32 %v839, %v961
        %v976 = vmul.f32 %v840, %v961
        %v977 = vmul.f32 %v841, %v961
        %v978 = vmul.f32 %v842, %v961
        %v979 = vmul.f32 %v843, %v961
        %v980 = vmul.f32 %v844, %v961
        %v981 = vmul.f32 %v845, %v961
        %v982 = vmul.f32 %v846, %v961
        %v983 = vmul.f32 %v847, %v961
        %v984 = vmul.f32 %v848, %v961
        %v985 = vmul.f32 %v849, %v961
        %v986 = vmul.f32 %v850, %v961
        %v987 = vmul.f32 %v851, %v961
        %v988 = vmul.f32 %v852, %v961
        %v989 = vmul.f32 %v853, %v961
        %v990 = vmul.f32 %v854, %v961
        %v991 = vmul.f32 %v855, %v961
        %v992 = vmul.f32 %v856, %v961
        %v993 = vmul.f32 %v857, %v961
        %v994 = vlaneseq
        %v995 = vshrl.u32 %v994, 7
        %v996 = vsub.s32 0, %v995
        %v997 = vrot.slane %v368, %v996
        %v998 = vmul.f32 %v962, %v997
        %v999 = vmul.f32 %v963, %v997
        %v1000 = vmul.f32 %v964, %v997
        %v1001 = vmul.f32 %v965, %v997
        %v1002 = vmul.f32 %v966, %v997
        %v1003 = vmul.f32 %v967, %v997
        %v1004 = vmul.f32 %v968, %v997
        %v1005 = vmul.f32 %v969, %v997
        %v1006 = vmul.f32 %v970, %v997
        %v1007 = vmul.f32 %v971, %v997
        %v1008 = vmul.f32 %v972, %v997
        %v1009 = vmul.f32 %v973, %v997
        %v1010 = vmul.f32 %v974, %v997
        %v1011 = vmul.f32 %v975, %v997
        %v1012 = vmul.f32 %v976, %v997
        %v1013 = vmul.f32 %v977, %v997
        %v1014 = vmul.f32 %v978, %v997
        %v1015 = vmul.f32 %v979, %v997
        %v1016 = vmul.f32 %v980, %v997
        %v1017 = vmul.f32 %v981, %v997
        %v1018 = vmul.f32 %v982, %v997
        %v1019 = vmul.f32 %v983, %v997
        %v1020 = vmul.f32 %v984, %v997
        %v1021 = vmul.f32 %v985, %v997
        %v1022 = vmul.f32 %v986, %v997
        %v1023 = vmul.f32 %v987, %v997
        %v1024 = vmul.f32 %v988, %v997
        %v1025 = vmul.f32 %v989, %v997
        %v1026 = vmul.f32 %v990, %v997
        %v1027 = vmul.f32 %v991, %v997
        %v1028 = vmul.f32 %v992, %v997
        %v1029 = vmul.f32 %v993, %v997
        %v1030 = vlaneseq
        %v1031 = vshrl.u32 %v1030, 7
        %v1032 = vsub.s32 0, %v1031
        %v1033 = vrot.slane %v369, %v1032
        %v1034 = vadd.f32 %v998, %v1033
        %v1035 = vadd.f32 %v999, %v1033
        %v1036 = vadd.f32 %v1000, %v1033
        %v1037 = vadd.f32 %v1001, %v1033
        %v1038 = vadd.f32 %v1002, %v1033
        %v1039 = vadd.f32 %v1003, %v1033
        %v1040 = vadd.f32 %v1004, %v1033
        %v1041 = vadd.f32 %v1005, %v1033
        %v1042 = vadd.f32 %v1006, %v1033
        %v1043 = vadd.f32 %v1007, %v1033
        %v1044 = vadd.f32 %v1008, %v1033
        %v1045 = vadd.f32 %v1009, %v1033
        %v1046 = vadd.f32 %v1010, %v1033
        %v1047 = vadd.f32 %v1011, %v1033
        %v1048 = vadd.f32 %v1012, %v1033
        %v1049 = vadd.f32 %v1013, %v1033
        %v1050 = vadd.f32 %v1014, %v1033
        %v1051 = vadd.f32 %v1015, %v1033
        %v1052 = vadd.f32 %v1016, %v1033
        %v1053 = vadd.f32 %v1017, %v1033
        %v1054 = vadd.f32 %v1018, %v1033
        %v1055 = vadd.f32 %v1019, %v1033
        %v1056 = vadd.f32 %v1020, %v1033
        %v1057 = vadd.f32 %v1021, %v1033
        %v1058 = vadd.f32 %v1022, %v1033
        %v1059 = vadd.f32 %v1023, %v1033
        %v1060 = vadd.f32 %v1024, %v1033
        %v1061 = vadd.f32 %v1025, %v1033
        %v1062 = vadd.f32 %v1026, %v1033
        %v1063 = vadd.f32 %v1027, %v1033
        %v1064 = vadd.f32 %v1028, %v1033
        %v1065 = vadd.f32 %v1029, %v1033
        %v1066 = vmax.f32 %v1034, 0.0
        %v1067 = vmax.f32 %v1035, 0.0
        %v1068 = vmax.f32 %v1036, 0.0
        %v1069 = vmax.f32 %v1037, 0.0
        %v1070 = vmax.f32 %v1038, 0.0
        %v1071 = vmax.f32 %v1039, 0.0
        %v1072 = vmax.f32 %v1040, 0.0
        %v1073 = vmax.f32 %v1041, 0.0
        %v1074 = vmax.f32 %v1042, 0.0
        %v1075 = vmax.f32 %v1043, 0.0
        %v1076 = vmax.f32 %v1044, 0.0
        %v1077 = vmax.f32 %v1045, 0.0
        %v1078 = vmax.f32 %v1046, 0.0
        %v1079 = vmax.f32 %v1047, 0.0
        %v1080 = vmax.f32 %v1048, 0.0
        %v1081 = vmax.f32 %v1049, 0.0
        %v1082 = vmax.f32 %v1050, 0.0
        %v1083 = vmax.f32 %v1051, 0.0
        %v1084 = vmax.f32 %v1052, 0.0
        %v1085 = vmax.f32 %v1053, 0.0
        %v1086 = vmax.f32 %v1054, 0.0
        %v1087 = vmax.f32 %v1055, 0.0
        %v1088 = vmax.f32 %v1056, 0.0
        %v1089 = vmax.f32 %v1057, 0.0
        %v1090 = vmax.f32 %v1058, 0.0
        %v1091 = vmax.f32 %v1059, 0.0
        %v1092 = vmax.f32 %v1060, 0.0
        %v1093 = vmax.f32 %v1061, 0.0
        %v1094 = vmax.f32 %v1062, 0.0
        %v1095 = vmax.f32 %v1063, 0.0
        %v1096 = vmax.f32 %v1064, 0.0
        %v1097 = vmax.f32 %v1065, 0.0
        %s1098 = scalar_lea.vmem [#allocation2], 24
        %1099 = vst.msk [vmem:[%s1098 + $0x1] sm:$0xff] %vm278, %v1066
        %1100 = vst.msk [vmem:[%s1098 + $0x9] sm:$0xff] %vm278, %v1067
        %1101 = vst.msk [vmem:[%s1098 + $0x19] sm:$0xff] %vm278, %v1068
        %1102 = vst.msk [vmem:[%s1098 + $0x21] sm:$0xff] %vm278, %v1069
        %1103 = vst.msk [vmem:[%s1098 + $0x31] sm:$0xff] %vm278, %v1070
        %1104 = vst.msk [vmem:[%s1098 + $0x39] sm:$0xff] %vm278, %v1071
        %1105 = vst.msk [vmem:[%s1098 + $0x49] sm:$0xff] %vm278, %v1072
        %1106 = vst.msk [vmem:[%s1098 + $0x51] sm:$0xff] %vm278, %v1073
        %1107 = vst.msk [vmem:[%s1098 + $0x61] sm:$0xff] %vm278, %v1074
        %1108 = vst.msk [vmem:[%s1098 + $0x69] sm:$0xff] %vm278, %v1075
        %1109 = vst.msk [vmem:[%s1098 + $0x79] sm:$0xff] %vm278, %v1076
        %1110 = vst.msk [vmem:[%s1098 + $0x81] sm:$0xff] %vm278, %v1077
        %1111 = vst.msk [vmem:[%s1098 + $0x91] sm:$0xff] %vm278, %v1078
        %1112 = vst.msk [vmem:[%s1098 + $0x99] sm:$0xff] %vm278, %v1079
        %1113 = vst.msk [vmem:[%s1098 + $0xa9] sm:$0xff] %vm278, %v1080
        %1114 = vst.msk [vmem:[%s1098 + $0xb1] sm:$0xff] %vm278, %v1081
        %1115 = vst.msk [vmem:[%s1098 + $0xc1] sm:$0xff] %vm278, %v1082
        %1116 = vst.msk [vmem:[%s1098 + $0xc9] sm:$0xff] %vm278, %v1083
        %1117 = vst.msk [vmem:[%s1098 + $0xd9] sm:$0xff] %vm278, %v1084
        %1118 = vst.msk [vmem:[%s1098 + $0xe1] sm:$0xff] %vm278, %v1085
        %1119 = vst.msk [vmem:[%s1098 + $0xf1] sm:$0xff] %vm278, %v1086
        %1120 = vst.msk [vmem:[%s1098 + $0xf9] sm:$0xff] %vm278, %v1087
        %1121 = vst.msk [vmem:[%s1098 + $0x109] sm:$0xff] %vm278, %v1088
        %1122 = vst.msk [vmem:[%s1098 + $0x111] sm:$0xff] %vm278, %v1089
        %1123 = vst.msk [vmem:[%s1098 + $0x121] sm:$0xff] %vm278, %v1090
        %1124 = vst.msk [vmem:[%s1098 + $0x129] sm:$0xff] %vm278, %v1091
        %1125 = vst.msk [vmem:[%s1098 + $0x139] sm:$0xff] %vm278, %v1092
        %1126 = vst.msk [vmem:[%s1098 + $0x141] sm:$0xff] %vm278, %v1093
        %1127 = vst.msk [vmem:[%s1098 + $0x151] sm:$0xff] %vm278, %v1094
        %1128 = vst.msk [vmem:[%s1098 + $0x159] sm:$0xff] %vm278, %v1095
        %1129 = vst.msk [vmem:[%s1098 + $0x169] sm:$0xff] %vm278, %v1096
        %1130 = vst.msk [vmem:[%s1098 + $0x171] sm:$0xff] %vm278, %v1097
        %v1131 = vld [vmem:[#allocation2] sm:$0xff]
        %v1132 = vld [vmem:[#allocation2 + $0x8] sm:$0xff]
        %v1133 = vld [vmem:[#allocation2 + $0x18] sm:$0xff]
        %v1134 = vld [vmem:[#allocation2 + $0x20] sm:$0xff]
        %v1135 = vld [vmem:[#allocation2 + $0x30] sm:$0xff]
        %v1136 = vld [vmem:[#allocation2 + $0x38] sm:$0xff]
        %v1137 = vld [vmem:[#allocation2 + $0x48] sm:$0xff]
        %v1138 = vld [vmem:[#allocation2 + $0x50] sm:$0xff]
        %v1139 = vld [vmem:[#allocation2 + $0x60] sm:$0xff]
        %v1140 = vld [vmem:[#allocation2 + $0x68] sm:$0xff]
        %v1141 = vld [vmem:[#allocation2 + $0x78] sm:$0xff]
        %v1142 = vld [vmem:[#allocation2 + $0x80] sm:$0xff]
        %v1143 = vld [vmem:[#allocation2 + $0x90] sm:$0xff]
        %v1144 = vld [vmem:[#allocation2 + $0x98] sm:$0xff]
        %v1145 = vld [vmem:[#allocation2 + $0xa8] sm:$0xff]
        %v1146 = vld [vmem:[#allocation2 + $0xb0] sm:$0xff]
        %v1147 = vld [vmem:[#allocation2 + $0xc0] sm:$0xff]
        %v1148 = vld [vmem:[#allocation2 + $0xc8] sm:$0xff]
        %v1149 = vld [vmem:[#allocation2 + $0xd8] sm:$0xff]
        %v1150 = vld [vmem:[#allocation2 + $0xe0] sm:$0xff]
        %v1151 = vld [vmem:[#allocation2 + $0xf0] sm:$0xff]
        %v1152 = vld [vmem:[#allocation2 + $0xf8] sm:$0xff]
        %v1153 = vld [vmem:[#allocation2 + $0x108] sm:$0xff]
        %v1154 = vld [vmem:[#allocation2 + $0x110] sm:$0xff]
        %v1155 = vld [vmem:[#allocation2 + $0x120] sm:$0xff]
        %v1156 = vld [vmem:[#allocation2 + $0x128] sm:$0xff]
        %v1157 = vld [vmem:[#allocation2 + $0x138] sm:$0xff]
        %v1158 = vld [vmem:[#allocation2 + $0x140] sm:$0xff]
        %v1159 = vld [vmem:[#allocation2 + $0x150] sm:$0xff]
        %v1160 = vld [vmem:[#allocation2 + $0x158] sm:$0xff]
        %v1161 = vld [vmem:[#allocation2 + $0x168] sm:$0xff]
        %v1162 = vld [vmem:[#allocation2 + $0x170] sm:$0xff]
        %v1163 = vld [vmem:[#allocation2 + $0x1] sm:$0xff]
        %v1164 = vld [vmem:[#allocation2 + $0x9] sm:$0xff]
        %v1165 = vld [vmem:[#allocation2 + $0x19] sm:$0xff]
        %v1166 = vld [vmem:[#allocation2 + $0x21] sm:$0xff]
        %v1167 = vld [vmem:[#allocation2 + $0x31] sm:$0xff]
        %v1168 = vld [vmem:[#allocation2 + $0x39] sm:$0xff]
        %v1169 = vld [vmem:[#allocation2 + $0x49] sm:$0xff]
        %v1170 = vld [vmem:[#allocation2 + $0x51] sm:$0xff]
        %v1171 = vld [vmem:[#allocation2 + $0x61] sm:$0xff]
        %v1172 = vld [vmem:[#allocation2 + $0x69] sm:$0xff]
        %v1173 = vld [vmem:[#allocation2 + $0x79] sm:$0xff]
        %v1174 = vld [vmem:[#allocation2 + $0x81] sm:$0xff]
        %v1175 = vld [vmem:[#allocation2 + $0x91] sm:$0xff]
        %v1176 = vld [vmem:[#allocation2 + $0x99] sm:$0xff]
        %v1177 = vld [vmem:[#allocation2 + $0xa9] sm:$0xff]
        %v1178 = vld [vmem:[#allocation2 + $0xb1] sm:$0xff]
        %v1179 = vld [vmem:[#allocation2 + $0xc1] sm:$0xff]
        %v1180 = vld [vmem:[#allocation2 + $0xc9] sm:$0xff]
        %v1181 = vld [vmem:[#allocation2 + $0xd9] sm:$0xff]
        %v1182 = vld [vmem:[#allocation2 + $0xe1] sm:$0xff]
        %v1183 = vld [vmem:[#allocation2 + $0xf1] sm:$0xff]
        %v1184 = vld [vmem:[#allocation2 + $0xf9] sm:$0xff]
        %v1185 = vld [vmem:[#allocation2 + $0x109] sm:$0xff]
        %v1186 = vld [vmem:[#allocation2 + $0x111] sm:$0xff]
        %v1187 = vld [vmem:[#allocation2 + $0x121] sm:$0xff]
        %v1188 = vld [vmem:[#allocation2 + $0x129] sm:$0xff]
        %v1189 = vld [vmem:[#allocation2 + $0x139] sm:$0xff]
        %v1190 = vld [vmem:[#allocation2 + $0x141] sm:$0xff]
        %v1191 = vld [vmem:[#allocation2 + $0x151] sm:$0xff]
        %v1192 = vld [vmem:[#allocation2 + $0x159] sm:$0xff]
        %v1193 = vld [vmem:[#allocation2 + $0x169] sm:$0xff]
        %v1194 = vld [vmem:[#allocation2 + $0x171] sm:$0xff]
        %v1195 = vld [vmem:[#allocation2 + $0x2] sm:$0xff]
        %v1196 = vld [vmem:[#allocation2 + $0xa] sm:$0xff]
        %v1197 = vld [vmem:[#allocation2 + $0x1a] sm:$0xff]
        %v1198 = vld [vmem:[#allocation2 + $0x22] sm:$0xff]
        %v1199 = vld [vmem:[#allocation2 + $0x32] sm:$0xff]
        %v1200 = vld [vmem:[#allocation2 + $0x3a] sm:$0xff]
        %v1201 = vld [vmem:[#allocation2 + $0x4a] sm:$0xff]
        %v1202 = vld [vmem:[#allocation2 + $0x52] sm:$0xff]
        %v1203 = vld [vmem:[#allocation2 + $0x62] sm:$0xff]
        %v1204 = vld [vmem:[#allocation2 + $0x6a] sm:$0xff]
        %v1205 = vld [vmem:[#allocation2 + $0x7a] sm:$0xff]
        %v1206 = vld [vmem:[#allocation2 + $0x82] sm:$0xff]
        %v1207 = vld [vmem:[#allocation2 + $0x92] sm:$0xff]
        %v1208 = vld [vmem:[#allocation2 + $0x9a] sm:$0xff]
        %v1209 = vld [vmem:[#allocation2 + $0xaa] sm:$0xff]
        %v1210 = vld [vmem:[#allocation2 + $0xb2] sm:$0xff]
        %v1211 = vld [vmem:[#allocation2 + $0xc2] sm:$0xff]
        %v1212 = vld [vmem:[#allocation2 + $0xca] sm:$0xff]
        %v1213 = vld [vmem:[#allocation2 + $0xda] sm:$0xff]
        %v1214 = vld [vmem:[#allocation2 + $0xe2] sm:$0xff]
        %v1215 = vld [vmem:[#allocation2 + $0xf2] sm:$0xff]
        %v1216 = vld [vmem:[#allocation2 + $0xfa] sm:$0xff]
        %v1217 = vld [vmem:[#allocation2 + $0x10a] sm:$0xff]
        %v1218 = vld [vmem:[#allocation2 + $0x112] sm:$0xff]
        %v1219 = vld [vmem:[#allocation2 + $0x122] sm:$0xff]
        %v1220 = vld [vmem:[#allocation2 + $0x12a] sm:$0xff]
        %v1221 = vld [vmem:[#allocation2 + $0x13a] sm:$0xff]
        %v1222 = vld [vmem:[#allocation2 + $0x142] sm:$0xff]
        %v1223 = vld [vmem:[#allocation2 + $0x152] sm:$0xff]
        %v1224 = vld [vmem:[#allocation2 + $0x15a] sm:$0xff]
        %v1225 = vld [vmem:[#allocation2 + $0x16a] sm:$0xff]
        %v1226 = vld [vmem:[#allocation2 + $0x172] sm:$0xff]
        %v1227 = vld [vmem:[%s1098] sm:$0xff]
        %v1228 = vld [vmem:[%s1098 + $0x8] sm:$0xff]
        %v1229 = vld [vmem:[%s1098 + $0x18] sm:$0xff]
        %v1230 = vld [vmem:[%s1098 + $0x20] sm:$0xff]
        %v1231 = vld [vmem:[%s1098 + $0x30] sm:$0xff]
        %v1232 = vld [vmem:[%s1098 + $0x38] sm:$0xff]
        %v1233 = vld [vmem:[%s1098 + $0x48] sm:$0xff]
        %v1234 = vld [vmem:[%s1098 + $0x50] sm:$0xff]
        %v1235 = vld [vmem:[%s1098 + $0x60] sm:$0xff]
        %v1236 = vld [vmem:[%s1098 + $0x68] sm:$0xff]
        %v1237 = vld [vmem:[%s1098 + $0x78] sm:$0xff]
        %v1238 = vld [vmem:[%s1098 + $0x80] sm:$0xff]
        %v1239 = vld [vmem:[%s1098 + $0x90] sm:$0xff]
        %v1240 = vld [vmem:[%s1098 + $0x98] sm:$0xff]
        %v1241 = vld [vmem:[%s1098 + $0xa8] sm:$0xff]
        %v1242 = vld [vmem:[%s1098 + $0xb0] sm:$0xff]
        %v1243 = vld [vmem:[%s1098 + $0xc0] sm:$0xff]
        %v1244 = vld [vmem:[%s1098 + $0xc8] sm:$0xff]
        %v1245 = vld [vmem:[%s1098 + $0xd8] sm:$0xff]
        %v1246 = vld [vmem:[%s1098 + $0xe0] sm:$0xff]
        %v1247 = vld [vmem:[%s1098 + $0xf0] sm:$0xff]
        %v1248 = vld [vmem:[%s1098 + $0xf8] sm:$0xff]
        %v1249 = vld [vmem:[%s1098 + $0x108] sm:$0xff]
        %v1250 = vld [vmem:[%s1098 + $0x110] sm:$0xff]
        %v1251 = vld [vmem:[%s1098 + $0x120] sm:$0xff]
        %v1252 = vld [vmem:[%s1098 + $0x128] sm:$0xff]
        %v1253 = vld [vmem:[%s1098 + $0x138] sm:$0xff]
        %v1254 = vld [vmem:[%s1098 + $0x140] sm:$0xff]
        %v1255 = vld [vmem:[%s1098 + $0x150] sm:$0xff]
        %v1256 = vld [vmem:[%s1098 + $0x158] sm:$0xff]
        %v1257 = vld [vmem:[%s1098 + $0x168] sm:$0xff]
        %v1258 = vld [vmem:[%s1098 + $0x170] sm:$0xff]
        %v1259 = vld [vmem:[%s1098 + $0x1] sm:$0xff]
        %v1260 = vld [vmem:[%s1098 + $0x9] sm:$0xff]
        %v1261 = vld [vmem:[%s1098 + $0x19] sm:$0xff]
        %v1262 = vld [vmem:[%s1098 + $0x21] sm:$0xff]
        %v1263 = vld [vmem:[%s1098 + $0x31] sm:$0xff]
        %v1264 = vld [vmem:[%s1098 + $0x39] sm:$0xff]
        %v1265 = vld [vmem:[%s1098 + $0x49] sm:$0xff]
        %v1266 = vld [vmem:[%s1098 + $0x51] sm:$0xff]
        %v1267 = vld [vmem:[%s1098 + $0x61] sm:$0xff]
        %v1268 = vld [vmem:[%s1098 + $0x69] sm:$0xff]
        %v1269 = vld [vmem:[%s1098 + $0x79] sm:$0xff]
        %v1270 = vld [vmem:[%s1098 + $0x81] sm:$0xff]
        %v1271 = vld [vmem:[%s1098 + $0x91] sm:$0xff]
        %v1272 = vld [vmem:[%s1098 + $0x99] sm:$0xff]
        %v1273 = vld [vmem:[%s1098 + $0xa9] sm:$0xff]
        %v1274 = vld [vmem:[%s1098 + $0xb1] sm:$0xff]
        %v1275 = vld [vmem:[%s1098 + $0xc1] sm:$0xff]
        %v1276 = vld [vmem:[%s1098 + $0xc9] sm:$0xff]
        %v1277 = vld [vmem:[%s1098 + $0xd9] sm:$0xff]
        %v1278 = vld [vmem:[%s1098 + $0xe1] sm:$0xff]
        %v1279 = vld [vmem:[%s1098 + $0xf1] sm:$0xff]
        %v1280 = vld [vmem:[%s1098 + $0xf9] sm:$0xff]
        %v1281 = vld [vmem:[%s1098 + $0x109] sm:$0xff]
        %v1282 = vld [vmem:[%s1098 + $0x111] sm:$0xff]
        %v1283 = vld [vmem:[%s1098 + $0x121] sm:$0xff]
        %v1284 = vld [vmem:[%s1098 + $0x129] sm:$0xff]
        %v1285 = vld [vmem:[%s1098 + $0x139] sm:$0xff]
        %v1286 = vld [vmem:[%s1098 + $0x141] sm:$0xff]
        %v1287 = vld [vmem:[%s1098 + $0x151] sm:$0xff]
        %v1288 = vld [vmem:[%s1098 + $0x159] sm:$0xff]
        %v1289 = vld [vmem:[%s1098 + $0x169] sm:$0xff]
        %v1290 = vld [vmem:[%s1098 + $0x171] sm:$0xff]
        %v1291 = vld [vmem:[%s1098 + $0x2] sm:$0xff]
        %v1292 = vld [vmem:[%s1098 + $0xa] sm:$0xff]
        %v1293 = vld [vmem:[%s1098 + $0x1a] sm:$0xff]
        %v1294 = vld [vmem:[%s1098 + $0x22] sm:$0xff]
        %v1295 = vld [vmem:[%s1098 + $0x32] sm:$0xff]
        %v1296 = vld [vmem:[%s1098 + $0x3a] sm:$0xff]
        %v1297 = vld [vmem:[%s1098 + $0x4a] sm:$0xff]
        %v1298 = vld [vmem:[%s1098 + $0x52] sm:$0xff]
        %v1299 = vld [vmem:[%s1098 + $0x62] sm:$0xff]
        %v1300 = vld [vmem:[%s1098 + $0x6a] sm:$0xff]
        %v1301 = vld [vmem:[%s1098 + $0x7a] sm:$0xff]
        %v1302 = vld [vmem:[%s1098 + $0x82] sm:$0xff]
        %v1303 = vld [vmem:[%s1098 + $0x92] sm:$0xff]
        %v1304 = vld [vmem:[%s1098 + $0x9a] sm:$0xff]
        %v1305 = vld [vmem:[%s1098 + $0xaa] sm:$0xff]
        %v1306 = vld [vmem:[%s1098 + $0xb2] sm:$0xff]
        %v1307 = vld [vmem:[%s1098 + $0xc2] sm:$0xff]
        %v1308 = vld [vmem:[%s1098 + $0xca] sm:$0xff]
        %v1309 = vld [vmem:[%s1098 + $0xda] sm:$0xff]
        %v1310 = vld [vmem:[%s1098 + $0xe2] sm:$0xff]
        %v1311 = vld [vmem:[%s1098 + $0xf2] sm:$0xff]
        %v1312 = vld [vmem:[%s1098 + $0xfa] sm:$0xff]
        %v1313 = vld [vmem:[%s1098 + $0x10a] sm:$0xff]
        %v1314 = vld [vmem:[%s1098 + $0x112] sm:$0xff]
        %v1315 = vld [vmem:[%s1098 + $0x122] sm:$0xff]
        %v1316 = vld [vmem:[%s1098 + $0x12a] sm:$0xff]
        %v1317 = vld [vmem:[%s1098 + $0x13a] sm:$0xff]
        %v1318 = vld [vmem:[%s1098 + $0x142] sm:$0xff]
        %v1319 = vld [vmem:[%s1098 + $0x152] sm:$0xff]
        %v1320 = vld [vmem:[%s1098 + $0x15a] sm:$0xff]
        %v1321 = vld [vmem:[%s1098 + $0x16a] sm:$0xff]
        %v1322 = vld [vmem:[%s1098 + $0x172] sm:$0xff]
        %s1323 = scalar_lea.vmem [#allocation2], 48
        %v1324 = vld [vmem:[%s1323] sm:$0xff]
        %v1325 = vld [vmem:[%s1323 + $0x8] sm:$0xff]
        %v1326 = vld [vmem:[%s1323 + $0x18] sm:$0xff]
        %v1327 = vld [vmem:[%s1323 + $0x20] sm:$0xff]
        %v1328 = vld [vmem:[%s1323 + $0x30] sm:$0xff]
        %v1329 = vld [vmem:[%s1323 + $0x38] sm:$0xff]
        %v1330 = vld [vmem:[%s1323 + $0x48] sm:$0xff]
        %v1331 = vld [vmem:[%s1323 + $0x50] sm:$0xff]
        %v1332 = vld [vmem:[%s1323 + $0x60] sm:$0xff]
        %v1333 = vld [vmem:[%s1323 + $0x68] sm:$0xff]
        %v1334 = vld [vmem:[%s1323 + $0x78] sm:$0xff]
        %v1335 = vld [vmem:[%s1323 + $0x80] sm:$0xff]
        %v1336 = vld [vmem:[%s1323 + $0x90] sm:$0xff]
        %v1337 = vld [vmem:[%s1323 + $0x98] sm:$0xff]
        %v1338 = vld [vmem:[%s1323 + $0xa8] sm:$0xff]
        %v1339 = vld [vmem:[%s1323 + $0xb0] sm:$0xff]
        %v1340 = vld [vmem:[%s1323 + $0xc0] sm:$0xff]
        %v1341 = vld [vmem:[%s1323 + $0xc8] sm:$0xff]
        %v1342 = vld [vmem:[%s1323 + $0xd8] sm:$0xff]
        %v1343 = vld [vmem:[%s1323 + $0xe0] sm:$0xff]
        %v1344 = vld [vmem:[%s1323 + $0xf0] sm:$0xff]
        %v1345 = vld [vmem:[%s1323 + $0xf8] sm:$0xff]
        %v1346 = vld [vmem:[%s1323 + $0x108] sm:$0xff]
        %v1347 = vld [vmem:[%s1323 + $0x110] sm:$0xff]
        %v1348 = vld [vmem:[%s1323 + $0x120] sm:$0xff]
        %v1349 = vld [vmem:[%s1323 + $0x128] sm:$0xff]
        %v1350 = vld [vmem:[%s1323 + $0x138] sm:$0xff]
        %v1351 = vld [vmem:[%s1323 + $0x140] sm:$0xff]
        %v1352 = vld [vmem:[%s1323 + $0x150] sm:$0xff]
        %v1353 = vld [vmem:[%s1323 + $0x158] sm:$0xff]
        %v1354 = vld [vmem:[%s1323 + $0x168] sm:$0xff]
        %v1355 = vld [vmem:[%s1323 + $0x170] sm:$0xff]
        %v1356 = vld [vmem:[%s1323 + $0x1] sm:$0xff]
        %v1357 = vld [vmem:[%s1323 + $0x9] sm:$0xff]
        %v1358 = vld [vmem:[%s1323 + $0x19] sm:$0xff]
        %v1359 = vld [vmem:[%s1323 + $0x21] sm:$0xff]
        %v1360 = vld [vmem:[%s1323 + $0x31] sm:$0xff]
        %v1361 = vld [vmem:[%s1323 + $0x39] sm:$0xff]
        %v1362 = vld [vmem:[%s1323 + $0x49] sm:$0xff]
        %v1363 = vld [vmem:[%s1323 + $0x51] sm:$0xff]
        %v1364 = vld [vmem:[%s1323 + $0x61] sm:$0xff]
        %v1365 = vld [vmem:[%s1323 + $0x69] sm:$0xff]
        %v1366 = vld [vmem:[%s1323 + $0x79] sm:$0xff]
        %v1367 = vld [vmem:[%s1323 + $0x81] sm:$0xff]
        %v1368 = vld [vmem:[%s1323 + $0x91] sm:$0xff]
        %v1369 = vld [vmem:[%s1323 + $0x99] sm:$0xff]
        %v1370 = vld [vmem:[%s1323 + $0xa9] sm:$0xff]
        %v1371 = vld [vmem:[%s1323 + $0xb1] sm:$0xff]
        %v1372 = vld [vmem:[%s1323 + $0xc1] sm:$0xff]
        %v1373 = vld [vmem:[%s1323 + $0xc9] sm:$0xff]
        %v1374 = vld [vmem:[%s1323 + $0xd9] sm:$0xff]
        %v1375 = vld [vmem:[%s1323 + $0xe1] sm:$0xff]
        %v1376 = vld [vmem:[%s1323 + $0xf1] sm:$0xff]
        %v1377 = vld [vmem:[%s1323 + $0xf9] sm:$0xff]
        %v1378 = vld [vmem:[%s1323 + $0x109] sm:$0xff]
        %v1379 = vld [vmem:[%s1323 + $0x111] sm:$0xff]
        %v1380 = vld [vmem:[%s1323 + $0x121] sm:$0xff]
        %v1381 = vld [vmem:[%s1323 + $0x129] sm:$0xff]
        %v1382 = vld [vmem:[%s1323 + $0x139] sm:$0xff]
        %v1383 = vld [vmem:[%s1323 + $0x141] sm:$0xff]
        %v1384 = vld [vmem:[%s1323 + $0x151] sm:$0xff]
        %v1385 = vld [vmem:[%s1323 + $0x159] sm:$0xff]
        %v1386 = vld [vmem:[%s1323 + $0x169] sm:$0xff]
        %v1387 = vld [vmem:[%s1323 + $0x171] sm:$0xff]
        %v1388 = vld [vmem:[%s1323 + $0x2] sm:$0xff]
        %v1389 = vld [vmem:[%s1323 + $0xa] sm:$0xff]
        %v1390 = vld [vmem:[%s1323 + $0x1a] sm:$0xff]
        %v1391 = vld [vmem:[%s1323 + $0x22] sm:$0xff]
        %v1392 = vld [vmem:[%s1323 + $0x32] sm:$0xff]
        %v1393 = vld [vmem:[%s1323 + $0x3a] sm:$0xff]
        %v1394 = vld [vmem:[%s1323 + $0x4a] sm:$0xff]
        %v1395 = vld [vmem:[%s1323 + $0x52] sm:$0xff]
        %v1396 = vld [vmem:[%s1323 + $0x62] sm:$0xff]
        %v1397 = vld [vmem:[%s1323 + $0x6a] sm:$0xff]
        %v1398 = vld [vmem:[%s1323 + $0x7a] sm:$0xff]
        %v1399 = vld [vmem:[%s1323 + $0x82] sm:$0xff]
        %v1400 = vld [vmem:[%s1323 + $0x92] sm:$0xff]
        %v1401 = vld [vmem:[%s1323 + $0x9a] sm:$0xff]
        %v1402 = vld [vmem:[%s1323 + $0xaa] sm:$0xff]
        %v1403 = vld [vmem:[%s1323 + $0xb2] sm:$0xff]
        %v1404 = vld [vmem:[%s1323 + $0xc2] sm:$0xff]
        %v1405 = vld [vmem:[%s1323 + $0xca] sm:$0xff]
        %v1406 = vld [vmem:[%s1323 + $0xda] sm:$0xff]
        %v1407 = vld [vmem:[%s1323 + $0xe2] sm:$0xff]
        %v1408 = vld [vmem:[%s1323 + $0xf2] sm:$0xff]
        %v1409 = vld [vmem:[%s1323 + $0xfa] sm:$0xff]
        %v1410 = vld [vmem:[%s1323 + $0x10a] sm:$0xff]
        %v1411 = vld [vmem:[%s1323 + $0x112] sm:$0xff]
        %v1412 = vld [vmem:[%s1323 + $0x122] sm:$0xff]
        %v1413 = vld [vmem:[%s1323 + $0x12a] sm:$0xff]
        %v1414 = vld [vmem:[%s1323 + $0x13a] sm:$0xff]
        %v1415 = vld [vmem:[%s1323 + $0x142] sm:$0xff]
        %v1416 = vld [vmem:[%s1323 + $0x152] sm:$0xff]
        %v1417 = vld [vmem:[%s1323 + $0x15a] sm:$0xff]
        %v1418 = vld [vmem:[%s1323 + $0x16a] sm:$0xff]
        %v1419 = vld [vmem:[%s1323 + $0x172] sm:$0xff]
        %1452 = vrot.lane.b32.xlu0 %v1163, 8
        %v1453 = vpop.permute.xlu0 %1452
        %1454 = vrot.lane.b32.xlu0 %v1164, 8
        %v1455 = vpop.permute.xlu0 %1454
        %1456 = vrot.lane.b32.xlu0 %v1165, 8
        %v1457 = vpop.permute.xlu0 %1456
        %1458 = vrot.lane.b32.xlu0 %v1166, 8
        %v1459 = vpop.permute.xlu0 %1458
        %1460 = vrot.lane.b32.xlu0 %v1167, 8
        %v1461 = vpop.permute.xlu0 %1460
        %1462 = vrot.lane.b32.xlu0 %v1168, 8
        %v1463 = vpop.permute.xlu0 %1462
        %1464 = vrot.lane.b32.xlu0 %v1169, 8
        %v1465 = vpop.permute.xlu0 %1464
        %1466 = vrot.lane.b32.xlu0 %v1170, 8
        %v1467 = vpop.permute.xlu0 %1466
        %1468 = vrot.lane.b32.xlu0 %v1171, 8
        %v1469 = vpop.permute.xlu0 %1468
        %1470 = vrot.lane.b32.xlu0 %v1172, 8
        %v1471 = vpop.permute.xlu0 %1470
        %1472 = vrot.lane.b32.xlu0 %v1173, 8
        %v1473 = vpop.permute.xlu0 %1472
        %1474 = vrot.lane.b32.xlu0 %v1174, 8
        %v1475 = vpop.permute.xlu0 %1474
        %1476 = vrot.lane.b32.xlu0 %v1175, 8
        %v1477 = vpop.permute.xlu0 %1476
        %1478 = vrot.lane.b32.xlu0 %v1176, 8
        %v1479 = vpop.permute.xlu0 %1478
        %1480 = vrot.lane.b32.xlu0 %v1177, 8
        %v1481 = vpop.permute.xlu0 %1480
        %1482 = vrot.lane.b32.xlu0 %v1178, 8
        %v1483 = vpop.permute.xlu0 %1482
        %1484 = vrot.lane.b32.xlu0 %v1179, 8
        %v1485 = vpop.permute.xlu0 %1484
        %1486 = vrot.lane.b32.xlu0 %v1180, 8
        %v1487 = vpop.permute.xlu0 %1486
        %1488 = vrot.lane.b32.xlu0 %v1181, 8
        %v1489 = vpop.permute.xlu0 %1488
        %1490 = vrot.lane.b32.xlu0 %v1182, 8
        %v1491 = vpop.permute.xlu0 %1490
        %1492 = vrot.lane.b32.xlu0 %v1183, 8
        %v1493 = vpop.permute.xlu0 %1492
        %1494 = vrot.lane.b32.xlu0 %v1184, 8
        %v1495 = vpop.permute.xlu0 %1494
        %1496 = vrot.lane.b32.xlu0 %v1185, 8
        %v1497 = vpop.permute.xlu0 %1496
        %1498 = vrot.lane.b32.xlu0 %v1186, 8
        %v1499 = vpop.permute.xlu0 %1498
        %1500 = vrot.lane.b32.xlu0 %v1187, 8
        %v1501 = vpop.permute.xlu0 %1500
        %1502 = vrot.lane.b32.xlu0 %v1188, 8
        %v1503 = vpop.permute.xlu0 %1502
        %1504 = vrot.lane.b32.xlu0 %v1189, 8
        %v1505 = vpop.permute.xlu0 %1504
        %1506 = vrot.lane.b32.xlu0 %v1190, 8
        %v1507 = vpop.permute.xlu0 %1506
        %1508 = vrot.lane.b32.xlu0 %v1191, 8
        %v1509 = vpop.permute.xlu0 %1508
        %1510 = vrot.lane.b32.xlu0 %v1192, 8
        %v1511 = vpop.permute.xlu0 %1510
        %1512 = vrot.lane.b32.xlu0 %v1193, 8
        %v1513 = vpop.permute.xlu0 %1512
        %1514 = vrot.lane.b32.xlu0 %v1194, 8
        %v1515 = vpop.permute.xlu0 %1514
        %1580 = vrot.lane.b32.xlu0 %v1195, 16
        %v1581 = vpop.permute.xlu0 %1580
        %1582 = vrot.lane.b32.xlu0 %v1196, 16
        %v1583 = vpop.permute.xlu0 %1582
        %1584 = vrot.lane.b32.xlu0 %v1197, 16
        %v1585 = vpop.permute.xlu0 %1584
        %1586 = vrot.lane.b32.xlu0 %v1198, 16
        %v1587 = vpop.permute.xlu0 %1586
        %1588 = vrot.lane.b32.xlu0 %v1199, 16
        %v1589 = vpop.permute.xlu0 %1588
        %1590 = vrot.lane.b32.xlu0 %v1200, 16
        %v1591 = vpop.permute.xlu0 %1590
        %1592 = vrot.lane.b32.xlu0 %v1201, 16
        %v1593 = vpop.permute.xlu0 %1592
        %1594 = vrot.lane.b32.xlu0 %v1202, 16
        %v1595 = vpop.permute.xlu0 %1594
        %1596 = vrot.lane.b32.xlu0 %v1203, 16
        %v1597 = vpop.permute.xlu0 %1596
        %1598 = vrot.lane.b32.xlu0 %v1204, 16
        %v1599 = vpop.permute.xlu0 %1598
        %1600 = vrot.lane.b32.xlu0 %v1205, 16
        %v1601 = vpop.permute.xlu0 %1600
        %1602 = vrot.lane.b32.xlu0 %v1206, 16
        %v1603 = vpop.permute.xlu0 %1602
        %1604 = vrot.lane.b32.xlu0 %v1207, 16
        %v1605 = vpop.permute.xlu0 %1604
        %1606 = vrot.lane.b32.xlu0 %v1208, 16
        %v1607 = vpop.permute.xlu0 %1606
        %1608 = vrot.lane.b32.xlu0 %v1209, 16
        %v1609 = vpop.permute.xlu0 %1608
        %1610 = vrot.lane.b32.xlu0 %v1210, 16
        %v1611 = vpop.permute.xlu0 %1610
        %1612 = vrot.lane.b32.xlu0 %v1211, 16
        %v1613 = vpop.permute.xlu0 %1612
        %1614 = vrot.lane.b32.xlu0 %v1212, 16
        %v1615 = vpop.permute.xlu0 %1614
        %1616 = vrot.lane.b32.xlu0 %v1213, 16
        %v1617 = vpop.permute.xlu0 %1616
        %1618 = vrot.lane.b32.xlu0 %v1214, 16
        %v1619 = vpop.permute.xlu0 %1618
        %1620 = vrot.lane.b32.xlu0 %v1215, 16
        %v1621 = vpop.permute.xlu0 %1620
        %1622 = vrot.lane.b32.xlu0 %v1216, 16
        %v1623 = vpop.permute.xlu0 %1622
        %1624 = vrot.lane.b32.xlu0 %v1217, 16
        %v1625 = vpop.permute.xlu0 %1624
        %1626 = vrot.lane.b32.xlu0 %v1218, 16
        %v1627 = vpop.permute.xlu0 %1626
        %1628 = vrot.lane.b32.xlu0 %v1219, 16
        %v1629 = vpop.permute.xlu0 %1628
        %1630 = vrot.lane.b32.xlu0 %v1220, 16
        %v1631 = vpop.permute.xlu0 %1630
        %1632 = vrot.lane.b32.xlu0 %v1221, 16
        %v1633 = vpop.permute.xlu0 %1632
        %1634 = vrot.lane.b32.xlu0 %v1222, 16
        %v1635 = vpop.permute.xlu0 %1634
        %1636 = vrot.lane.b32.xlu0 %v1223, 16
        %v1637 = vpop.permute.xlu0 %1636
        %1638 = vrot.lane.b32.xlu0 %v1224, 16
        %v1639 = vpop.permute.xlu0 %1638
        %1640 = vrot.lane.b32.xlu0 %v1225, 16
        %v1641 = vpop.permute.xlu0 %1640
        %1642 = vrot.lane.b32.xlu0 %v1226, 16
        %v1643 = vpop.permute.xlu0 %1642
        %1708 = vrot.lane.b32.xlu0 %v1227, 24
        %v1709 = vpop.permute.xlu0 %1708
        %1710 = vrot.lane.b32.xlu0 %v1228, 24
        %v1711 = vpop.permute.xlu0 %1710
        %1712 = vrot.lane.b32.xlu0 %v1229, 24
        %v1713 = vpop.permute.xlu0 %1712
        %1714 = vrot.lane.b32.xlu0 %v1230, 24
        %v1715 = vpop.permute.xlu0 %1714
        %1716 = vrot.lane.b32.xlu0 %v1231, 24
        %v1717 = vpop.permute.xlu0 %1716
        %1718 = vrot.lane.b32.xlu0 %v1232, 24
        %v1719 = vpop.permute.xlu0 %1718
        %1720 = vrot.lane.b32.xlu0 %v1233, 24
        %v1721 = vpop.permute.xlu0 %1720
        %1722 = vrot.lane.b32.xlu0 %v1234, 24
        %v1723 = vpop.permute.xlu0 %1722
        %1724 = vrot.lane.b32.xlu0 %v1235, 24
        %v1725 = vpop.permute.xlu0 %1724
        %1726 = vrot.lane.b32.xlu0 %v1236, 24
        %v1727 = vpop.permute.xlu0 %1726
        %1728 = vrot.lane.b32.xlu0 %v1237, 24
        %v1729 = vpop.permute.xlu0 %1728
        %1730 = vrot.lane.b32.xlu0 %v1238, 24
        %v1731 = vpop.permute.xlu0 %1730
        %1732 = vrot.lane.b32.xlu0 %v1239, 24
        %v1733 = vpop.permute.xlu0 %1732
        %1734 = vrot.lane.b32.xlu0 %v1240, 24
        %v1735 = vpop.permute.xlu0 %1734
        %1736 = vrot.lane.b32.xlu0 %v1241, 24
        %v1737 = vpop.permute.xlu0 %1736
        %1738 = vrot.lane.b32.xlu0 %v1242, 24
        %v1739 = vpop.permute.xlu0 %1738
        %1740 = vrot.lane.b32.xlu0 %v1243, 24
        %v1741 = vpop.permute.xlu0 %1740
        %1742 = vrot.lane.b32.xlu0 %v1244, 24
        %v1743 = vpop.permute.xlu0 %1742
        %1744 = vrot.lane.b32.xlu0 %v1245, 24
        %v1745 = vpop.permute.xlu0 %1744
        %1746 = vrot.lane.b32.xlu0 %v1246, 24
        %v1747 = vpop.permute.xlu0 %1746
        %1748 = vrot.lane.b32.xlu0 %v1247, 24
        %v1749 = vpop.permute.xlu0 %1748
        %1750 = vrot.lane.b32.xlu0 %v1248, 24
        %v1751 = vpop.permute.xlu0 %1750
        %1752 = vrot.lane.b32.xlu0 %v1249, 24
        %v1753 = vpop.permute.xlu0 %1752
        %1754 = vrot.lane.b32.xlu0 %v1250, 24
        %v1755 = vpop.permute.xlu0 %1754
        %1756 = vrot.lane.b32.xlu0 %v1251, 24
        %v1757 = vpop.permute.xlu0 %1756
        %1758 = vrot.lane.b32.xlu0 %v1252, 24
        %v1759 = vpop.permute.xlu0 %1758
        %1760 = vrot.lane.b32.xlu0 %v1253, 24
        %v1761 = vpop.permute.xlu0 %1760
        %1762 = vrot.lane.b32.xlu0 %v1254, 24
        %v1763 = vpop.permute.xlu0 %1762
        %1764 = vrot.lane.b32.xlu0 %v1255, 24
        %v1765 = vpop.permute.xlu0 %1764
        %1766 = vrot.lane.b32.xlu0 %v1256, 24
        %v1767 = vpop.permute.xlu0 %1766
        %1768 = vrot.lane.b32.xlu0 %v1257, 24
        %v1769 = vpop.permute.xlu0 %1768
        %1770 = vrot.lane.b32.xlu0 %v1258, 24
        %v1771 = vpop.permute.xlu0 %1770
        %1836 = vrot.lane.b32.xlu0 %v1259, 32
        %v1837 = vpop.permute.xlu0 %1836
        %1838 = vrot.lane.b32.xlu0 %v1260, 32
        %v1839 = vpop.permute.xlu0 %1838
        %1840 = vrot.lane.b32.xlu0 %v1261, 32
        %v1841 = vpop.permute.xlu0 %1840
        %1842 = vrot.lane.b32.xlu0 %v1262, 32
        %v1843 = vpop.permute.xlu0 %1842
        %1844 = vrot.lane.b32.xlu0 %v1263, 32
        %v1845 = vpop.permute.xlu0 %1844
        %1846 = vrot.lane.b32.xlu0 %v1264, 32
        %v1847 = vpop.permute.xlu0 %1846
        %1848 = vrot.lane.b32.xlu0 %v1265, 32
        %v1849 = vpop.permute.xlu0 %1848
        %1850 = vrot.lane.b32.xlu0 %v1266, 32
        %v1851 = vpop.permute.xlu0 %1850
        %1852 = vrot.lane.b32.xlu0 %v1267, 32
        %v1853 = vpop.permute.xlu0 %1852
        %1854 = vrot.lane.b32.xlu0 %v1268, 32
        %v1855 = vpop.permute.xlu0 %1854
        %1856 = vrot.lane.b32.xlu0 %v1269, 32
        %v1857 = vpop.permute.xlu0 %1856
        %1858 = vrot.lane.b32.xlu0 %v1270, 32
        %v1859 = vpop.permute.xlu0 %1858
        %1860 = vrot.lane.b32.xlu0 %v1271, 32
        %v1861 = vpop.permute.xlu0 %1860
        %1862 = vrot.lane.b32.xlu0 %v1272, 32
        %v1863 = vpop.permute.xlu0 %1862
        %1864 = vrot.lane.b32.xlu0 %v1273, 32
        %v1865 = vpop.permute.xlu0 %1864
        %1866 = vrot.lane.b32.xlu0 %v1274, 32
        %v1867 = vpop.permute.xlu0 %1866
        %1868 = vrot.lane.b32.xlu0 %v1275, 32
        %v1869 = vpop.permute.xlu0 %1868
        %1870 = vrot.lane.b32.xlu0 %v1276, 32
        %v1871 = vpop.permute.xlu0 %1870
        %1872 = vrot.lane.b32.xlu0 %v1277, 32
        %v1873 = vpop.permute.xlu0 %1872
        %1874 = vrot.lane.b32.xlu0 %v1278, 32
        %v1875 = vpop.permute.xlu0 %1874
        %1876 = vrot.lane.b32.xlu0 %v1279, 32
        %v1877 = vpop.permute.xlu0 %1876
        %1878 = vrot.lane.b32.xlu0 %v1280, 32
        %v1879 = vpop.permute.xlu0 %1878
        %1880 = vrot.lane.b32.xlu0 %v1281, 32
        %v1881 = vpop.permute.xlu0 %1880
        %1882 = vrot.lane.b32.xlu0 %v1282, 32
        %v1883 = vpop.permute.xlu0 %1882
        %1884 = vrot.lane.b32.xlu0 %v1283, 32
        %v1885 = vpop.permute.xlu0 %1884
        %1886 = vrot.lane.b32.xlu0 %v1284, 32
        %v1887 = vpop.permute.xlu0 %1886
        %1888 = vrot.lane.b32.xlu0 %v1285, 32
        %v1889 = vpop.permute.xlu0 %1888
        %1890 = vrot.lane.b32.xlu0 %v1286, 32
        %v1891 = vpop.permute.xlu0 %1890
        %1892 = vrot.lane.b32.xlu0 %v1287, 32
        %v1893 = vpop.permute.xlu0 %1892
        %1894 = vrot.lane.b32.xlu0 %v1288, 32
        %v1895 = vpop.permute.xlu0 %1894
        %1896 = vrot.lane.b32.xlu0 %v1289, 32
        %v1897 = vpop.permute.xlu0 %1896
        %1898 = vrot.lane.b32.xlu0 %v1290, 32
        %v1899 = vpop.permute.xlu0 %1898
        %1964 = vrot.lane.b32.xlu0 %v1291, 40
        %v1965 = vpop.permute.xlu0 %1964
        %1966 = vrot.lane.b32.xlu0 %v1292, 40
        %v1967 = vpop.permute.xlu0 %1966
        %1968 = vrot.lane.b32.xlu0 %v1293, 40
        %v1969 = vpop.permute.xlu0 %1968
        %1970 = vrot.lane.b32.xlu0 %v1294, 40
        %v1971 = vpop.permute.xlu0 %1970
        %1972 = vrot.lane.b32.xlu0 %v1295, 40
        %v1973 = vpop.permute.xlu0 %1972
        %1974 = vrot.lane.b32.xlu0 %v1296, 40
        %v1975 = vpop.permute.xlu0 %1974
        %1976 = vrot.lane.b32.xlu0 %v1297, 40
        %v1977 = vpop.permute.xlu0 %1976
        %1978 = vrot.lane.b32.xlu0 %v1298, 40
        %v1979 = vpop.permute.xlu0 %1978
        %1980 = vrot.lane.b32.xlu0 %v1299, 40
        %v1981 = vpop.permute.xlu0 %1980
        %1982 = vrot.lane.b32.xlu0 %v1300, 40
        %v1983 = vpop.permute.xlu0 %1982
        %1984 = vrot.lane.b32.xlu0 %v1301, 40
        %v1985 = vpop.permute.xlu0 %1984
        %1986 = vrot.lane.b32.xlu0 %v1302, 40
        %v1987 = vpop.permute.xlu0 %1986
        %1988 = vrot.lane.b32.xlu0 %v1303, 40
        %v1989 = vpop.permute.xlu0 %1988
        %1990 = vrot.lane.b32.xlu0 %v1304, 40
        %v1991 = vpop.permute.xlu0 %1990
        %1992 = vrot.lane.b32.xlu0 %v1305, 40
        %v1993 = vpop.permute.xlu0 %1992
        %1994 = vrot.lane.b32.xlu0 %v1306, 40
        %v1995 = vpop.permute.xlu0 %1994
        %1996 = vrot.lane.b32.xlu0 %v1307, 40
        %v1997 = vpop.permute.xlu0 %1996
        %1998 = vrot.lane.b32.xlu0 %v1308, 40
        %v1999 = vpop.permute.xlu0 %1998
        %2000 = vrot.lane.b32.xlu0 %v1309, 40
        %v2001 = vpop.permute.xlu0 %2000
        %2002 = vrot.lane.b32.xlu0 %v1310, 40
        %v2003 = vpop.permute.xlu0 %2002
        %2004 = vrot.lane.b32.xlu0 %v1311, 40
        %v2005 = vpop.permute.xlu0 %2004
        %2006 = vrot.lane.b32.xlu0 %v1312, 40
        %v2007 = vpop.permute.xlu0 %2006
        %2008 = vrot.lane.b32.xlu0 %v1313, 40
        %v2009 = vpop.permute.xlu0 %2008
        %2010 = vrot.lane.b32.xlu0 %v1314, 40
        %v2011 = vpop.permute.xlu0 %2010
        %2012 = vrot.lane.b32.xlu0 %v1315, 40
        %v2013 = vpop.permute.xlu0 %2012
        %2014 = vrot.lane.b32.xlu0 %v1316, 40
        %v2015 = vpop.permute.xlu0 %2014
        %2016 = vrot.lane.b32.xlu0 %v1317, 40
        %v2017 = vpop.permute.xlu0 %2016
        %2018 = vrot.lane.b32.xlu0 %v1318, 40
        %v2019 = vpop.permute.xlu0 %2018
        %2020 = vrot.lane.b32.xlu0 %v1319, 40
        %v2021 = vpop.permute.xlu0 %2020
        %2022 = vrot.lane.b32.xlu0 %v1320, 40
        %v2023 = vpop.permute.xlu0 %2022
        %2024 = vrot.lane.b32.xlu0 %v1321, 40
        %v2025 = vpop.permute.xlu0 %2024
        %2026 = vrot.lane.b32.xlu0 %v1322, 40
        %v2027 = vpop.permute.xlu0 %2026
        %2092 = vrot.lane.b32.xlu0 %v1324, 48
        %v2093 = vpop.permute.xlu0 %2092
        %2094 = vrot.lane.b32.xlu0 %v1325, 48
        %v2095 = vpop.permute.xlu0 %2094
        %2096 = vrot.lane.b32.xlu0 %v1326, 48
        %v2097 = vpop.permute.xlu0 %2096
        %2098 = vrot.lane.b32.xlu0 %v1327, 48
        %v2099 = vpop.permute.xlu0 %2098
        %2100 = vrot.lane.b32.xlu0 %v1328, 48
        %v2101 = vpop.permute.xlu0 %2100
        %2102 = vrot.lane.b32.xlu0 %v1329, 48
        %v2103 = vpop.permute.xlu0 %2102
        %2104 = vrot.lane.b32.xlu0 %v1330, 48
        %v2105 = vpop.permute.xlu0 %2104
        %2106 = vrot.lane.b32.xlu0 %v1331, 48
        %v2107 = vpop.permute.xlu0 %2106
        %2108 = vrot.lane.b32.xlu0 %v1332, 48
        %v2109 = vpop.permute.xlu0 %2108
        %2110 = vrot.lane.b32.xlu0 %v1333, 48
        %v2111 = vpop.permute.xlu0 %2110
        %2112 = vrot.lane.b32.xlu0 %v1334, 48
        %v2113 = vpop.permute.xlu0 %2112
        %2114 = vrot.lane.b32.xlu0 %v1335, 48
        %v2115 = vpop.permute.xlu0 %2114
        %2116 = vrot.lane.b32.xlu0 %v1336, 48
        %v2117 = vpop.permute.xlu0 %2116
        %2118 = vrot.lane.b32.xlu0 %v1337, 48
        %v2119 = vpop.permute.xlu0 %2118
        %2120 = vrot.lane.b32.xlu0 %v1338, 48
        %v2121 = vpop.permute.xlu0 %2120
        %2122 = vrot.lane.b32.xlu0 %v1339, 48
        %v2123 = vpop.permute.xlu0 %2122
        %2124 = vrot.lane.b32.xlu0 %v1340, 48
        %v2125 = vpop.permute.xlu0 %2124
        %2126 = vrot.lane.b32.xlu0 %v1341, 48
        %v2127 = vpop.permute.xlu0 %2126
        %2128 = vrot.lane.b32.xlu0 %v1342, 48
        %v2129 = vpop.permute.xlu0 %2128
        %2130 = vrot.lane.b32.xlu0 %v1343, 48
        %v2131 = vpop.permute.xlu0 %2130
        %2132 = vrot.lane.b32.xlu0 %v1344, 48
        %v2133 = vpop.permute.xlu0 %2132
        %2134 = vrot.lane.b32.xlu0 %v1345, 48
        %v2135 = vpop.permute.xlu0 %2134
        %2136 = vrot.lane.b32.xlu0 %v1346, 48
        %v2137 = vpop.permute.xlu0 %2136
        %2138 = vrot.lane.b32.xlu0 %v1347, 48
        %v2139 = vpop.permute.xlu0 %2138
        %2140 = vrot.lane.b32.xlu0 %v1348, 48
        %v2141 = vpop.permute.xlu0 %2140
        %2142 = vrot.lane.b32.xlu0 %v1349, 48
        %v2143 = vpop.permute.xlu0 %2142
        %2144 = vrot.lane.b32.xlu0 %v1350, 48
        %v2145 = vpop.permute.xlu0 %2144
        %2146 = vrot.lane.b32.xlu0 %v1351, 48
        %v2147 = vpop.permute.xlu0 %2146
        %2148 = vrot.lane.b32.xlu0 %v1352, 48
        %v2149 = vpop.permute.xlu0 %2148
        %2150 = vrot.lane.b32.xlu0 %v1353, 48
        %v2151 = vpop.permute.xlu0 %2150
        %2152 = vrot.lane.b32.xlu0 %v1354, 48
        %v2153 = vpop.permute.xlu0 %2152
        %2154 = vrot.lane.b32.xlu0 %v1355, 48
        %v2155 = vpop.permute.xlu0 %2154
        %2220 = vrot.lane.b32.xlu0 %v1356, 56
        %v2221 = vpop.permute.xlu0 %2220
        %2222 = vrot.lane.b32.xlu0 %v1357, 56
        %v2223 = vpop.permute.xlu0 %2222
        %2224 = vrot.lane.b32.xlu0 %v1358, 56
        %v2225 = vpop.permute.xlu0 %2224
        %2226 = vrot.lane.b32.xlu0 %v1359, 56
        %v2227 = vpop.permute.xlu0 %2226
        %2228 = vrot.lane.b32.xlu0 %v1360, 56
        %v2229 = vpop.permute.xlu0 %2228
        %2230 = vrot.lane.b32.xlu0 %v1361, 56
        %v2231 = vpop.permute.xlu0 %2230
        %2232 = vrot.lane.b32.xlu0 %v1362, 56
        %v2233 = vpop.permute.xlu0 %2232
        %2234 = vrot.lane.b32.xlu0 %v1363, 56
        %v2235 = vpop.permute.xlu0 %2234
        %2236 = vrot.lane.b32.xlu0 %v1364, 56
        %v2237 = vpop.permute.xlu0 %2236
        %2238 = vrot.lane.b32.xlu0 %v1365, 56
        %v2239 = vpop.permute.xlu0 %2238
        %2240 = vrot.lane.b32.xlu0 %v1366, 56
        %v2241 = vpop.permute.xlu0 %2240
        %2242 = vrot.lane.b32.xlu0 %v1367, 56
        %v2243 = vpop.permute.xlu0 %2242
        %2244 = vrot.lane.b32.xlu0 %v1368, 56
        %v2245 = vpop.permute.xlu0 %2244
        %2246 = vrot.lane.b32.xlu0 %v1369, 56
        %v2247 = vpop.permute.xlu0 %2246
        %2248 = vrot.lane.b32.xlu0 %v1370, 56
        %v2249 = vpop.permute.xlu0 %2248
        %2250 = vrot.lane.b32.xlu0 %v1371, 56
        %v2251 = vpop.permute.xlu0 %2250
        %2252 = vrot.lane.b32.xlu0 %v1372, 56
        %v2253 = vpop.permute.xlu0 %2252
        %2254 = vrot.lane.b32.xlu0 %v1373, 56
        %v2255 = vpop.permute.xlu0 %2254
        %2256 = vrot.lane.b32.xlu0 %v1374, 56
        %v2257 = vpop.permute.xlu0 %2256
        %2258 = vrot.lane.b32.xlu0 %v1375, 56
        %v2259 = vpop.permute.xlu0 %2258
        %2260 = vrot.lane.b32.xlu0 %v1376, 56
        %v2261 = vpop.permute.xlu0 %2260
        %2262 = vrot.lane.b32.xlu0 %v1377, 56
        %v2263 = vpop.permute.xlu0 %2262
        %2264 = vrot.lane.b32.xlu0 %v1378, 56
        %v2265 = vpop.permute.xlu0 %2264
        %2266 = vrot.lane.b32.xlu0 %v1379, 56
        %v2267 = vpop.permute.xlu0 %2266
        %2268 = vrot.lane.b32.xlu0 %v1380, 56
        %v2269 = vpop.permute.xlu0 %2268
        %2270 = vrot.lane.b32.xlu0 %v1381, 56
        %v2271 = vpop.permute.xlu0 %2270
        %2272 = vrot.lane.b32.xlu0 %v1382, 56
        %v2273 = vpop.permute.xlu0 %2272
        %2274 = vrot.lane.b32.xlu0 %v1383, 56
        %v2275 = vpop.permute.xlu0 %2274
        %2276 = vrot.lane.b32.xlu0 %v1384, 56
        %v2277 = vpop.permute.xlu0 %2276
        %2278 = vrot.lane.b32.xlu0 %v1385, 56
        %v2279 = vpop.permute.xlu0 %2278
        %2280 = vrot.lane.b32.xlu0 %v1386, 56
        %v2281 = vpop.permute.xlu0 %2280
        %2282 = vrot.lane.b32.xlu0 %v1387, 56
        %v2283 = vpop.permute.xlu0 %2282
        %2348 = vrot.lane.b32.xlu0 %v1388, 64
        %v2349 = vpop.permute.xlu0 %2348
        %2350 = vrot.lane.b32.xlu0 %v1389, 64
        %v2351 = vpop.permute.xlu0 %2350
        %2352 = vrot.lane.b32.xlu0 %v1390, 64
        %v2353 = vpop.permute.xlu0 %2352
        %2354 = vrot.lane.b32.xlu0 %v1391, 64
        %v2355 = vpop.permute.xlu0 %2354
        %2356 = vrot.lane.b32.xlu0 %v1392, 64
        %v2357 = vpop.permute.xlu0 %2356
        %2358 = vrot.lane.b32.xlu0 %v1393, 64
        %v2359 = vpop.permute.xlu0 %2358
        %2360 = vrot.lane.b32.xlu0 %v1394, 64
        %v2361 = vpop.permute.xlu0 %2360
        %2362 = vrot.lane.b32.xlu0 %v1395, 64
        %v2363 = vpop.permute.xlu0 %2362
        %2364 = vrot.lane.b32.xlu0 %v1396, 64
        %v2365 = vpop.permute.xlu0 %2364
        %2366 = vrot.lane.b32.xlu0 %v1397, 64
        %v2367 = vpop.permute.xlu0 %2366
        %2368 = vrot.lane.b32.xlu0 %v1398, 64
        %v2369 = vpop.permute.xlu0 %2368
        %2370 = vrot.lane.b32.xlu0 %v1399, 64
        %v2371 = vpop.permute.xlu0 %2370
        %2372 = vrot.lane.b32.xlu0 %v1400, 64
        %v2373 = vpop.permute.xlu0 %2372
        %2374 = vrot.lane.b32.xlu0 %v1401, 64
        %v2375 = vpop.permute.xlu0 %2374
        %2376 = vrot.lane.b32.xlu0 %v1402, 64
        %v2377 = vpop.permute.xlu0 %2376
        %2378 = vrot.lane.b32.xlu0 %v1403, 64
        %v2379 = vpop.permute.xlu0 %2378
        %2380 = vrot.lane.b32.xlu0 %v1404, 64
        %v2381 = vpop.permute.xlu0 %2380
        %2382 = vrot.lane.b32.xlu0 %v1405, 64
        %v2383 = vpop.permute.xlu0 %2382
        %2384 = vrot.lane.b32.xlu0 %v1406, 64
        %v2385 = vpop.permute.xlu0 %2384
        %2386 = vrot.lane.b32.xlu0 %v1407, 64
        %v2387 = vpop.permute.xlu0 %2386
        %2388 = vrot.lane.b32.xlu0 %v1408, 64
        %v2389 = vpop.permute.xlu0 %2388
        %2390 = vrot.lane.b32.xlu0 %v1409, 64
        %v2391 = vpop.permute.xlu0 %2390
        %2392 = vrot.lane.b32.xlu0 %v1410, 64
        %v2393 = vpop.permute.xlu0 %2392
        %2394 = vrot.lane.b32.xlu0 %v1411, 64
        %v2395 = vpop.permute.xlu0 %2394
        %2396 = vrot.lane.b32.xlu0 %v1412, 64
        %v2397 = vpop.permute.xlu0 %2396
        %2398 = vrot.lane.b32.xlu0 %v1413, 64
        %v2399 = vpop.permute.xlu0 %2398
        %2400 = vrot.lane.b32.xlu0 %v1414, 64
        %v2401 = vpop.permute.xlu0 %2400
        %2402 = vrot.lane.b32.xlu0 %v1415, 64
        %v2403 = vpop.permute.xlu0 %2402
        %2404 = vrot.lane.b32.xlu0 %v1416, 64
        %v2405 = vpop.permute.xlu0 %2404
        %2406 = vrot.lane.b32.xlu0 %v1417, 64
        %v2407 = vpop.permute.xlu0 %2406
        %2408 = vrot.lane.b32.xlu0 %v1418, 64
        %v2409 = vpop.permute.xlu0 %2408
        %2410 = vrot.lane.b32.xlu0 %v1419, 64
        %v2411 = vpop.permute.xlu0 %2410
        %v2444 = vsel %vm278, %v1131, %v1453
        %v2445 = vsel %vm278, %v1132, %v1455
        %v2446 = vsel %vm278, %v1133, %v1457
        %v2447 = vsel %vm278, %v1134, %v1459
        %v2448 = vsel %vm278, %v1135, %v1461
        %v2449 = vsel %vm278, %v1136, %v1463
        %v2450 = vsel %vm278, %v1137, %v1465
        %v2451 = vsel %vm278, %v1138, %v1467
        %v2452 = vsel %vm278, %v1139, %v1469
        %v2453 = vsel %vm278, %v1140, %v1471
        %v2454 = vsel %vm278, %v1141, %v1473
        %v2455 = vsel %vm278, %v1142, %v1475
        %v2456 = vsel %vm278, %v1143, %v1477
        %v2457 = vsel %vm278, %v1144, %v1479
        %v2458 = vsel %vm278, %v1145, %v1481
        %v2459 = vsel %vm278, %v1146, %v1483
        %v2460 = vsel %vm278, %v1147, %v1485
        %v2461 = vsel %vm278, %v1148, %v1487
        %v2462 = vsel %vm278, %v1149, %v1489
        %v2463 = vsel %vm278, %v1150, %v1491
        %v2464 = vsel %vm278, %v1151, %v1493
        %v2465 = vsel %vm278, %v1152, %v1495
        %v2466 = vsel %vm278, %v1153, %v1497
        %v2467 = vsel %vm278, %v1154, %v1499
        %v2468 = vsel %vm278, %v1155, %v1501
        %v2469 = vsel %vm278, %v1156, %v1503
        %v2470 = vsel %vm278, %v1157, %v1505
        %v2471 = vsel %vm278, %v1158, %v1507
        %v2472 = vsel %vm278, %v1159, %v1509
        %v2473 = vsel %vm278, %v1160, %v1511
        %v2474 = vsel %vm278, %v1161, %v1513
        %v2475 = vsel %vm278, %v1162, %v1515
        %vm2476 = vcmask 130048
        %v2477 = vsel %vm2476, %v2444, %v1581
        %v2478 = vsel %vm2476, %v2445, %v1583
        %v2479 = vsel %vm2476, %v2446, %v1585
        %v2480 = vsel %vm2476, %v2447, %v1587
        %v2481 = vsel %vm2476, %v2448, %v1589
        %v2482 = vsel %vm2476, %v2449, %v1591
        %v2483 = vsel %vm2476, %v2450, %v1593
        %v2484 = vsel %vm2476, %v2451, %v1595
        %v2485 = vsel %vm2476, %v2452, %v1597
        %v2486 = vsel %vm2476, %v2453, %v1599
        %v2487 = vsel %vm2476, %v2454, %v1601
        %v2488 = vsel %vm2476, %v2455, %v1603
        %v2489 = vsel %vm2476, %v2456, %v1605
        %v2490 = vsel %vm2476, %v2457, %v1607
        %v2491 = vsel %vm2476, %v2458, %v1609
        %v2492 = vsel %vm2476, %v2459, %v1611
        %v2493 = vsel %vm2476, %v2460, %v1613
        %v2494 = vsel %vm2476, %v2461, %v1615
        %v2495 = vsel %vm2476, %v2462, %v1617
        %v2496 = vsel %vm2476, %v2463, %v1619
        %v2497 = vsel %vm2476, %v2464, %v1621
        %v2498 = vsel %vm2476, %v2465, %v1623
        %v2499 = vsel %vm2476, %v2466, %v1625
        %v2500 = vsel %vm2476, %v2467, %v1627
        %v2501 = vsel %vm2476, %v2468, %v1629
        %v2502 = vsel %vm2476, %v2469, %v1631
        %v2503 = vsel %vm2476, %v2470, %v1633
        %v2504 = vsel %vm2476, %v2471, %v1635
        %v2505 = vsel %vm2476, %v2472, %v1637
        %v2506 = vsel %vm2476, %v2473, %v1639
        %v2507 = vsel %vm2476, %v2474, %v1641
        %v2508 = vsel %vm2476, %v2475, %v1643
        %vm2509 = vcmask 195584
        %v2510 = vsel %vm2509, %v2477, %v1709
        %v2511 = vsel %vm2509, %v2478, %v1711
        %v2512 = vsel %vm2509, %v2479, %v1713
        %v2513 = vsel %vm2509, %v2480, %v1715
        %v2514 = vsel %vm2509, %v2481, %v1717
        %v2515 = vsel %vm2509, %v2482, %v1719
        %v2516 = vsel %vm2509, %v2483, %v1721
        %v2517 = vsel %vm2509, %v2484, %v1723
        %v2518 = vsel %vm2509, %v2485, %v1725
        %v2519 = vsel %vm2509, %v2486, %v1727
        %v2520 = vsel %vm2509, %v2487, %v1729
        %v2521 = vsel %vm2509, %v2488, %v1731
        %v2522 = vsel %vm2509, %v2489, %v1733
        %v2523 = vsel %vm2509, %v2490, %v1735
        %v2524 = vsel %vm2509, %v2491, %v1737
        %v2525 = vsel %vm2509, %v2492, %v1739
        %v2526 = vsel %vm2509, %v2493, %v1741
        %v2527 = vsel %vm2509, %v2494, %v1743
        %v2528 = vsel %vm2509, %v2495, %v1745
        %v2529 = vsel %vm2509, %v2496, %v1747
        %v2530 = vsel %vm2509, %v2497, %v1749
        %v2531 = vsel %vm2509, %v2498, %v1751
        %v2532 = vsel %vm2509, %v2499, %v1753
        %v2533 = vsel %vm2509, %v2500, %v1755
        %v2534 = vsel %vm2509, %v2501, %v1757
        %v2535 = vsel %vm2509, %v2502, %v1759
        %v2536 = vsel %vm2509, %v2503, %v1761
        %v2537 = vsel %vm2509, %v2504, %v1763
        %v2538 = vsel %vm2509, %v2505, %v1765
        %v2539 = vsel %vm2509, %v2506, %v1767
        %v2540 = vsel %vm2509, %v2507, %v1769
        %v2541 = vsel %vm2509, %v2508, %v1771
        %vm2542 = vcmask 261120
        %v2543 = vsel %vm2542, %v2510, %v1837
        %v2544 = vsel %vm2542, %v2511, %v1839
        %v2545 = vsel %vm2542, %v2512, %v1841
        %v2546 = vsel %vm2542, %v2513, %v1843
        %v2547 = vsel %vm2542, %v2514, %v1845
        %v2548 = vsel %vm2542, %v2515, %v1847
        %v2549 = vsel %vm2542, %v2516, %v1849
        %v2550 = vsel %vm2542, %v2517, %v1851
        %v2551 = vsel %vm2542, %v2518, %v1853
        %v2552 = vsel %vm2542, %v2519, %v1855
        %v2553 = vsel %vm2542, %v2520, %v1857
        %v2554 = vsel %vm2542, %v2521, %v1859
        %v2555 = vsel %vm2542, %v2522, %v1861
        %v2556 = vsel %vm2542, %v2523, %v1863
        %v2557 = vsel %vm2542, %v2524, %v1865
        %v2558 = vsel %vm2542, %v2525, %v1867
        %v2559 = vsel %vm2542, %v2526, %v1869
        %v2560 = vsel %vm2542, %v2527, %v1871
        %v2561 = vsel %vm2542, %v2528, %v1873
        %v2562 = vsel %vm2542, %v2529, %v1875
        %v2563 = vsel %vm2542, %v2530, %v1877
        %v2564 = vsel %vm2542, %v2531, %v1879
        %v2565 = vsel %vm2542, %v2532, %v1881
        %v2566 = vsel %vm2542, %v2533, %v1883
        %v2567 = vsel %vm2542, %v2534, %v1885
        %v2568 = vsel %vm2542, %v2535, %v1887
        %v2569 = vsel %vm2542, %v2536, %v1889
        %v2570 = vsel %vm2542, %v2537, %v1891
        %v2571 = vsel %vm2542, %v2538, %v1893
        %v2572 = vsel %vm2542, %v2539, %v1895
        %v2573 = vsel %vm2542, %v2540, %v1897
        %v2574 = vsel %vm2542, %v2541, %v1899
        %vm2575 = vcmask 326656
        %v2576 = vsel %vm2575, %v2543, %v1965
        %v2577 = vsel %vm2575, %v2544, %v1967
        %v2578 = vsel %vm2575, %v2545, %v1969
        %v2579 = vsel %vm2575, %v2546, %v1971
        %v2580 = vsel %vm2575, %v2547, %v1973
        %v2581 = vsel %vm2575, %v2548, %v1975
        %v2582 = vsel %vm2575, %v2549, %v1977
        %v2583 = vsel %vm2575, %v2550, %v1979
        %v2584 = vsel %vm2575, %v2551, %v1981
        %v2585 = vsel %vm2575, %v2552, %v1983
        %v2586 = vsel %vm2575, %v2553, %v1985
        %v2587 = vsel %vm2575, %v2554, %v1987
        %v2588 = vsel %vm2575, %v2555, %v1989
        %v2589 = vsel %vm2575, %v2556, %v1991
        %v2590 = vsel %vm2575, %v2557, %v1993
        %v2591 = vsel %vm2575, %v2558, %v1995
        %v2592 = vsel %vm2575, %v2559, %v1997
        %v2593 = vsel %vm2575, %v2560, %v1999
        %v2594 = vsel %vm2575, %v2561, %v2001
        %v2595 = vsel %vm2575, %v2562, %v2003
        %v2596 = vsel %vm2575, %v2563, %v2005
        %v2597 = vsel %vm2575, %v2564, %v2007
        %v2598 = vsel %vm2575, %v2565, %v2009
        %v2599 = vsel %vm2575, %v2566, %v2011
        %v2600 = vsel %vm2575, %v2567, %v2013
        %v2601 = vsel %vm2575, %v2568, %v2015
        %v2602 = vsel %vm2575, %v2569, %v2017
        %v2603 = vsel %vm2575, %v2570, %v2019
        %v2604 = vsel %vm2575, %v2571, %v2021
        %v2605 = vsel %vm2575, %v2572, %v2023
        %v2606 = vsel %vm2575, %v2573, %v2025
        %v2607 = vsel %vm2575, %v2574, %v2027
        %vm2608 = vcmask 392192
        %v2609 = vsel %vm2608, %v2576, %v2093
        %v2610 = vsel %vm2608, %v2577, %v2095
        %v2611 = vsel %vm2608, %v2578, %v2097
        %v2612 = vsel %vm2608, %v2579, %v2099
        %v2613 = vsel %vm2608, %v2580, %v2101
        %v2614 = vsel %vm2608, %v2581, %v2103
        %v2615 = vsel %vm2608, %v2582, %v2105
        %v2616 = vsel %vm2608, %v2583, %v2107
        %v2617 = vsel %vm2608, %v2584, %v2109
        %v2618 = vsel %vm2608, %v2585, %v2111
        %v2619 = vsel %vm2608, %v2586, %v2113
        %v2620 = vsel %vm2608, %v2587, %v2115
        %v2621 = vsel %vm2608, %v2588, %v2117
        %v2622 = vsel %vm2608, %v2589, %v2119
        %v2623 = vsel %vm2608, %v2590, %v2121
        %v2624 = vsel %vm2608, %v2591, %v2123
        %v2625 = vsel %vm2608, %v2592, %v2125
        %v2626 = vsel %vm2608, %v2593, %v2127
        %v2627 = vsel %vm2608, %v2594, %v2129
        %v2628 = vsel %vm2608, %v2595, %v2131
        %v2629 = vsel %vm2608, %v2596, %v2133
        %v2630 = vsel %vm2608, %v2597, %v2135
        %v2631 = vsel %vm2608, %v2598, %v2137
        %v2632 = vsel %vm2608, %v2599, %v2139
        %v2633 = vsel %vm2608, %v2600, %v2141
        %v2634 = vsel %vm2608, %v2601, %v2143
        %v2635 = vsel %vm2608, %v2602, %v2145
        %v2636 = vsel %vm2608, %v2603, %v2147
        %v2637 = vsel %vm2608, %v2604, %v2149
        %v2638 = vsel %vm2608, %v2605, %v2151
        %v2639 = vsel %vm2608, %v2606, %v2153
        %v2640 = vsel %vm2608, %v2607, %v2155
        %vm2641 = vcmask 457728
        %v2642 = vsel %vm2641, %v2609, %v2221
        %v2643 = vsel %vm2641, %v2610, %v2223
        %v2644 = vsel %vm2641, %v2611, %v2225
        %v2645 = vsel %vm2641, %v2612, %v2227
        %v2646 = vsel %vm2641, %v2613, %v2229
        %v2647 = vsel %vm2641, %v2614, %v2231
        %v2648 = vsel %vm2641, %v2615, %v2233
        %v2649 = vsel %vm2641, %v2616, %v2235
        %v2650 = vsel %vm2641, %v2617, %v2237
        %v2651 = vsel %vm2641, %v2618, %v2239
        %v2652 = vsel %vm2641, %v2619, %v2241
        %v2653 = vsel %vm2641, %v2620, %v2243
        %v2654 = vsel %vm2641, %v2621, %v2245
        %v2655 = vsel %vm2641, %v2622, %v2247
        %v2656 = vsel %vm2641, %v2623, %v2249
        %v2657 = vsel %vm2641, %v2624, %v2251
        %v2658 = vsel %vm2641, %v2625, %v2253
        %v2659 = vsel %vm2641, %v2626, %v2255
        %v2660 = vsel %vm2641, %v2627, %v2257
        %v2661 = vsel %vm2641, %v2628, %v2259
        %v2662 = vsel %vm2641, %v2629, %v2261
        %v2663 = vsel %vm2641, %v2630, %v2263
        %v2664 = vsel %vm2641, %v2631, %v2265
        %v2665 = vsel %vm2641, %v2632, %v2267
        %v2666 = vsel %vm2641, %v2633, %v2269
        %v2667 = vsel %vm2641, %v2634, %v2271
        %v2668 = vsel %vm2641, %v2635, %v2273
        %v2669 = vsel %vm2641, %v2636, %v2275
        %v2670 = vsel %vm2641, %v2637, %v2277
        %v2671 = vsel %vm2641, %v2638, %v2279
        %v2672 = vsel %vm2641, %v2639, %v2281
        %v2673 = vsel %vm2641, %v2640, %v2283
        %vm2674 = vcmask 523264
        %v2675 = vsel %vm2674, %v2642, %v2349
        %v2676 = vsel %vm2674, %v2643, %v2351
        %v2677 = vsel %vm2674, %v2644, %v2353
        %v2678 = vsel %vm2674, %v2645, %v2355
        %v2679 = vsel %vm2674, %v2646, %v2357
        %v2680 = vsel %vm2674, %v2647, %v2359
        %v2681 = vsel %vm2674, %v2648, %v2361
        %v2682 = vsel %vm2674, %v2649, %v2363
        %v2683 = vsel %vm2674, %v2650, %v2365
        %v2684 = vsel %vm2674, %v2651, %v2367
        %v2685 = vsel %vm2674, %v2652, %v2369
        %v2686 = vsel %vm2674, %v2653, %v2371
        %v2687 = vsel %vm2674, %v2654, %v2373
        %v2688 = vsel %vm2674, %v2655, %v2375
        %v2689 = vsel %vm2674, %v2656, %v2377
        %v2690 = vsel %vm2674, %v2657, %v2379
        %v2691 = vsel %vm2674, %v2658, %v2381
        %v2692 = vsel %vm2674, %v2659, %v2383
        %v2693 = vsel %vm2674, %v2660, %v2385
        %v2694 = vsel %vm2674, %v2661, %v2387
        %v2695 = vsel %vm2674, %v2662, %v2389
        %v2696 = vsel %vm2674, %v2663, %v2391
        %v2697 = vsel %vm2674, %v2664, %v2393
        %v2698 = vsel %vm2674, %v2665, %v2395
        %v2699 = vsel %vm2674, %v2666, %v2397
        %v2700 = vsel %vm2674, %v2667, %v2399
        %v2701 = vsel %vm2674, %v2668, %v2401
        %v2702 = vsel %vm2674, %v2669, %v2403
        %v2703 = vsel %vm2674, %v2670, %v2405
        %v2704 = vsel %vm2674, %v2671, %v2407
        %v2705 = vsel %vm2674, %v2672, %v2409
        %v2706 = vsel %vm2674, %v2673, %v2411
        %v2707 = vpack.c.bf16 %v2676, %v2675
        %v2708 = vpack.c.bf16 %v2678, %v2677
        %v2709 = vpack.c.bf16 %v2680, %v2679
        %v2710 = vpack.c.bf16 %v2682, %v2681
        %v2711 = vpack.c.bf16 %v2684, %v2683
        %v2712 = vpack.c.bf16 %v2686, %v2685
        %v2713 = vpack.c.bf16 %v2688, %v2687
        %v2714 = vpack.c.bf16 %v2690, %v2689
        %v2715 = vpack.c.bf16 %v2692, %v2691
        %v2716 = vpack.c.bf16 %v2694, %v2693
        %v2717 = vpack.c.bf16 %v2696, %v2695
        %v2718 = vpack.c.bf16 %v2698, %v2697
        %v2719 = vpack.c.bf16 %v2700, %v2699
        %v2720 = vpack.c.bf16 %v2702, %v2701
        %v2721 = vpack.c.bf16 %v2704, %v2703
        %v2722 = vpack.c.bf16 %v2706, %v2705
        %v2723 = vld [vmem:[%s2] sm:$0xf]
        %v2724 = vld [vmem:[%s2 + $0x4] sm:$0xf]
        %v2725 = vld [vmem:[%s2 + $0x8] sm:$0xf]
        %v2726 = vld [vmem:[%s2 + $0xc] sm:$0xf]
        %v2727 = vld [vmem:[%s2 + $0x10] sm:$0xf]
        %v2728 = vld [vmem:[%s2 + $0x14] sm:$0xf]
        %v2729 = vld [vmem:[%s2 + $0x18] sm:$0xf]
        %v2730 = vld [vmem:[%s2 + $0x1c] sm:$0xf]
        %v2731 = vld [vmem:[%s2 + $0x20] sm:$0xf]
        %v2741 = vunpack.c.l.b16 %v2723
        %v2742 = vunpack.c.l.b16 %v2724
        %v2743 = vunpack.c.l.b16 %v2725
        %v2744 = vunpack.c.l.b16 %v2726
        %v2745 = vunpack.c.l.b16 %v2727
        %v2746 = vunpack.c.l.b16 %v2728
        %v2747 = vunpack.c.l.b16 %v2729
        %v2748 = vunpack.c.l.b16 %v2730
        %v2749 = vunpack.c.l.b16 %v2731
        %v2750 = vpack.c.b16 %v2742, %v2741
        %v2751 = vpack.c.b16 %v2744, %v2743
        %v2752 = vpack.c.b16 %v2746, %v2745
        %v2753 = vpack.c.b16 %v2748, %v2747
        %v2754 = vpack.c.b16 %v2749, %v2749
        %vm2759 = vcmask 588800
        %v2761 = vsel %vm2759, %v2707, 0
        %v2764 = vsel %vm2759, %v2708, 0
        %v2767 = vsel %vm2759, %v2709, 0
        %v2770 = vsel %vm2759, %v2710, 0
        %v2773 = vsel %vm2759, %v2711, 0
        %v2776 = vsel %vm2759, %v2712, 0
        %v2779 = vsel %vm2759, %v2713, 0
        %v2782 = vsel %vm2759, %v2714, 0
        %v2785 = vsel %vm2759, %v2715, 0
        %v2788 = vsel %vm2759, %v2716, 0
        %v2791 = vsel %vm2759, %v2717, 0
        %v2794 = vsel %vm2759, %v2718, 0
        %v2797 = vsel %vm2759, %v2719, 0
        %v2800 = vsel %vm2759, %v2720, 0
        %v2803 = vsel %vm2759, %v2721, 0
        %v2806 = vsel %vm2759, %v2722, 0
        %vm2808 = vcmask 1043456
        %v2810 = vsel %vm2808, %v2754, 0
        %2812 = vmatprep.subr.bf16.mxu0 0
        %2813 = vmatpush1.bf16.msra.mxu0 %v2750
        %2814 = vmatprep.subr.bf16.mxu0 0
        %2815 = vmatpush1.bf16.msra.mxu0 %v2751
        %2816 = vmatprep.subr.bf16.mxu0 0
        %2817 = vmatpush1.bf16.msra.mxu0 %v2752
        %2818 = vmatprep.subr.bf16.mxu0 0
        %2819 = vmatpush1.bf16.msra.mxu0 %v2753
        %2820 = vmatprep.subr.bf16.mxu0 0
        %2821 = vmatpush1.bf16.msra.mxu0 %v2810
        %2822 = vmatprep.subr.bf16.mxu0 0
        %2823 = vmatpush1.bf16.msra.mxu0 0
        %2824 = vmatprep.subr.bf16.mxu0 0
        %2825 = vmatpush1.bf16.msra.mxu0 0
        %2826 = vmatprep.subr.bf16.mxu0 0
        %2827 = vmatpush1.bf16.msra.mxu0 0
        %2828 = vmatprep.subr.bf16.mxu0 0
        %2829 = vmatpush1.bf16.msra.mxu0 0
        %2830 = vmatprep.subr.bf16.mxu0 0
        %2831 = vmatpush1.bf16.msra.mxu0 0
        %2832 = vmatprep.subr.bf16.mxu0 0
        %2833 = vmatpush1.bf16.msra.mxu0 0
        %2834 = vmatprep.subr.bf16.mxu0 0
        %2835 = vmatpush1.bf16.msra.mxu0 0
        %2836 = vmatprep.subr.bf16.mxu0 0
        %2837 = vmatpush1.bf16.msra.mxu0 0
        %2838 = vmatprep.subr.bf16.mxu0 0
        %2839 = vmatpush1.bf16.msra.mxu0 0
        %2840 = vmatprep.subr.bf16.mxu0 0
        %2841 = vmatpush1.bf16.msra.mxu0 0
        %2842 = vmatprep.subr.bf16.mxu0 0
        %2843 = vmatpush1.bf16.msra.mxu0 0
        %2844 = vmatprep.mubr.bf16.mxu0 0
        %2845 = vmatmul.mubr.bf16.gmra.mrb[0].mxu0 %v2761
        %v2846 = vpop.f32.mrb[0].mxu0
        %v2847 = vadd.f32 0.0, %v2846
        %v2848 = vpop.f32.mrb[0].mxu0
        %v2849 = vpop.f32.mrb[0].mxu0
        %v2850 = vadd.f32 0.0, %v2849
        %v2851 = vpop.f32.mrb[0].mxu0
        %2852 = vmatprep.mubr.bf16.mxu0 0
        %2853 = vmatmul.mubr.bf16.gmra.mrb[0].mxu0 %v2764
        %v2854 = vpop.f32.mrb[0].mxu0
        %v2855 = vadd.f32 0.0, %v2854
        %v2856 = vpop.f32.mrb[0].mxu0
        %v2857 = vpop.f32.mrb[0].mxu0
        %v2858 = vadd.f32 0.0, %v2857
        %v2859 = vpop.f32.mrb[0].mxu0
        %2860 = vmatprep.mubr.bf16.mxu0 0
        %2861 = vmatmul.mubr.bf16.gmra.mrb[0].mxu0 %v2767
        %v2862 = vpop.f32.mrb[0].mxu0
        %v2863 = vadd.f32 0.0, %v2862
        %v2864 = vpop.f32.mrb[0].mxu0
        %v2865 = vpop.f32.mrb[0].mxu0
        %v2866 = vadd.f32 0.0, %v2865
        %v2867 = vpop.f32.mrb[0].mxu0
        %2868 = vmatprep.mubr.bf16.mxu0 0
        %2869 = vmatmul.mubr.bf16.gmra.mrb[0].mxu0 %v2770
        %v2870 = vpop.f32.mrb[0].mxu0
        %v2871 = vadd.f32 0.0, %v2870
        %v2872 = vpop.f32.mrb[0].mxu0
        %v2873 = vpop.f32.mrb[0].mxu0
        %v2874 = vadd.f32 0.0, %v2873
        %v2875 = vpop.f32.mrb[0].mxu0
        %2876 = vmatprep.mubr.bf16.mxu0 0
        %2877 = vmatmul.mubr.bf16.gmra.mrb[0].mxu0 %v2773
        %v2878 = vpop.f32.mrb[0].mxu0
        %v2879 = vadd.f32 0.0, %v2878
        %v2880 = vpop.f32.mrb[0].mxu0
        %v2881 = vpop.f32.mrb[0].mxu0
        %v2882 = vadd.f32 0.0, %v2881
        %v2883 = vpop.f32.mrb[0].mxu0
        %2884 = vmatprep.mubr.bf16.mxu0 0
        %2885 = vmatmul.mubr.bf16.gmra.mrb[0].mxu0 %v2776
        %v2886 = vpop.f32.mrb[0].mxu0
        %v2887 = vadd.f32 0.0, %v2886
        %v2888 = vpop.f32.mrb[0].mxu0
        %v2889 = vpop.f32.mrb[0].mxu0
        %v2890 = vadd.f32 0.0, %v2889
        %v2891 = vpop.f32.mrb[0].mxu0
        %2892 = vmatprep.mubr.bf16.mxu0 0
        %2893 = vmatmul.mubr.bf16.gmra.mrb[0].mxu0 %v2779
        %v2894 = vpop.f32.mrb[0].mxu0
        %v2895 = vadd.f32 0.0, %v2894
        %v2896 = vpop.f32.mrb[0].mxu0
        %v2897 = vpop.f32.mrb[0].mxu0
        %v2898 = vadd.f32 0.0, %v2897
        %v2899 = vpop.f32.mrb[0].mxu0
        %2900 = vmatprep.mubr.bf16.mxu0 0
        %2901 = vmatmul.mubr.bf16.gmra.mrb[0].mxu0 %v2782
        %v2902 = vpop.f32.mrb[0].mxu0
        %v2903 = vadd.f32 0.0, %v2902
        %v2904 = vpop.f32.mrb[0].mxu0
        %v2905 = vpop.f32.mrb[0].mxu0
        %v2906 = vadd.f32 0.0, %v2905
        %v2907 = vpop.f32.mrb[0].mxu0
        %2908 = vmatprep.mubr.bf16.mxu0 0
        %2909 = vmatmul.mubr.bf16.gmra.mrb[0].mxu0 %v2785
        %v2910 = vpop.f32.mrb[0].mxu0
        %v2911 = vadd.f32 0.0, %v2910
        %v2912 = vpop.f32.mrb[0].mxu0
        %v2913 = vpop.f32.mrb[0].mxu0
        %v2914 = vadd.f32 0.0, %v2913
        %v2915 = vpop.f32.mrb[0].mxu0
        %2916 = vmatprep.mubr.bf16.mxu0 0
        %2917 = vmatmul.mubr.bf16.gmra.mrb[0].mxu0 %v2788
        %v2918 = vpop.f32.mrb[0].mxu0
        %v2919 = vadd.f32 0.0, %v2918
        %v2920 = vpop.f32.mrb[0].mxu0
        %v2921 = vpop.f32.mrb[0].mxu0
        %v2922 = vadd.f32 0.0, %v2921
        %v2923 = vpop.f32.mrb[0].mxu0
        %2924 = vmatprep.mubr.bf16.mxu0 0
        %2925 = vmatmul.mubr.bf16.gmra.mrb[0].mxu0 %v2791
        %v2926 = vpop.f32.mrb[0].mxu0
        %v2927 = vadd.f32 0.0, %v2926
        %v2928 = vpop.f32.mrb[0].mxu0
        %v2929 = vpop.f32.mrb[0].mxu0
        %v2930 = vadd.f32 0.0, %v2929
        %v2931 = vpop.f32.mrb[0].mxu0
        %2932 = vmatprep.mubr.bf16.mxu0 0
        %2933 = vmatmul.mubr.bf16.gmra.mrb[0].mxu0 %v2794
        %v2934 = vpop.f32.mrb[0].mxu0
        %v2935 = vadd.f32 0.0, %v2934
        %v2936 = vpop.f32.mrb[0].mxu0
        %v2937 = vpop.f32.mrb[0].mxu0
        %v2938 = vadd.f32 0.0, %v2937
        %v2939 = vpop.f32.mrb[0].mxu0
        %2940 = vmatprep.mubr.bf16.mxu0 0
        %2941 = vmatmul.mubr.bf16.gmra.mrb[0].mxu0 %v2797
        %v2942 = vpop.f32.mrb[0].mxu0
        %v2943 = vadd.f32 0.0, %v2942
        %v2944 = vpop.f32.mrb[0].mxu0
        %v2945 = vpop.f32.mrb[0].mxu0
        %v2946 = vadd.f32 0.0, %v2945
        %v2947 = vpop.f32.mrb[0].mxu0
        %2948 = vmatprep.mubr.bf16.mxu0 0
        %2949 = vmatmul.mubr.bf16.gmra.mrb[0].mxu0 %v2800
        %v2950 = vpop.f32.mrb[0].mxu0
        %v2951 = vadd.f32 0.0, %v2950
        %v2952 = vpop.f32.mrb[0].mxu0
        %v2953 = vpop.f32.mrb[0].mxu0
        %v2954 = vadd.f32 0.0, %v2953
        %v2955 = vpop.f32.mrb[0].mxu0
        %2956 = vmatprep.mubr.bf16.mxu0 0
        %2957 = vmatmul.mubr.bf16.gmra.mrb[0].mxu0 %v2803
        %v2958 = vpop.f32.mrb[0].mxu0
        %v2959 = vadd.f32 0.0, %v2958
        %v2960 = vpop.f32.mrb[0].mxu0
        %v2961 = vpop.f32.mrb[0].mxu0
        %v2962 = vadd.f32 0.0, %v2961
        %v2963 = vpop.f32.mrb[0].mxu0
        %2964 = vmatprep.mubr.bf16.mxu0 0
        %2965 = vmatmul.mubr.bf16.gmra.mrb[0].mxu0 %v2806
        %v2966 = vpop.f32.mrb[0].mxu0
        %v2967 = vadd.f32 0.0, %v2966
        %v2968 = vpop.f32.mrb[0].mxu0
        %v2969 = vpop.f32.mrb[0].mxu0
        %v2970 = vadd.f32 0.0, %v2969
        %v2971 = vpop.f32.mrb[0].mxu0
        %2972 = vdwg.mxu0
        %3005 = vrot.lane.b32.xlu0 %v2847, 8
        %v3006 = vpop.permute.xlu0 %3005
        %3007 = vrot.lane.b32.xlu0 %v2850, 8
        %v3008 = vpop.permute.xlu0 %3007
        %3009 = vrot.lane.b32.xlu0 %v2855, 8
        %v3010 = vpop.permute.xlu0 %3009
        %3011 = vrot.lane.b32.xlu0 %v2858, 8
        %v3012 = vpop.permute.xlu0 %3011
        %3013 = vrot.lane.b32.xlu0 %v2863, 8
        %v3014 = vpop.permute.xlu0 %3013
        %3015 = vrot.lane.b32.xlu0 %v2866, 8
        %v3016 = vpop.permute.xlu0 %3015
        %3017 = vrot.lane.b32.xlu0 %v2871, 8
        %v3018 = vpop.permute.xlu0 %3017
        %3019 = vrot.lane.b32.xlu0 %v2874, 8
        %v3020 = vpop.permute.xlu0 %3019
        %3021 = vrot.lane.b32.xlu0 %v2879, 8
        %v3022 = vpop.permute.xlu0 %3021
        %3023 = vrot.lane.b32.xlu0 %v2882, 8
        %v3024 = vpop.permute.xlu0 %3023
        %3025 = vrot.lane.b32.xlu0 %v2887, 8
        %v3026 = vpop.permute.xlu0 %3025
        %3027 = vrot.lane.b32.xlu0 %v2890, 8
        %v3028 = vpop.permute.xlu0 %3027
        %3029 = vrot.lane.b32.xlu0 %v2895, 8
        %v3030 = vpop.permute.xlu0 %3029
        %3031 = vrot.lane.b32.xlu0 %v2898, 8
        %v3032 = vpop.permute.xlu0 %3031
        %3033 = vrot.lane.b32.xlu0 %v2903, 8
        %v3034 = vpop.permute.xlu0 %3033
        %3035 = vrot.lane.b32.xlu0 %v2906, 8
        %v3036 = vpop.permute.xlu0 %3035
        %3037 = vrot.lane.b32.xlu0 %v2911, 8
        %v3038 = vpop.permute.xlu0 %3037
        %3039 = vrot.lane.b32.xlu0 %v2914, 8
        %v3040 = vpop.permute.xlu0 %3039
        %3041 = vrot.lane.b32.xlu0 %v2919, 8
        %v3042 = vpop.permute.xlu0 %3041
        %3043 = vrot.lane.b32.xlu0 %v2922, 8
        %v3044 = vpop.permute.xlu0 %3043
        %3045 = vrot.lane.b32.xlu0 %v2927, 8
        %v3046 = vpop.permute.xlu0 %3045
        %3047 = vrot.lane.b32.xlu0 %v2930, 8
        %v3048 = vpop.permute.xlu0 %3047
        %3049 = vrot.lane.b32.xlu0 %v2935, 8
        %v3050 = vpop.permute.xlu0 %3049
        %3051 = vrot.lane.b32.xlu0 %v2938, 8
        %v3052 = vpop.permute.xlu0 %3051
        %3053 = vrot.lane.b32.xlu0 %v2943, 8
        %v3054 = vpop.permute.xlu0 %3053
        %3055 = vrot.lane.b32.xlu0 %v2946, 8
        %v3056 = vpop.permute.xlu0 %3055
        %3057 = vrot.lane.b32.xlu0 %v2951, 8
        %v3058 = vpop.permute.xlu0 %3057
        %3059 = vrot.lane.b32.xlu0 %v2954, 8
        %v3060 = vpop.permute.xlu0 %3059
        %3061 = vrot.lane.b32.xlu0 %v2959, 8
        %v3062 = vpop.permute.xlu0 %3061
        %3063 = vrot.lane.b32.xlu0 %v2962, 8
        %v3064 = vpop.permute.xlu0 %3063
        %3065 = vrot.lane.b32.xlu0 %v2967, 8
        %v3066 = vpop.permute.xlu0 %3065
        %3067 = vrot.lane.b32.xlu0 %v2970, 8
        %v3068 = vpop.permute.xlu0 %3067
        %v3101 = vadd.f32 %v593, %v3006
        %v3102 = vadd.f32 %v596, %v3008
        %v3103 = vadd.f32 %v601, %v3010
        %v3104 = vadd.f32 %v604, %v3012
        %v3105 = vadd.f32 %v609, %v3014
        %v3106 = vadd.f32 %v612, %v3016
        %v3107 = vadd.f32 %v617, %v3018
        %v3108 = vadd.f32 %v620, %v3020
        %v3109 = vadd.f32 %v625, %v3022
        %v3110 = vadd.f32 %v628, %v3024
        %v3111 = vadd.f32 %v633, %v3026
        %v3112 = vadd.f32 %v636, %v3028
        %v3113 = vadd.f32 %v641, %v3030
        %v3114 = vadd.f32 %v644, %v3032
        %v3115 = vadd.f32 %v649, %v3034
        %v3116 = vadd.f32 %v652, %v3036
        %v3117 = vadd.f32 %v657, %v3038
        %v3118 = vadd.f32 %v660, %v3040
        %v3119 = vadd.f32 %v665, %v3042
        %v3120 = vadd.f32 %v668, %v3044
        %v3121 = vadd.f32 %v673, %v3046
        %v3122 = vadd.f32 %v676, %v3048
        %v3123 = vadd.f32 %v681, %v3050
        %v3124 = vadd.f32 %v684, %v3052
        %v3125 = vadd.f32 %v689, %v3054
        %v3126 = vadd.f32 %v692, %v3056
        %v3127 = vadd.f32 %v697, %v3058
        %v3128 = vadd.f32 %v700, %v3060
        %v3129 = vadd.f32 %v705, %v3062
        %v3130 = vadd.f32 %v708, %v3064
        %v3131 = vadd.f32 %v713, %v3066
        %v3132 = vadd.f32 %v716, %v3068
        %v3133 = vlaneseq
        %v3134 = vshrl.u32 %v3133, 7
        %v3135 = vsub.s32 0, %v3134
        %v3136 = vrot.slane %v370, %v3135
        %3138 = vrot.lane.b32.xlu0 %v3136, 8
        %v3139 = vpop.permute.xlu0 %3138
        %v3141 = vadd.f32 %v3101, %v3139
        %v3142 = vadd.f32 %v3102, %v3139
        %v3143 = vadd.f32 %v3103, %v3139
        %v3144 = vadd.f32 %v3104, %v3139
        %v3145 = vadd.f32 %v3105, %v3139
        %v3146 = vadd.f32 %v3106, %v3139
        %v3147 = vadd.f32 %v3107, %v3139
        %v3148 = vadd.f32 %v3108, %v3139
        %v3149 = vadd.f32 %v3109, %v3139
        %v3150 = vadd.f32 %v3110, %v3139
        %v3151 = vadd.f32 %v3111, %v3139
        %v3152 = vadd.f32 %v3112, %v3139
        %v3153 = vadd.f32 %v3113, %v3139
        %v3154 = vadd.f32 %v3114, %v3139
        %v3155 = vadd.f32 %v3115, %v3139
        %v3156 = vadd.f32 %v3116, %v3139
        %v3157 = vadd.f32 %v3117, %v3139
        %v3158 = vadd.f32 %v3118, %v3139
        %v3159 = vadd.f32 %v3119, %v3139
        %v3160 = vadd.f32 %v3120, %v3139
        %v3161 = vadd.f32 %v3121, %v3139
        %v3162 = vadd.f32 %v3122, %v3139
        %v3163 = vadd.f32 %v3123, %v3139
        %v3164 = vadd.f32 %v3124, %v3139
        %v3165 = vadd.f32 %v3125, %v3139
        %v3166 = vadd.f32 %v3126, %v3139
        %v3167 = vadd.f32 %v3127, %v3139
        %v3168 = vadd.f32 %v3128, %v3139
        %v3169 = vadd.f32 %v3129, %v3139
        %v3170 = vadd.f32 %v3130, %v3139
        %v3171 = vadd.f32 %v3131, %v3139
        %v3172 = vadd.f32 %v3132, %v3139
        %vm3173 = vcmask 130112
        %v3174 = vsel %vm3173, %v3141, 0.0
        %v3175 = vsel %vm3173, %v3142, 0.0
        %v3176 = vadd.f32 %v3174, %v3175
        %v3177 = vsel %vm3173, %v3143, 0.0
        %v3178 = vadd.f32 %v3176, %v3177
        %v3179 = vsel %vm3173, %v3144, 0.0
        %v3180 = vadd.f32 %v3178, %v3179
        %v3181 = vsel %vm3173, %v3145, 0.0
        %v3182 = vadd.f32 %v3180, %v3181
        %v3183 = vsel %vm3173, %v3146, 0.0
        %v3184 = vadd.f32 %v3182, %v3183
        %v3185 = vsel %vm3173, %v3147, 0.0
        %v3186 = vadd.f32 %v3184, %v3185
        %v3187 = vsel %vm3173, %v3148, 0.0
        %v3188 = vadd.f32 %v3186, %v3187
        %v3189 = vsel %vm3173, %v3149, 0.0
        %v3190 = vadd.f32 %v3188, %v3189
        %v3191 = vsel %vm3173, %v3150, 0.0
        %v3192 = vadd.f32 %v3190, %v3191
        %v3193 = vsel %vm3173, %v3151, 0.0
        %v3194 = vadd.f32 %v3192, %v3193
        %v3195 = vsel %vm3173, %v3152, 0.0
        %v3196 = vadd.f32 %v3194, %v3195
        %v3197 = vsel %vm3173, %v3153, 0.0
        %v3198 = vadd.f32 %v3196, %v3197
        %v3199 = vsel %vm3173, %v3154, 0.0
        %v3200 = vadd.f32 %v3198, %v3199
        %v3201 = vsel %vm3173, %v3155, 0.0
        %v3202 = vadd.f32 %v3200, %v3201
        %v3203 = vsel %vm3173, %v3156, 0.0
        %v3204 = vadd.f32 %v3202, %v3203
        %v3205 = vsel %vm3173, %v3157, 0.0
        %v3206 = vadd.f32 %v3204, %v3205
        %v3207 = vsel %vm3173, %v3158, 0.0
        %v3208 = vadd.f32 %v3206, %v3207
        %v3209 = vsel %vm3173, %v3159, 0.0
        %v3210 = vadd.f32 %v3208, %v3209
        %v3211 = vsel %vm3173, %v3160, 0.0
        %v3212 = vadd.f32 %v3210, %v3211
        %v3213 = vsel %vm3173, %v3161, 0.0
        %v3214 = vadd.f32 %v3212, %v3213
        %v3215 = vsel %vm3173, %v3162, 0.0
        %v3216 = vadd.f32 %v3214, %v3215
        %v3217 = vsel %vm3173, %v3163, 0.0
        %v3218 = vadd.f32 %v3216, %v3217
        %v3219 = vsel %vm3173, %v3164, 0.0
        %v3220 = vadd.f32 %v3218, %v3219
        %v3221 = vsel %vm3173, %v3165, 0.0
        %v3222 = vadd.f32 %v3220, %v3221
        %v3223 = vsel %vm3173, %v3166, 0.0
        %v3224 = vadd.f32 %v3222, %v3223
        %v3225 = vsel %vm3173, %v3167, 0.0
        %v3226 = vadd.f32 %v3224, %v3225
        %v3227 = vsel %vm3173, %v3168, 0.0
        %v3228 = vadd.f32 %v3226, %v3227
        %v3229 = vsel %vm3173, %v3169, 0.0
        %v3230 = vadd.f32 %v3228, %v3229
        %v3231 = vsel %vm3173, %v3170, 0.0
        %v3232 = vadd.f32 %v3230, %v3231
        %v3233 = vsel %vm3173, %v3171, 0.0
        %v3234 = vadd.f32 %v3232, %v3233
        %v3235 = vsel %vm3173, %v3172, 0.0
        %v3236 = vadd.f32 %v3234, %v3235
        %v3237 = vrot.slane %v3236, 4
        %v3238 = vadd.f32 %v3236, %v3237
        %v3239 = vrot.slane %v3238, 2
        %v3240 = vadd.f32 %v3238, %v3239
        %v3241 = vrot.slane %v3240, 1
        %v3242 = vadd.f32 %v3240, %v3241
        %v3243 = vmul.f32 %v3242, %v824
        %v3244 = vsub.f32 %v3141, %v3243
        %v3245 = vsub.f32 %v3142, %v3243
        %v3246 = vsub.f32 %v3143, %v3243
        %v3247 = vsub.f32 %v3144, %v3243
        %v3248 = vsub.f32 %v3145, %v3243
        %v3249 = vsub.f32 %v3146, %v3243
        %v3250 = vsub.f32 %v3147, %v3243
        %v3251 = vsub.f32 %v3148, %v3243
        %v3252 = vsub.f32 %v3149, %v3243
        %v3253 = vsub.f32 %v3150, %v3243
        %v3254 = vsub.f32 %v3151, %v3243
        %v3255 = vsub.f32 %v3152, %v3243
        %v3256 = vsub.f32 %v3153, %v3243
        %v3257 = vsub.f32 %v3154, %v3243
        %v3258 = vsub.f32 %v3155, %v3243
        %v3259 = vsub.f32 %v3156, %v3243
        %v3260 = vsub.f32 %v3157, %v3243
        %v3261 = vsub.f32 %v3158, %v3243
        %v3262 = vsub.f32 %v3159, %v3243
        %v3263 = vsub.f32 %v3160, %v3243
        %v3264 = vsub.f32 %v3161, %v3243
        %v3265 = vsub.f32 %v3162, %v3243
        %v3266 = vsub.f32 %v3163, %v3243
        %v3267 = vsub.f32 %v3164, %v3243
        %v3268 = vsub.f32 %v3165, %v3243
        %v3269 = vsub.f32 %v3166, %v3243
        %v3270 = vsub.f32 %v3167, %v3243
        %v3271 = vsub.f32 %v3168, %v3243
        %v3272 = vsub.f32 %v3169, %v3243
        %v3273 = vsub.f32 %v3170, %v3243
        %v3274 = vsub.f32 %v3171, %v3243
        %v3275 = vsub.f32 %v3172, %v3243
        %v3276 = vmul.f32 %v3244, %v3244
        %v3277 = vmul.f32 %v3245, %v3245
        %v3278 = vmul.f32 %v3246, %v3246
        %v3279 = vmul.f32 %v3247, %v3247
        %v3280 = vmul.f32 %v3248, %v3248
        %v3281 = vmul.f32 %v3249, %v3249
        %v3282 = vmul.f32 %v3250, %v3250
        %v3283 = vmul.f32 %v3251, %v3251
        %v3284 = vmul.f32 %v3252, %v3252
        %v3285 = vmul.f32 %v3253, %v3253
        %v3286 = vmul.f32 %v3254, %v3254
        %v3287 = vmul.f32 %v3255, %v3255
        %v3288 = vmul.f32 %v3256, %v3256
        %v3289 = vmul.f32 %v3257, %v3257
        %v3290 = vmul.f32 %v3258, %v3258
        %v3291 = vmul.f32 %v3259, %v3259
        %v3292 = vmul.f32 %v3260, %v3260
        %v3293 = vmul.f32 %v3261, %v3261
        %v3294 = vmul.f32 %v3262, %v3262
        %v3295 = vmul.f32 %v3263, %v3263
        %v3296 = vmul.f32 %v3264, %v3264
        %v3297 = vmul.f32 %v3265, %v3265
        %v3298 = vmul.f32 %v3266, %v3266
        %v3299 = vmul.f32 %v3267, %v3267
        %v3300 = vmul.f32 %v3268, %v3268
        %v3301 = vmul.f32 %v3269, %v3269
        %v3302 = vmul.f32 %v3270, %v3270
        %v3303 = vmul.f32 %v3271, %v3271
        %v3304 = vmul.f32 %v3272, %v3272
        %v3305 = vmul.f32 %v3273, %v3273
        %v3306 = vmul.f32 %v3274, %v3274
        %v3307 = vmul.f32 %v3275, %v3275
        %v3308 = vsel %vm3173, %v3276, 0.0
        %v3309 = vsel %vm3173, %v3277, 0.0
        %v3310 = vadd.f32 %v3308, %v3309
        %v3311 = vsel %vm3173, %v3278, 0.0
        %v3312 = vadd.f32 %v3310, %v3311
        %v3313 = vsel %vm3173, %v3279, 0.0
        %v3314 = vadd.f32 %v3312, %v3313
        %v3315 = vsel %vm3173, %v3280, 0.0
        %v3316 = vadd.f32 %v3314, %v3315
        %v3317 = vsel %vm3173, %v3281, 0.0
        %v3318 = vadd.f32 %v3316, %v3317
        %v3319 = vsel %vm3173, %v3282, 0.0
        %v3320 = vadd.f32 %v3318, %v3319
        %v3321 = vsel %vm3173, %v3283, 0.0
        %v3322 = vadd.f32 %v3320, %v3321
        %v3323 = vsel %vm3173, %v3284, 0.0
        %v3324 = vadd.f32 %v3322, %v3323
        %v3325 = vsel %vm3173, %v3285, 0.0
        %v3326 = vadd.f32 %v3324, %v3325
        %v3327 = vsel %vm3173, %v3286, 0.0
        %v3328 = vadd.f32 %v3326, %v3327
        %v3329 = vsel %vm3173, %v3287, 0.0
        %v3330 = vadd.f32 %v3328, %v3329
        %v3331 = vsel %vm3173, %v3288, 0.0
        %v3332 = vadd.f32 %v3330, %v3331
        %v3333 = vsel %vm3173, %v3289, 0.0
        %v3334 = vadd.f32 %v3332, %v3333
        %v3335 = vsel %vm3173, %v3290, 0.0
        %v3336 = vadd.f32 %v3334, %v3335
        %v3337 = vsel %vm3173, %v3291, 0.0
        %v3338 = vadd.f32 %v3336, %v3337
        %v3339 = vsel %vm3173, %v3292, 0.0
        %v3340 = vadd.f32 %v3338, %v3339
        %v3341 = vsel %vm3173, %v3293, 0.0
        %v3342 = vadd.f32 %v3340, %v3341
        %v3343 = vsel %vm3173, %v3294, 0.0
        %v3344 = vadd.f32 %v3342, %v3343
        %v3345 = vsel %vm3173, %v3295, 0.0
        %v3346 = vadd.f32 %v3344, %v3345
        %v3347 = vsel %vm3173, %v3296, 0.0
        %v3348 = vadd.f32 %v3346, %v3347
        %v3349 = vsel %vm3173, %v3297, 0.0
        %v3350 = vadd.f32 %v3348, %v3349
        %v3351 = vsel %vm3173, %v3298, 0.0
        %v3352 = vadd.f32 %v3350, %v3351
        %v3353 = vsel %vm3173, %v3299, 0.0
        %v3354 = vadd.f32 %v3352, %v3353
        %v3355 = vsel %vm3173, %v3300, 0.0
        %v3356 = vadd.f32 %v3354, %v3355
        %v3357 = vsel %vm3173, %v3301, 0.0
        %v3358 = vadd.f32 %v3356, %v3357
        %v3359 = vsel %vm3173, %v3302, 0.0
        %v3360 = vadd.f32 %v3358, %v3359
        %v3361 = vsel %vm3173, %v3303, 0.0
        %v3362 = vadd.f32 %v3360, %v3361
        %v3363 = vsel %vm3173, %v3304, 0.0
        %v3364 = vadd.f32 %v3362, %v3363
        %v3365 = vsel %vm3173, %v3305, 0.0
        %v3366 = vadd.f32 %v3364, %v3365
        %v3367 = vsel %vm3173, %v3306, 0.0
        %v3368 = vadd.f32 %v3366, %v3367
        %v3369 = vsel %vm3173, %v3307, 0.0
        %v3370 = vadd.f32 %v3368, %v3369
        %v3371 = vrot.slane %v3370, 4
        %v3372 = vadd.f32 %v3370, %v3371
        %v3373 = vrot.slane %v3372, 2
        %v3374 = vadd.f32 %v3372, %v3373
        %v3375 = vrot.slane %v3374, 1
        %v3376 = vadd.f32 %v3374, %v3375
        %v3377 = vmul.f32 %v3376, %v824
        %v3378 = vadd.f32 %v3377, 1e-05
        %v3379 = vrsqrt.pop %v3378
        %v3380 = vmul.f32 %v3244, %v3379
        %v3381 = vmul.f32 %v3245, %v3379
        %v3382 = vmul.f32 %v3246, %v3379
        %v3383 = vmul.f32 %v3247, %v3379
        %v3384 = vmul.f32 %v3248, %v3379
        %v3385 = vmul.f32 %v3249, %v3379
        %v3386 = vmul.f32 %v3250, %v3379
        %v3387 = vmul.f32 %v3251, %v3379
        %v3388 = vmul.f32 %v3252, %v3379
        %v3389 = vmul.f32 %v3253, %v3379
        %v3390 = vmul.f32 %v3254, %v3379
        %v3391 = vmul.f32 %v3255, %v3379
        %v3392 = vmul.f32 %v3256, %v3379
        %v3393 = vmul.f32 %v3257, %v3379
        %v3394 = vmul.f32 %v3258, %v3379
        %v3395 = vmul.f32 %v3259, %v3379
        %v3396 = vmul.f32 %v3260, %v3379
        %v3397 = vmul.f32 %v3261, %v3379
        %v3398 = vmul.f32 %v3262, %v3379
        %v3399 = vmul.f32 %v3263, %v3379
        %v3400 = vmul.f32 %v3264, %v3379
        %v3401 = vmul.f32 %v3265, %v3379
        %v3402 = vmul.f32 %v3266, %v3379
        %v3403 = vmul.f32 %v3267, %v3379
        %v3404 = vmul.f32 %v3268, %v3379
        %v3405 = vmul.f32 %v3269, %v3379
        %v3406 = vmul.f32 %v3270, %v3379
        %v3407 = vmul.f32 %v3271, %v3379
        %v3408 = vmul.f32 %v3272, %v3379
        %v3409 = vmul.f32 %v3273, %v3379
        %v3410 = vmul.f32 %v3274, %v3379
        %v3411 = vmul.f32 %v3275, %v3379
        %v3412 = vlaneseq
        %v3413 = vshrl.u32 %v3412, 7
        %v3414 = vsub.s32 0, %v3413
        %v3415 = vrot.slane %v371, %v3414
        %3417 = vrot.lane.b32.xlu0 %v3415, 8
        %v3418 = vpop.permute.xlu0 %3417
        %v3420 = vmul.f32 %v3380, %v3418
        %v3421 = vmul.f32 %v3381, %v3418
        %v3422 = vmul.f32 %v3382, %v3418
        %v3423 = vmul.f32 %v3383, %v3418
        %v3424 = vmul.f32 %v3384, %v3418
        %v3425 = vmul.f32 %v3385, %v3418
        %v3426 = vmul.f32 %v3386, %v3418
        %v3427 = vmul.f32 %v3387, %v3418
        %v3428 = vmul.f32 %v3388, %v3418
        %v3429 = vmul.f32 %v3389, %v3418
        %v3430 = vmul.f32 %v3390, %v3418
        %v3431 = vmul.f32 %v3391, %v3418
        %v3432 = vmul.f32 %v3392, %v3418
        %v3433 = vmul.f32 %v3393, %v3418
        %v3434 = vmul.f32 %v3394, %v3418
        %v3435 = vmul.f32 %v3395, %v3418
        %v3436 = vmul.f32 %v3396, %v3418
        %v3437 = vmul.f32 %v3397, %v3418
        %v3438 = vmul.f32 %v3398, %v3418
        %v3439 = vmul.f32 %v3399, %v3418
        %v3440 = vmul.f32 %v3400, %v3418
        %v3441 = vmul.f32 %v3401, %v3418
        %v3442 = vmul.f32 %v3402, %v3418
        %v3443 = vmul.f32 %v3403, %v3418
        %v3444 = vmul.f32 %v3404, %v3418
        %v3445 = vmul.f32 %v3405, %v3418
        %v3446 = vmul.f32 %v3406, %v3418
        %v3447 = vmul.f32 %v3407, %v3418
        %v3448 = vmul.f32 %v3408, %v3418
        %v3449 = vmul.f32 %v3409, %v3418
        %v3450 = vmul.f32 %v3410, %v3418
        %v3451 = vmul.f32 %v3411, %v3418
        %v3452 = vlaneseq
        %v3453 = vshrl.u32 %v3452, 7
        %v3454 = vsub.s32 0, %v3453
        %v3455 = vrot.slane %v372, %v3454
        %3457 = vrot.lane.b32.xlu0 %v3455, 8
        %v3458 = vpop.permute.xlu0 %3457
        %v3460 = vadd.f32 %v3420, %v3458
        %v3461 = vadd.f32 %v3421, %v3458
        %v3462 = vadd.f32 %v3422, %v3458
        %v3463 = vadd.f32 %v3423, %v3458
        %v3464 = vadd.f32 %v3424, %v3458
        %v3465 = vadd.f32 %v3425, %v3458
        %v3466 = vadd.f32 %v3426, %v3458
        %v3467 = vadd.f32 %v3427, %v3458
        %v3468 = vadd.f32 %v3428, %v3458
        %v3469 = vadd.f32 %v3429, %v3458
        %v3470 = vadd.f32 %v3430, %v3458
        %v3471 = vadd.f32 %v3431, %v3458
        %v3472 = vadd.f32 %v3432, %v3458
        %v3473 = vadd.f32 %v3433, %v3458
        %v3474 = vadd.f32 %v3434, %v3458
        %v3475 = vadd.f32 %v3435, %v3458
        %v3476 = vadd.f32 %v3436, %v3458
        %v3477 = vadd.f32 %v3437, %v3458
        %v3478 = vadd.f32 %v3438, %v3458
        %v3479 = vadd.f32 %v3439, %v3458
        %v3480 = vadd.f32 %v3440, %v3458
        %v3481 = vadd.f32 %v3441, %v3458
        %v3482 = vadd.f32 %v3442, %v3458
        %v3483 = vadd.f32 %v3443, %v3458
        %v3484 = vadd.f32 %v3444, %v3458
        %v3485 = vadd.f32 %v3445, %v3458
        %v3486 = vadd.f32 %v3446, %v3458
        %v3487 = vadd.f32 %v3447, %v3458
        %v3488 = vadd.f32 %v3448, %v3458
        %v3489 = vadd.f32 %v3449, %v3458
        %v3490 = vadd.f32 %v3450, %v3458
        %v3491 = vadd.f32 %v3451, %v3458
        %v3492 = vmax.f32 %v3460, 0.0
        %v3493 = vmax.f32 %v3461, 0.0
        %v3494 = vmax.f32 %v3462, 0.0
        %v3495 = vmax.f32 %v3463, 0.0
        %v3496 = vmax.f32 %v3464, 0.0
        %v3497 = vmax.f32 %v3465, 0.0
        %v3498 = vmax.f32 %v3466, 0.0
        %v3499 = vmax.f32 %v3467, 0.0
        %v3500 = vmax.f32 %v3468, 0.0
        %v3501 = vmax.f32 %v3469, 0.0
        %v3502 = vmax.f32 %v3470, 0.0
        %v3503 = vmax.f32 %v3471, 0.0
        %v3504 = vmax.f32 %v3472, 0.0
        %v3505 = vmax.f32 %v3473, 0.0
        %v3506 = vmax.f32 %v3474, 0.0
        %v3507 = vmax.f32 %v3475, 0.0
        %v3508 = vmax.f32 %v3476, 0.0
        %v3509 = vmax.f32 %v3477, 0.0
        %v3510 = vmax.f32 %v3478, 0.0
        %v3511 = vmax.f32 %v3479, 0.0
        %v3512 = vmax.f32 %v3480, 0.0
        %v3513 = vmax.f32 %v3481, 0.0
        %v3514 = vmax.f32 %v3482, 0.0
        %v3515 = vmax.f32 %v3483, 0.0
        %v3516 = vmax.f32 %v3484, 0.0
        %v3517 = vmax.f32 %v3485, 0.0
        %v3518 = vmax.f32 %v3486, 0.0
        %v3519 = vmax.f32 %v3487, 0.0
        %v3520 = vmax.f32 %v3488, 0.0
        %v3521 = vmax.f32 %v3489, 0.0
        %v3522 = vmax.f32 %v3490, 0.0
        %v3523 = vmax.f32 %v3491, 0.0
        %3556 = vrot.lane.b32.xlu0 %v3492, 120
        %v3557 = vpop.permute.xlu0 %3556
        %3558 = vrot.lane.b32.xlu0 %v3493, 120
        %v3559 = vpop.permute.xlu0 %3558
        %3560 = vrot.lane.b32.xlu0 %v3494, 120
        %v3561 = vpop.permute.xlu0 %3560
        %3562 = vrot.lane.b32.xlu0 %v3495, 120
        %v3563 = vpop.permute.xlu0 %3562
        %3564 = vrot.lane.b32.xlu0 %v3496, 120
        %v3565 = vpop.permute.xlu0 %3564
        %3566 = vrot.lane.b32.xlu0 %v3497, 120
        %v3567 = vpop.permute.xlu0 %3566
        %3568 = vrot.lane.b32.xlu0 %v3498, 120
        %v3569 = vpop.permute.xlu0 %3568
        %3570 = vrot.lane.b32.xlu0 %v3499, 120
        %v3571 = vpop.permute.xlu0 %3570
        %3572 = vrot.lane.b32.xlu0 %v3500, 120
        %v3573 = vpop.permute.xlu0 %3572
        %3574 = vrot.lane.b32.xlu0 %v3501, 120
        %v3575 = vpop.permute.xlu0 %3574
        %3576 = vrot.lane.b32.xlu0 %v3502, 120
        %v3577 = vpop.permute.xlu0 %3576
        %3578 = vrot.lane.b32.xlu0 %v3503, 120
        %v3579 = vpop.permute.xlu0 %3578
        %3580 = vrot.lane.b32.xlu0 %v3504, 120
        %v3581 = vpop.permute.xlu0 %3580
        %3582 = vrot.lane.b32.xlu0 %v3505, 120
        %v3583 = vpop.permute.xlu0 %3582
        %3584 = vrot.lane.b32.xlu0 %v3506, 120
        %v3585 = vpop.permute.xlu0 %3584
        %3586 = vrot.lane.b32.xlu0 %v3507, 120
        %v3587 = vpop.permute.xlu0 %3586
        %3588 = vrot.lane.b32.xlu0 %v3508, 120
        %v3589 = vpop.permute.xlu0 %3588
        %3590 = vrot.lane.b32.xlu0 %v3509, 120
        %v3591 = vpop.permute.xlu0 %3590
        %3592 = vrot.lane.b32.xlu0 %v3510, 120
        %v3593 = vpop.permute.xlu0 %3592
        %3594 = vrot.lane.b32.xlu0 %v3511, 120
        %v3595 = vpop.permute.xlu0 %3594
        %3596 = vrot.lane.b32.xlu0 %v3512, 120
        %v3597 = vpop.permute.xlu0 %3596
        %3598 = vrot.lane.b32.xlu0 %v3513, 120
        %v3599 = vpop.permute.xlu0 %3598
        %3600 = vrot.lane.b32.xlu0 %v3514, 120
        %v3601 = vpop.permute.xlu0 %3600
        %3602 = vrot.lane.b32.xlu0 %v3515, 120
        %v3603 = vpop.permute.xlu0 %3602
        %3604 = vrot.lane.b32.xlu0 %v3516, 120
        %v3605 = vpop.permute.xlu0 %3604
        %3606 = vrot.lane.b32.xlu0 %v3517, 120
        %v3607 = vpop.permute.xlu0 %3606
        %3608 = vrot.lane.b32.xlu0 %v3518, 120
        %v3609 = vpop.permute.xlu0 %3608
        %3610 = vrot.lane.b32.xlu0 %v3519, 120
        %v3611 = vpop.permute.xlu0 %3610
        %3612 = vrot.lane.b32.xlu0 %v3520, 120
        %v3613 = vpop.permute.xlu0 %3612
        %3614 = vrot.lane.b32.xlu0 %v3521, 120
        %v3615 = vpop.permute.xlu0 %3614
        %3616 = vrot.lane.b32.xlu0 %v3522, 120
        %v3617 = vpop.permute.xlu0 %3616
        %3618 = vrot.lane.b32.xlu0 %v3523, 120
        %v3619 = vpop.permute.xlu0 %3618
        %s3652 = scalar_lea.vmem [#allocation3], 24
        %3653 = vst.msk [vmem:[%s3652 + $0x1] sm:$0xff] %vm278, %v3557
        %3654 = vst.msk [vmem:[%s3652 + $0x9] sm:$0xff] %vm278, %v3559
        %3655 = vst.msk [vmem:[%s3652 + $0x19] sm:$0xff] %vm278, %v3561
        %3656 = vst.msk [vmem:[%s3652 + $0x21] sm:$0xff] %vm278, %v3563
        %3657 = vst.msk [vmem:[%s3652 + $0x31] sm:$0xff] %vm278, %v3565
        %3658 = vst.msk [vmem:[%s3652 + $0x39] sm:$0xff] %vm278, %v3567
        %3659 = vst.msk [vmem:[%s3652 + $0x49] sm:$0xff] %vm278, %v3569
        %3660 = vst.msk [vmem:[%s3652 + $0x51] sm:$0xff] %vm278, %v3571
        %3661 = vst.msk [vmem:[%s3652 + $0x61] sm:$0xff] %vm278, %v3573
        %3662 = vst.msk [vmem:[%s3652 + $0x69] sm:$0xff] %vm278, %v3575
        %3663 = vst.msk [vmem:[%s3652 + $0x79] sm:$0xff] %vm278, %v3577
        %3664 = vst.msk [vmem:[%s3652 + $0x81] sm:$0xff] %vm278, %v3579
        %3665 = vst.msk [vmem:[%s3652 + $0x91] sm:$0xff] %vm278, %v3581
        %3666 = vst.msk [vmem:[%s3652 + $0x99] sm:$0xff] %vm278, %v3583
        %3667 = vst.msk [vmem:[%s3652 + $0xa9] sm:$0xff] %vm278, %v3585
        %3668 = vst.msk [vmem:[%s3652 + $0xb1] sm:$0xff] %vm278, %v3587
        %3669 = vst.msk [vmem:[%s3652 + $0xc1] sm:$0xff] %vm278, %v3589
        %3670 = vst.msk [vmem:[%s3652 + $0xc9] sm:$0xff] %vm278, %v3591
        %3671 = vst.msk [vmem:[%s3652 + $0xd9] sm:$0xff] %vm278, %v3593
        %3672 = vst.msk [vmem:[%s3652 + $0xe1] sm:$0xff] %vm278, %v3595
        %3673 = vst.msk [vmem:[%s3652 + $0xf1] sm:$0xff] %vm278, %v3597
        %3674 = vst.msk [vmem:[%s3652 + $0xf9] sm:$0xff] %vm278, %v3599
        %3675 = vst.msk [vmem:[%s3652 + $0x109] sm:$0xff] %vm278, %v3601
        %3676 = vst.msk [vmem:[%s3652 + $0x111] sm:$0xff] %vm278, %v3603
        %3677 = vst.msk [vmem:[%s3652 + $0x121] sm:$0xff] %vm278, %v3605
        %3678 = vst.msk [vmem:[%s3652 + $0x129] sm:$0xff] %vm278, %v3607
        %3679 = vst.msk [vmem:[%s3652 + $0x139] sm:$0xff] %vm278, %v3609
        %3680 = vst.msk [vmem:[%s3652 + $0x141] sm:$0xff] %vm278, %v3611
        %3681 = vst.msk [vmem:[%s3652 + $0x151] sm:$0xff] %vm278, %v3613
        %3682 = vst.msk [vmem:[%s3652 + $0x159] sm:$0xff] %vm278, %v3615
        %3683 = vst.msk [vmem:[%s3652 + $0x169] sm:$0xff] %vm278, %v3617
        %3684 = vst.msk [vmem:[%s3652 + $0x171] sm:$0xff] %vm278, %v3619
        %v3685 = vld [vmem:[#allocation3] sm:$0xff]
        %v3686 = vld [vmem:[#allocation3 + $0x8] sm:$0xff]
        %v3687 = vld [vmem:[#allocation3 + $0x18] sm:$0xff]
        %v3688 = vld [vmem:[#allocation3 + $0x20] sm:$0xff]
        %v3689 = vld [vmem:[#allocation3 + $0x30] sm:$0xff]
        %v3690 = vld [vmem:[#allocation3 + $0x38] sm:$0xff]
        %v3691 = vld [vmem:[#allocation3 + $0x48] sm:$0xff]
        %v3692 = vld [vmem:[#allocation3 + $0x50] sm:$0xff]
        %v3693 = vld [vmem:[#allocation3 + $0x60] sm:$0xff]
        %v3694 = vld [vmem:[#allocation3 + $0x68] sm:$0xff]
        %v3695 = vld [vmem:[#allocation3 + $0x78] sm:$0xff]
        %v3696 = vld [vmem:[#allocation3 + $0x80] sm:$0xff]
        %v3697 = vld [vmem:[#allocation3 + $0x90] sm:$0xff]
        %v3698 = vld [vmem:[#allocation3 + $0x98] sm:$0xff]
        %v3699 = vld [vmem:[#allocation3 + $0xa8] sm:$0xff]
        %v3700 = vld [vmem:[#allocation3 + $0xb0] sm:$0xff]
        %v3701 = vld [vmem:[#allocation3 + $0xc0] sm:$0xff]
        %v3702 = vld [vmem:[#allocation3 + $0xc8] sm:$0xff]
        %v3703 = vld [vmem:[#allocation3 + $0xd8] sm:$0xff]
        %v3704 = vld [vmem:[#allocation3 + $0xe0] sm:$0xff]
        %v3705 = vld [vmem:[#allocation3 + $0xf0] sm:$0xff]
        %v3706 = vld [vmem:[#allocation3 + $0xf8] sm:$0xff]
        %v3707 = vld [vmem:[#allocation3 + $0x108] sm:$0xff]
        %v3708 = vld [vmem:[#allocation3 + $0x110] sm:$0xff]
        %v3709 = vld [vmem:[#allocation3 + $0x120] sm:$0xff]
        %v3710 = vld [vmem:[#allocation3 + $0x128] sm:$0xff]
        %v3711 = vld [vmem:[#allocation3 + $0x138] sm:$0xff]
        %v3712 = vld [vmem:[#allocation3 + $0x140] sm:$0xff]
        %v3713 = vld [vmem:[#allocation3 + $0x150] sm:$0xff]
        %v3714 = vld [vmem:[#allocation3 + $0x158] sm:$0xff]
        %v3715 = vld [vmem:[#allocation3 + $0x168] sm:$0xff]
        %v3716 = vld [vmem:[#allocation3 + $0x170] sm:$0xff]
        %v3717 = vld [vmem:[#allocation3 + $0x1] sm:$0xff]
        %v3718 = vld [vmem:[#allocation3 + $0x9] sm:$0xff]
        %v3719 = vld [vmem:[#allocation3 + $0x19] sm:$0xff]
        %v3720 = vld [vmem:[#allocation3 + $0x21] sm:$0xff]
        %v3721 = vld [vmem:[#allocation3 + $0x31] sm:$0xff]
        %v3722 = vld [vmem:[#allocation3 + $0x39] sm:$0xff]
        %v3723 = vld [vmem:[#allocation3 + $0x49] sm:$0xff]
        %v3724 = vld [vmem:[#allocation3 + $0x51] sm:$0xff]
        %v3725 = vld [vmem:[#allocation3 + $0x61] sm:$0xff]
        %v3726 = vld [vmem:[#allocation3 + $0x69] sm:$0xff]
        %v3727 = vld [vmem:[#allocation3 + $0x79] sm:$0xff]
        %v3728 = vld [vmem:[#allocation3 + $0x81] sm:$0xff]
        %v3729 = vld [vmem:[#allocation3 + $0x91] sm:$0xff]
        %v3730 = vld [vmem:[#allocation3 + $0x99] sm:$0xff]
        %v3731 = vld [vmem:[#allocation3 + $0xa9] sm:$0xff]
        %v3732 = vld [vmem:[#allocation3 + $0xb1] sm:$0xff]
        %v3733 = vld [vmem:[#allocation3 + $0xc1] sm:$0xff]
        %v3734 = vld [vmem:[#allocation3 + $0xc9] sm:$0xff]
        %v3735 = vld [vmem:[#allocation3 + $0xd9] sm:$0xff]
        %v3736 = vld [vmem:[#allocation3 + $0xe1] sm:$0xff]
        %v3737 = vld [vmem:[#allocation3 + $0xf1] sm:$0xff]
        %v3738 = vld [vmem:[#allocation3 + $0xf9] sm:$0xff]
        %v3739 = vld [vmem:[#allocation3 + $0x109] sm:$0xff]
        %v3740 = vld [vmem:[#allocation3 + $0x111] sm:$0xff]
        %v3741 = vld [vmem:[#allocation3 + $0x121] sm:$0xff]
        %v3742 = vld [vmem:[#allocation3 + $0x129] sm:$0xff]
        %v3743 = vld [vmem:[#allocation3 + $0x139] sm:$0xff]
        %v3744 = vld [vmem:[#allocation3 + $0x141] sm:$0xff]
        %v3745 = vld [vmem:[#allocation3 + $0x151] sm:$0xff]
        %v3746 = vld [vmem:[#allocation3 + $0x159] sm:$0xff]
        %v3747 = vld [vmem:[#allocation3 + $0x169] sm:$0xff]
        %v3748 = vld [vmem:[#allocation3 + $0x171] sm:$0xff]
        %v3749 = vld [vmem:[#allocation3 + $0x2] sm:$0xff]
        %v3750 = vld [vmem:[#allocation3 + $0xa] sm:$0xff]
        %v3751 = vld [vmem:[#allocation3 + $0x1a] sm:$0xff]
        %v3752 = vld [vmem:[#allocation3 + $0x22] sm:$0xff]
        %v3753 = vld [vmem:[#allocation3 + $0x32] sm:$0xff]
        %v3754 = vld [vmem:[#allocation3 + $0x3a] sm:$0xff]
        %v3755 = vld [vmem:[#allocation3 + $0x4a] sm:$0xff]
        %v3756 = vld [vmem:[#allocation3 + $0x52] sm:$0xff]
        %v3757 = vld [vmem:[#allocation3 + $0x62] sm:$0xff]
        %v3758 = vld [vmem:[#allocation3 + $0x6a] sm:$0xff]
        %v3759 = vld [vmem:[#allocation3 + $0x7a] sm:$0xff]
        %v3760 = vld [vmem:[#allocation3 + $0x82] sm:$0xff]
        %v3761 = vld [vmem:[#allocation3 + $0x92] sm:$0xff]
        %v3762 = vld [vmem:[#allocation3 + $0x9a] sm:$0xff]
        %v3763 = vld [vmem:[#allocation3 + $0xaa] sm:$0xff]
        %v3764 = vld [vmem:[#allocation3 + $0xb2] sm:$0xff]
        %v3765 = vld [vmem:[#allocation3 + $0xc2] sm:$0xff]
        %v3766 = vld [vmem:[#allocation3 + $0xca] sm:$0xff]
        %v3767 = vld [vmem:[#allocation3 + $0xda] sm:$0xff]
        %v3768 = vld [vmem:[#allocation3 + $0xe2] sm:$0xff]
        %v3769 = vld [vmem:[#allocation3 + $0xf2] sm:$0xff]
        %v3770 = vld [vmem:[#allocation3 + $0xfa] sm:$0xff]
        %v3771 = vld [vmem:[#allocation3 + $0x10a] sm:$0xff]
        %v3772 = vld [vmem:[#allocation3 + $0x112] sm:$0xff]
        %v3773 = vld [vmem:[#allocation3 + $0x122] sm:$0xff]
        %v3774 = vld [vmem:[#allocation3 + $0x12a] sm:$0xff]
        %v3775 = vld [vmem:[#allocation3 + $0x13a] sm:$0xff]
        %v3776 = vld [vmem:[#allocation3 + $0x142] sm:$0xff]
        %v3777 = vld [vmem:[#allocation3 + $0x152] sm:$0xff]
        %v3778 = vld [vmem:[#allocation3 + $0x15a] sm:$0xff]
        %v3779 = vld [vmem:[#allocation3 + $0x16a] sm:$0xff]
        %v3780 = vld [vmem:[#allocation3 + $0x172] sm:$0xff]
        %v3781 = vld [vmem:[%s3652] sm:$0xff]
        %v3782 = vld [vmem:[%s3652 + $0x8] sm:$0xff]
        %v3783 = vld [vmem:[%s3652 + $0x18] sm:$0xff]
        %v3784 = vld [vmem:[%s3652 + $0x20] sm:$0xff]
        %v3785 = vld [vmem:[%s3652 + $0x30] sm:$0xff]
        %v3786 = vld [vmem:[%s3652 + $0x38] sm:$0xff]
        %v3787 = vld [vmem:[%s3652 + $0x48] sm:$0xff]
        %v3788 = vld [vmem:[%s3652 + $0x50] sm:$0xff]
        %v3789 = vld [vmem:[%s3652 + $0x60] sm:$0xff]
        %v3790 = vld [vmem:[%s3652 + $0x68] sm:$0xff]
        %v3791 = vld [vmem:[%s3652 + $0x78] sm:$0xff]
        %v3792 = vld [vmem:[%s3652 + $0x80] sm:$0xff]
        %v3793 = vld [vmem:[%s3652 + $0x90] sm:$0xff]
        %v3794 = vld [vmem:[%s3652 + $0x98] sm:$0xff]
        %v3795 = vld [vmem:[%s3652 + $0xa8] sm:$0xff]
        %v3796 = vld [vmem:[%s3652 + $0xb0] sm:$0xff]
        %v3797 = vld [vmem:[%s3652 + $0xc0] sm:$0xff]
        %v3798 = vld [vmem:[%s3652 + $0xc8] sm:$0xff]
        %v3799 = vld [vmem:[%s3652 + $0xd8] sm:$0xff]
        %v3800 = vld [vmem:[%s3652 + $0xe0] sm:$0xff]
        %v3801 = vld [vmem:[%s3652 + $0xf0] sm:$0xff]
        %v3802 = vld [vmem:[%s3652 + $0xf8] sm:$0xff]
        %v3803 = vld [vmem:[%s3652 + $0x108] sm:$0xff]
        %v3804 = vld [vmem:[%s3652 + $0x110] sm:$0xff]
        %v3805 = vld [vmem:[%s3652 + $0x120] sm:$0xff]
        %v3806 = vld [vmem:[%s3652 + $0x128] sm:$0xff]
        %v3807 = vld [vmem:[%s3652 + $0x138] sm:$0xff]
        %v3808 = vld [vmem:[%s3652 + $0x140] sm:$0xff]
        %v3809 = vld [vmem:[%s3652 + $0x150] sm:$0xff]
        %v3810 = vld [vmem:[%s3652 + $0x158] sm:$0xff]
        %v3811 = vld [vmem:[%s3652 + $0x168] sm:$0xff]
        %v3812 = vld [vmem:[%s3652 + $0x170] sm:$0xff]
        %v3813 = vld [vmem:[%s3652 + $0x1] sm:$0xff]
        %v3814 = vld [vmem:[%s3652 + $0x9] sm:$0xff]
        %v3815 = vld [vmem:[%s3652 + $0x19] sm:$0xff]
        %v3816 = vld [vmem:[%s3652 + $0x21] sm:$0xff]
        %v3817 = vld [vmem:[%s3652 + $0x31] sm:$0xff]
        %v3818 = vld [vmem:[%s3652 + $0x39] sm:$0xff]
        %v3819 = vld [vmem:[%s3652 + $0x49] sm:$0xff]
        %v3820 = vld [vmem:[%s3652 + $0x51] sm:$0xff]
        %v3821 = vld [vmem:[%s3652 + $0x61] sm:$0xff]
        %v3822 = vld [vmem:[%s3652 + $0x69] sm:$0xff]
        %v3823 = vld [vmem:[%s3652 + $0x79] sm:$0xff]
        %v3824 = vld [vmem:[%s3652 + $0x81] sm:$0xff]
        %v3825 = vld [vmem:[%s3652 + $0x91] sm:$0xff]
        %v3826 = vld [vmem:[%s3652 + $0x99] sm:$0xff]
        %v3827 = vld [vmem:[%s3652 + $0xa9] sm:$0xff]
        %v3828 = vld [vmem:[%s3652 + $0xb1] sm:$0xff]
        %v3829 = vld [vmem:[%s3652 + $0xc1] sm:$0xff]
        %v3830 = vld [vmem:[%s3652 + $0xc9] sm:$0xff]
        %v3831 = vld [vmem:[%s3652 + $0xd9] sm:$0xff]
        %v3832 = vld [vmem:[%s3652 + $0xe1] sm:$0xff]
        %v3833 = vld [vmem:[%s3652 + $0xf1] sm:$0xff]
        %v3834 = vld [vmem:[%s3652 + $0xf9] sm:$0xff]
        %v3835 = vld [vmem:[%s3652 + $0x109] sm:$0xff]
        %v3836 = vld [vmem:[%s3652 + $0x111] sm:$0xff]
        %v3837 = vld [vmem:[%s3652 + $0x121] sm:$0xff]
        %v3838 = vld [vmem:[%s3652 + $0x129] sm:$0xff]
        %v3839 = vld [vmem:[%s3652 + $0x139] sm:$0xff]
        %v3840 = vld [vmem:[%s3652 + $0x141] sm:$0xff]
        %v3841 = vld [vmem:[%s3652 + $0x151] sm:$0xff]
        %v3842 = vld [vmem:[%s3652 + $0x159] sm:$0xff]
        %v3843 = vld [vmem:[%s3652 + $0x169] sm:$0xff]
        %v3844 = vld [vmem:[%s3652 + $0x171] sm:$0xff]
        %v3845 = vld [vmem:[%s3652 + $0x2] sm:$0xff]
        %v3846 = vld [vmem:[%s3652 + $0xa] sm:$0xff]
        %v3847 = vld [vmem:[%s3652 + $0x1a] sm:$0xff]
        %v3848 = vld [vmem:[%s3652 + $0x22] sm:$0xff]
        %v3849 = vld [vmem:[%s3652 + $0x32] sm:$0xff]
        %v3850 = vld [vmem:[%s3652 + $0x3a] sm:$0xff]
        %v3851 = vld [vmem:[%s3652 + $0x4a] sm:$0xff]
        %v3852 = vld [vmem:[%s3652 + $0x52] sm:$0xff]
        %v3853 = vld [vmem:[%s3652 + $0x62] sm:$0xff]
        %v3854 = vld [vmem:[%s3652 + $0x6a] sm:$0xff]
        %v3855 = vld [vmem:[%s3652 + $0x7a] sm:$0xff]
        %v3856 = vld [vmem:[%s3652 + $0x82] sm:$0xff]
        %v3857 = vld [vmem:[%s3652 + $0x92] sm:$0xff]
        %v3858 = vld [vmem:[%s3652 + $0x9a] sm:$0xff]
        %v3859 = vld [vmem:[%s3652 + $0xaa] sm:$0xff]
        %v3860 = vld [vmem:[%s3652 + $0xb2] sm:$0xff]
        %v3861 = vld [vmem:[%s3652 + $0xc2] sm:$0xff]
        %v3862 = vld [vmem:[%s3652 + $0xca] sm:$0xff]
        %v3863 = vld [vmem:[%s3652 + $0xda] sm:$0xff]
        %v3864 = vld [vmem:[%s3652 + $0xe2] sm:$0xff]
        %v3865 = vld [vmem:[%s3652 + $0xf2] sm:$0xff]
        %v3866 = vld [vmem:[%s3652 + $0xfa] sm:$0xff]
        %v3867 = vld [vmem:[%s3652 + $0x10a] sm:$0xff]
        %v3868 = vld [vmem:[%s3652 + $0x112] sm:$0xff]
        %v3869 = vld [vmem:[%s3652 + $0x122] sm:$0xff]
        %v3870 = vld [vmem:[%s3652 + $0x12a] sm:$0xff]
        %v3871 = vld [vmem:[%s3652 + $0x13a] sm:$0xff]
        %v3872 = vld [vmem:[%s3652 + $0x142] sm:$0xff]
        %v3873 = vld [vmem:[%s3652 + $0x152] sm:$0xff]
        %v3874 = vld [vmem:[%s3652 + $0x15a] sm:$0xff]
        %v3875 = vld [vmem:[%s3652 + $0x16a] sm:$0xff]
        %v3876 = vld [vmem:[%s3652 + $0x172] sm:$0xff]
        %s3877 = scalar_lea.vmem [#allocation3], 48
        %v3878 = vld [vmem:[%s3877] sm:$0xff]
        %v3879 = vld [vmem:[%s3877 + $0x8] sm:$0xff]
        %v3880 = vld [vmem:[%s3877 + $0x18] sm:$0xff]
        %v3881 = vld [vmem:[%s3877 + $0x20] sm:$0xff]
        %v3882 = vld [vmem:[%s3877 + $0x30] sm:$0xff]
        %v3883 = vld [vmem:[%s3877 + $0x38] sm:$0xff]
        %v3884 = vld [vmem:[%s3877 + $0x48] sm:$0xff]
        %v3885 = vld [vmem:[%s3877 + $0x50] sm:$0xff]
        %v3886 = vld [vmem:[%s3877 + $0x60] sm:$0xff]
        %v3887 = vld [vmem:[%s3877 + $0x68] sm:$0xff]
        %v3888 = vld [vmem:[%s3877 + $0x78] sm:$0xff]
        %v3889 = vld [vmem:[%s3877 + $0x80] sm:$0xff]
        %v3890 = vld [vmem:[%s3877 + $0x90] sm:$0xff]
        %v3891 = vld [vmem:[%s3877 + $0x98] sm:$0xff]
        %v3892 = vld [vmem:[%s3877 + $0xa8] sm:$0xff]
        %v3893 = vld [vmem:[%s3877 + $0xb0] sm:$0xff]
        %v3894 = vld [vmem:[%s3877 + $0xc0] sm:$0xff]
        %v3895 = vld [vmem:[%s3877 + $0xc8] sm:$0xff]
        %v3896 = vld [vmem:[%s3877 + $0xd8] sm:$0xff]
        %v3897 = vld [vmem:[%s3877 + $0xe0] sm:$0xff]
        %v3898 = vld [vmem:[%s3877 + $0xf0] sm:$0xff]
        %v3899 = vld [vmem:[%s3877 + $0xf8] sm:$0xff]
        %v3900 = vld [vmem:[%s3877 + $0x108] sm:$0xff]
        %v3901 = vld [vmem:[%s3877 + $0x110] sm:$0xff]
        %v3902 = vld [vmem:[%s3877 + $0x120] sm:$0xff]
        %v3903 = vld [vmem:[%s3877 + $0x128] sm:$0xff]
        %v3904 = vld [vmem:[%s3877 + $0x138] sm:$0xff]
        %v3905 = vld [vmem:[%s3877 + $0x140] sm:$0xff]
        %v3906 = vld [vmem:[%s3877 + $0x150] sm:$0xff]
        %v3907 = vld [vmem:[%s3877 + $0x158] sm:$0xff]
        %v3908 = vld [vmem:[%s3877 + $0x168] sm:$0xff]
        %v3909 = vld [vmem:[%s3877 + $0x170] sm:$0xff]
        %v3910 = vld [vmem:[%s3877 + $0x1] sm:$0xff]
        %v3911 = vld [vmem:[%s3877 + $0x9] sm:$0xff]
        %v3912 = vld [vmem:[%s3877 + $0x19] sm:$0xff]
        %v3913 = vld [vmem:[%s3877 + $0x21] sm:$0xff]
        %v3914 = vld [vmem:[%s3877 + $0x31] sm:$0xff]
        %v3915 = vld [vmem:[%s3877 + $0x39] sm:$0xff]
        %v3916 = vld [vmem:[%s3877 + $0x49] sm:$0xff]
        %v3917 = vld [vmem:[%s3877 + $0x51] sm:$0xff]
        %v3918 = vld [vmem:[%s3877 + $0x61] sm:$0xff]
        %v3919 = vld [vmem:[%s3877 + $0x69] sm:$0xff]
        %v3920 = vld [vmem:[%s3877 + $0x79] sm:$0xff]
        %v3921 = vld [vmem:[%s3877 + $0x81] sm:$0xff]
        %v3922 = vld [vmem:[%s3877 + $0x91] sm:$0xff]
        %v3923 = vld [vmem:[%s3877 + $0x99] sm:$0xff]
        %v3924 = vld [vmem:[%s3877 + $0xa9] sm:$0xff]
        %v3925 = vld [vmem:[%s3877 + $0xb1] sm:$0xff]
        %v3926 = vld [vmem:[%s3877 + $0xc1] sm:$0xff]
        %v3927 = vld [vmem:[%s3877 + $0xc9] sm:$0xff]
        %v3928 = vld [vmem:[%s3877 + $0xd9] sm:$0xff]
        %v3929 = vld [vmem:[%s3877 + $0xe1] sm:$0xff]
        %v3930 = vld [vmem:[%s3877 + $0xf1] sm:$0xff]
        %v3931 = vld [vmem:[%s3877 + $0xf9] sm:$0xff]
        %v3932 = vld [vmem:[%s3877 + $0x109] sm:$0xff]
        %v3933 = vld [vmem:[%s3877 + $0x111] sm:$0xff]
        %v3934 = vld [vmem:[%s3877 + $0x121] sm:$0xff]
        %v3935 = vld [vmem:[%s3877 + $0x129] sm:$0xff]
        %v3936 = vld [vmem:[%s3877 + $0x139] sm:$0xff]
        %v3937 = vld [vmem:[%s3877 + $0x141] sm:$0xff]
        %v3938 = vld [vmem:[%s3877 + $0x151] sm:$0xff]
        %v3939 = vld [vmem:[%s3877 + $0x159] sm:$0xff]
        %v3940 = vld [vmem:[%s3877 + $0x169] sm:$0xff]
        %v3941 = vld [vmem:[%s3877 + $0x171] sm:$0xff]
        %v3942 = vld [vmem:[%s3877 + $0x2] sm:$0xff]
        %v3943 = vld [vmem:[%s3877 + $0xa] sm:$0xff]
        %v3944 = vld [vmem:[%s3877 + $0x1a] sm:$0xff]
        %v3945 = vld [vmem:[%s3877 + $0x22] sm:$0xff]
        %v3946 = vld [vmem:[%s3877 + $0x32] sm:$0xff]
        %v3947 = vld [vmem:[%s3877 + $0x3a] sm:$0xff]
        %v3948 = vld [vmem:[%s3877 + $0x4a] sm:$0xff]
        %v3949 = vld [vmem:[%s3877 + $0x52] sm:$0xff]
        %v3950 = vld [vmem:[%s3877 + $0x62] sm:$0xff]
        %v3951 = vld [vmem:[%s3877 + $0x6a] sm:$0xff]
        %v3952 = vld [vmem:[%s3877 + $0x7a] sm:$0xff]
        %v3953 = vld [vmem:[%s3877 + $0x82] sm:$0xff]
        %v3954 = vld [vmem:[%s3877 + $0x92] sm:$0xff]
        %v3955 = vld [vmem:[%s3877 + $0x9a] sm:$0xff]
        %v3956 = vld [vmem:[%s3877 + $0xaa] sm:$0xff]
        %v3957 = vld [vmem:[%s3877 + $0xb2] sm:$0xff]
        %v3958 = vld [vmem:[%s3877 + $0xc2] sm:$0xff]
        %v3959 = vld [vmem:[%s3877 + $0xca] sm:$0xff]
        %v3960 = vld [vmem:[%s3877 + $0xda] sm:$0xff]
        %v3961 = vld [vmem:[%s3877 + $0xe2] sm:$0xff]
        %v3962 = vld [vmem:[%s3877 + $0xf2] sm:$0xff]
        %v3963 = vld [vmem:[%s3877 + $0xfa] sm:$0xff]
        %v3964 = vld [vmem:[%s3877 + $0x10a] sm:$0xff]
        %v3965 = vld [vmem:[%s3877 + $0x112] sm:$0xff]
        %v3966 = vld [vmem:[%s3877 + $0x122] sm:$0xff]
        %v3967 = vld [vmem:[%s3877 + $0x12a] sm:$0xff]
        %v3968 = vld [vmem:[%s3877 + $0x13a] sm:$0xff]
        %v3969 = vld [vmem:[%s3877 + $0x142] sm:$0xff]
        %v3970 = vld [vmem:[%s3877 + $0x152] sm:$0xff]
        %v3971 = vld [vmem:[%s3877 + $0x15a] sm:$0xff]
        %v3972 = vld [vmem:[%s3877 + $0x16a] sm:$0xff]
        %v3973 = vld [vmem:[%s3877 + $0x172] sm:$0xff]
        %4006 = vrot.lane.b32.xlu0 %v3717, 8
        %v4007 = vpop.permute.xlu0 %4006
        %4008 = vrot.lane.b32.xlu0 %v3718, 8
        %v4009 = vpop.permute.xlu0 %4008
        %4010 = vrot.lane.b32.xlu0 %v3719, 8
        %v4011 = vpop.permute.xlu0 %4010
        %4012 = vrot.lane.b32.xlu0 %v3720, 8
        %v4013 = vpop.permute.xlu0 %4012
        %4014 = vrot.lane.b32.xlu0 %v3721, 8
        %v4015 = vpop.permute.xlu0 %4014
        %4016 = vrot.lane.b32.xlu0 %v3722, 8
        %v4017 = vpop.permute.xlu0 %4016
        %4018 = vrot.lane.b32.xlu0 %v3723, 8
        %v4019 = vpop.permute.xlu0 %4018
        %4020 = vrot.lane.b32.xlu0 %v3724, 8
        %v4021 = vpop.permute.xlu0 %4020
        %4022 = vrot.lane.b32.xlu0 %v3725, 8
        %v4023 = vpop.permute.xlu0 %4022
        %4024 = vrot.lane.b32.xlu0 %v3726, 8
        %v4025 = vpop.permute.xlu0 %4024
        %4026 = vrot.lane.b32.xlu0 %v3727, 8
        %v4027 = vpop.permute.xlu0 %4026
        %4028 = vrot.lane.b32.xlu0 %v3728, 8
        %v4029 = vpop.permute.xlu0 %4028
        %4030 = vrot.lane.b32.xlu0 %v3729, 8
        %v4031 = vpop.permute.xlu0 %4030
        %4032 = vrot.lane.b32.xlu0 %v3730, 8
        %v4033 = vpop.permute.xlu0 %4032
        %4034 = vrot.lane.b32.xlu0 %v3731, 8
        %v4035 = vpop.permute.xlu0 %4034
        %4036 = vrot.lane.b32.xlu0 %v3732, 8
        %v4037 = vpop.permute.xlu0 %4036
        %4038 = vrot.lane.b32.xlu0 %v3733, 8
        %v4039 = vpop.permute.xlu0 %4038
        %4040 = vrot.lane.b32.xlu0 %v3734, 8
        %v4041 = vpop.permute.xlu0 %4040
        %4042 = vrot.lane.b32.xlu0 %v3735, 8
        %v4043 = vpop.permute.xlu0 %4042
        %4044 = vrot.lane.b32.xlu0 %v3736, 8
        %v4045 = vpop.permute.xlu0 %4044
        %4046 = vrot.lane.b32.xlu0 %v3737, 8
        %v4047 = vpop.permute.xlu0 %4046
        %4048 = vrot.lane.b32.xlu0 %v3738, 8
        %v4049 = vpop.permute.xlu0 %4048
        %4050 = vrot.lane.b32.xlu0 %v3739, 8
        %v4051 = vpop.permute.xlu0 %4050
        %4052 = vrot.lane.b32.xlu0 %v3740, 8
        %v4053 = vpop.permute.xlu0 %4052
        %4054 = vrot.lane.b32.xlu0 %v3741, 8
        %v4055 = vpop.permute.xlu0 %4054
        %4056 = vrot.lane.b32.xlu0 %v3742, 8
        %v4057 = vpop.permute.xlu0 %4056
        %4058 = vrot.lane.b32.xlu0 %v3743, 8
        %v4059 = vpop.permute.xlu0 %4058
        %4060 = vrot.lane.b32.xlu0 %v3744, 8
        %v4061 = vpop.permute.xlu0 %4060
        %4062 = vrot.lane.b32.xlu0 %v3745, 8
        %v4063 = vpop.permute.xlu0 %4062
        %4064 = vrot.lane.b32.xlu0 %v3746, 8
        %v4065 = vpop.permute.xlu0 %4064
        %4066 = vrot.lane.b32.xlu0 %v3747, 8
        %v4067 = vpop.permute.xlu0 %4066
        %4068 = vrot.lane.b32.xlu0 %v3748, 8
        %v4069 = vpop.permute.xlu0 %4068
        %4134 = vrot.lane.b32.xlu0 %v3749, 16
        %v4135 = vpop.permute.xlu0 %4134
        %4136 = vrot.lane.b32.xlu0 %v3750, 16
        %v4137 = vpop.permute.xlu0 %4136
        %4138 = vrot.lane.b32.xlu0 %v3751, 16
        %v4139 = vpop.permute.xlu0 %4138
        %4140 = vrot.lane.b32.xlu0 %v3752, 16
        %v4141 = vpop.permute.xlu0 %4140
        %4142 = vrot.lane.b32.xlu0 %v3753, 16
        %v4143 = vpop.permute.xlu0 %4142
        %4144 = vrot.lane.b32.xlu0 %v3754, 16
        %v4145 = vpop.permute.xlu0 %4144
        %4146 = vrot.lane.b32.xlu0 %v3755, 16
        %v4147 = vpop.permute.xlu0 %4146
        %4148 = vrot.lane.b32.xlu0 %v3756, 16
        %v4149 = vpop.permute.xlu0 %4148
        %4150 = vrot.lane.b32.xlu0 %v3757, 16
        %v4151 = vpop.permute.xlu0 %4150
        %4152 = vrot.lane.b32.xlu0 %v3758, 16
        %v4153 = vpop.permute.xlu0 %4152
        %4154 = vrot.lane.b32.xlu0 %v3759, 16
        %v4155 = vpop.permute.xlu0 %4154
        %4156 = vrot.lane.b32.xlu0 %v3760, 16
        %v4157 = vpop.permute.xlu0 %4156
        %4158 = vrot.lane.b32.xlu0 %v3761, 16
        %v4159 = vpop.permute.xlu0 %4158
        %4160 = vrot.lane.b32.xlu0 %v3762, 16
        %v4161 = vpop.permute.xlu0 %4160
        %4162 = vrot.lane.b32.xlu0 %v3763, 16
        %v4163 = vpop.permute.xlu0 %4162
        %4164 = vrot.lane.b32.xlu0 %v3764, 16
        %v4165 = vpop.permute.xlu0 %4164
        %4166 = vrot.lane.b32.xlu0 %v3765, 16
        %v4167 = vpop.permute.xlu0 %4166
        %4168 = vrot.lane.b32.xlu0 %v3766, 16
        %v4169 = vpop.permute.xlu0 %4168
        %4170 = vrot.lane.b32.xlu0 %v3767, 16
        %v4171 = vpop.permute.xlu0 %4170
        %4172 = vrot.lane.b32.xlu0 %v3768, 16
        %v4173 = vpop.permute.xlu0 %4172
        %4174 = vrot.lane.b32.xlu0 %v3769, 16
        %v4175 = vpop.permute.xlu0 %4174
        %4176 = vrot.lane.b32.xlu0 %v3770, 16
        %v4177 = vpop.permute.xlu0 %4176
        %4178 = vrot.lane.b32.xlu0 %v3771, 16
        %v4179 = vpop.permute.xlu0 %4178
        %4180 = vrot.lane.b32.xlu0 %v3772, 16
        %v4181 = vpop.permute.xlu0 %4180
        %4182 = vrot.lane.b32.xlu0 %v3773, 16
        %v4183 = vpop.permute.xlu0 %4182
        %4184 = vrot.lane.b32.xlu0 %v3774, 16
        %v4185 = vpop.permute.xlu0 %4184
        %4186 = vrot.lane.b32.xlu0 %v3775, 16
        %v4187 = vpop.permute.xlu0 %4186
        %4188 = vrot.lane.b32.xlu0 %v3776, 16
        %v4189 = vpop.permute.xlu0 %4188
        %4190 = vrot.lane.b32.xlu0 %v3777, 16
        %v4191 = vpop.permute.xlu0 %4190
        %4192 = vrot.lane.b32.xlu0 %v3778, 16
        %v4193 = vpop.permute.xlu0 %4192
        %4194 = vrot.lane.b32.xlu0 %v3779, 16
        %v4195 = vpop.permute.xlu0 %4194
        %4196 = vrot.lane.b32.xlu0 %v3780, 16
        %v4197 = vpop.permute.xlu0 %4196
        %4262 = vrot.lane.b32.xlu0 %v3781, 24
        %v4263 = vpop.permute.xlu0 %4262
        %4264 = vrot.lane.b32.xlu0 %v3782, 24
        %v4265 = vpop.permute.xlu0 %4264
        %4266 = vrot.lane.b32.xlu0 %v3783, 24
        %v4267 = vpop.permute.xlu0 %4266
        %4268 = vrot.lane.b32.xlu0 %v3784, 24
        %v4269 = vpop.permute.xlu0 %4268
        %4270 = vrot.lane.b32.xlu0 %v3785, 24
        %v4271 = vpop.permute.xlu0 %4270
        %4272 = vrot.lane.b32.xlu0 %v3786, 24
        %v4273 = vpop.permute.xlu0 %4272
        %4274 = vrot.lane.b32.xlu0 %v3787, 24
        %v4275 = vpop.permute.xlu0 %4274
        %4276 = vrot.lane.b32.xlu0 %v3788, 24
        %v4277 = vpop.permute.xlu0 %4276
        %4278 = vrot.lane.b32.xlu0 %v3789, 24
        %v4279 = vpop.permute.xlu0 %4278
        %4280 = vrot.lane.b32.xlu0 %v3790, 24
        %v4281 = vpop.permute.xlu0 %4280
        %4282 = vrot.lane.b32.xlu0 %v3791, 24
        %v4283 = vpop.permute.xlu0 %4282
        %4284 = vrot.lane.b32.xlu0 %v3792, 24
        %v4285 = vpop.permute.xlu0 %4284
        %4286 = vrot.lane.b32.xlu0 %v3793, 24
        %v4287 = vpop.permute.xlu0 %4286
        %4288 = vrot.lane.b32.xlu0 %v3794, 24
        %v4289 = vpop.permute.xlu0 %4288
        %4290 = vrot.lane.b32.xlu0 %v3795, 24
        %v4291 = vpop.permute.xlu0 %4290
        %4292 = vrot.lane.b32.xlu0 %v3796, 24
        %v4293 = vpop.permute.xlu0 %4292
        %4294 = vrot.lane.b32.xlu0 %v3797, 24
        %v4295 = vpop.permute.xlu0 %4294
        %4296 = vrot.lane.b32.xlu0 %v3798, 24
        %v4297 = vpop.permute.xlu0 %4296
        %4298 = vrot.lane.b32.xlu0 %v3799, 24
        %v4299 = vpop.permute.xlu0 %4298
        %4300 = vrot.lane.b32.xlu0 %v3800, 24
        %v4301 = vpop.permute.xlu0 %4300
        %4302 = vrot.lane.b32.xlu0 %v3801, 24
        %v4303 = vpop.permute.xlu0 %4302
        %4304 = vrot.lane.b32.xlu0 %v3802, 24
        %v4305 = vpop.permute.xlu0 %4304
        %4306 = vrot.lane.b32.xlu0 %v3803, 24
        %v4307 = vpop.permute.xlu0 %4306
        %4308 = vrot.lane.b32.xlu0 %v3804, 24
        %v4309 = vpop.permute.xlu0 %4308
        %4310 = vrot.lane.b32.xlu0 %v3805, 24
        %v4311 = vpop.permute.xlu0 %4310
        %4312 = vrot.lane.b32.xlu0 %v3806, 24
        %v4313 = vpop.permute.xlu0 %4312
        %4314 = vrot.lane.b32.xlu0 %v3807, 24
        %v4315 = vpop.permute.xlu0 %4314
        %4316 = vrot.lane.b32.xlu0 %v3808, 24
        %v4317 = vpop.permute.xlu0 %4316
        %4318 = vrot.lane.b32.xlu0 %v3809, 24
        %v4319 = vpop.permute.xlu0 %4318
        %4320 = vrot.lane.b32.xlu0 %v3810, 24
        %v4321 = vpop.permute.xlu0 %4320
        %4322 = vrot.lane.b32.xlu0 %v3811, 24
        %v4323 = vpop.permute.xlu0 %4322
        %4324 = vrot.lane.b32.xlu0 %v3812, 24
        %v4325 = vpop.permute.xlu0 %4324
        %4390 = vrot.lane.b32.xlu0 %v3813, 32
        %v4391 = vpop.permute.xlu0 %4390
        %4392 = vrot.lane.b32.xlu0 %v3814, 32
        %v4393 = vpop.permute.xlu0 %4392
        %4394 = vrot.lane.b32.xlu0 %v3815, 32
        %v4395 = vpop.permute.xlu0 %4394
        %4396 = vrot.lane.b32.xlu0 %v3816, 32
        %v4397 = vpop.permute.xlu0 %4396
        %4398 = vrot.lane.b32.xlu0 %v3817, 32
        %v4399 = vpop.permute.xlu0 %4398
        %4400 = vrot.lane.b32.xlu0 %v3818, 32
        %v4401 = vpop.permute.xlu0 %4400
        %4402 = vrot.lane.b32.xlu0 %v3819, 32
        %v4403 = vpop.permute.xlu0 %4402
        %4404 = vrot.lane.b32.xlu0 %v3820, 32
        %v4405 = vpop.permute.xlu0 %4404
        %4406 = vrot.lane.b32.xlu0 %v3821, 32
        %v4407 = vpop.permute.xlu0 %4406
        %4408 = vrot.lane.b32.xlu0 %v3822, 32
        %v4409 = vpop.permute.xlu0 %4408
        %4410 = vrot.lane.b32.xlu0 %v3823, 32
        %v4411 = vpop.permute.xlu0 %4410
        %4412 = vrot.lane.b32.xlu0 %v3824, 32
        %v4413 = vpop.permute.xlu0 %4412
        %4414 = vrot.lane.b32.xlu0 %v3825, 32
        %v4415 = vpop.permute.xlu0 %4414
        %4416 = vrot.lane.b32.xlu0 %v3826, 32
        %v4417 = vpop.permute.xlu0 %4416
        %4418 = vrot.lane.b32.xlu0 %v3827, 32
        %v4419 = vpop.permute.xlu0 %4418
        %4420 = vrot.lane.b32.xlu0 %v3828, 32
        %v4421 = vpop.permute.xlu0 %4420
        %4422 = vrot.lane.b32.xlu0 %v3829, 32
        %v4423 = vpop.permute.xlu0 %4422
        %4424 = vrot.lane.b32.xlu0 %v3830, 32
        %v4425 = vpop.permute.xlu0 %4424
        %4426 = vrot.lane.b32.xlu0 %v3831, 32
        %v4427 = vpop.permute.xlu0 %4426
        %4428 = vrot.lane.b32.xlu0 %v3832, 32
        %v4429 = vpop.permute.xlu0 %4428
        %4430 = vrot.lane.b32.xlu0 %v3833, 32
        %v4431 = vpop.permute.xlu0 %4430
        %4432 = vrot.lane.b32.xlu0 %v3834, 32
        %v4433 = vpop.permute.xlu0 %4432
        %4434 = vrot.lane.b32.xlu0 %v3835, 32
        %v4435 = vpop.permute.xlu0 %4434
        %4436 = vrot.lane.b32.xlu0 %v3836, 32
        %v4437 = vpop.permute.xlu0 %4436
        %4438 = vrot.lane.b32.xlu0 %v3837, 32
        %v4439 = vpop.permute.xlu0 %4438
        %4440 = vrot.lane.b32.xlu0 %v3838, 32
        %v4441 = vpop.permute.xlu0 %4440
        %4442 = vrot.lane.b32.xlu0 %v3839, 32
        %v4443 = vpop.permute.xlu0 %4442
        %4444 = vrot.lane.b32.xlu0 %v3840, 32
        %v4445 = vpop.permute.xlu0 %4444
        %4446 = vrot.lane.b32.xlu0 %v3841, 32
        %v4447 = vpop.permute.xlu0 %4446
        %4448 = vrot.lane.b32.xlu0 %v3842, 32
        %v4449 = vpop.permute.xlu0 %4448
        %4450 = vrot.lane.b32.xlu0 %v3843, 32
        %v4451 = vpop.permute.xlu0 %4450
        %4452 = vrot.lane.b32.xlu0 %v3844, 32
        %v4453 = vpop.permute.xlu0 %4452
        %4518 = vrot.lane.b32.xlu0 %v3845, 40
        %v4519 = vpop.permute.xlu0 %4518
        %4520 = vrot.lane.b32.xlu0 %v3846, 40
        %v4521 = vpop.permute.xlu0 %4520
        %4522 = vrot.lane.b32.xlu0 %v3847, 40
        %v4523 = vpop.permute.xlu0 %4522
        %4524 = vrot.lane.b32.xlu0 %v3848, 40
        %v4525 = vpop.permute.xlu0 %4524
        %4526 = vrot.lane.b32.xlu0 %v3849, 40
        %v4527 = vpop.permute.xlu0 %4526
        %4528 = vrot.lane.b32.xlu0 %v3850, 40
        %v4529 = vpop.permute.xlu0 %4528
        %4530 = vrot.lane.b32.xlu0 %v3851, 40
        %v4531 = vpop.permute.xlu0 %4530
        %4532 = vrot.lane.b32.xlu0 %v3852, 40
        %v4533 = vpop.permute.xlu0 %4532
        %4534 = vrot.lane.b32.xlu0 %v3853, 40
        %v4535 = vpop.permute.xlu0 %4534
        %4536 = vrot.lane.b32.xlu0 %v3854, 40
        %v4537 = vpop.permute.xlu0 %4536
        %4538 = vrot.lane.b32.xlu0 %v3855, 40
        %v4539 = vpop.permute.xlu0 %4538
        %4540 = vrot.lane.b32.xlu0 %v3856, 40
        %v4541 = vpop.permute.xlu0 %4540
        %4542 = vrot.lane.b32.xlu0 %v3857, 40
        %v4543 = vpop.permute.xlu0 %4542
        %4544 = vrot.lane.b32.xlu0 %v3858, 40
        %v4545 = vpop.permute.xlu0 %4544
        %4546 = vrot.lane.b32.xlu0 %v3859, 40
        %v4547 = vpop.permute.xlu0 %4546
        %4548 = vrot.lane.b32.xlu0 %v3860, 40
        %v4549 = vpop.permute.xlu0 %4548
        %4550 = vrot.lane.b32.xlu0 %v3861, 40
        %v4551 = vpop.permute.xlu0 %4550
        %4552 = vrot.lane.b32.xlu0 %v3862, 40
        %v4553 = vpop.permute.xlu0 %4552
        %4554 = vrot.lane.b32.xlu0 %v3863, 40
        %v4555 = vpop.permute.xlu0 %4554
        %4556 = vrot.lane.b32.xlu0 %v3864, 40
        %v4557 = vpop.permute.xlu0 %4556
        %4558 = vrot.lane.b32.xlu0 %v3865, 40
        %v4559 = vpop.permute.xlu0 %4558
        %4560 = vrot.lane.b32.xlu0 %v3866, 40
        %v4561 = vpop.permute.xlu0 %4560
        %4562 = vrot.lane.b32.xlu0 %v3867, 40
        %v4563 = vpop.permute.xlu0 %4562
        %4564 = vrot.lane.b32.xlu0 %v3868, 40
        %v4565 = vpop.permute.xlu0 %4564
        %4566 = vrot.lane.b32.xlu0 %v3869, 40
        %v4567 = vpop.permute.xlu0 %4566
        %4568 = vrot.lane.b32.xlu0 %v3870, 40
        %v4569 = vpop.permute.xlu0 %4568
        %4570 = vrot.lane.b32.xlu0 %v3871, 40
        %v4571 = vpop.permute.xlu0 %4570
        %4572 = vrot.lane.b32.xlu0 %v3872, 40
        %v4573 = vpop.permute.xlu0 %4572
        %4574 = vrot.lane.b32.xlu0 %v3873, 40
        %v4575 = vpop.permute.xlu0 %4574
        %4576 = vrot.lane.b32.xlu0 %v3874, 40
        %v4577 = vpop.permute.xlu0 %4576
        %4578 = vrot.lane.b32.xlu0 %v3875, 40
        %v4579 = vpop.permute.xlu0 %4578
        %4580 = vrot.lane.b32.xlu0 %v3876, 40
        %v4581 = vpop.permute.xlu0 %4580
        %4646 = vrot.lane.b32.xlu0 %v3878, 48
        %v4647 = vpop.permute.xlu0 %4646
        %4648 = vrot.lane.b32.xlu0 %v3879, 48
        %v4649 = vpop.permute.xlu0 %4648
        %4650 = vrot.lane.b32.xlu0 %v3880, 48
        %v4651 = vpop.permute.xlu0 %4650
        %4652 = vrot.lane.b32.xlu0 %v3881, 48
        %v4653 = vpop.permute.xlu0 %4652
        %4654 = vrot.lane.b32.xlu0 %v3882, 48
        %v4655 = vpop.permute.xlu0 %4654
        %4656 = vrot.lane.b32.xlu0 %v3883, 48
        %v4657 = vpop.permute.xlu0 %4656
        %4658 = vrot.lane.b32.xlu0 %v3884, 48
        %v4659 = vpop.permute.xlu0 %4658
        %4660 = vrot.lane.b32.xlu0 %v3885, 48
        %v4661 = vpop.permute.xlu0 %4660
        %4662 = vrot.lane.b32.xlu0 %v3886, 48
        %v4663 = vpop.permute.xlu0 %4662
        %4664 = vrot.lane.b32.xlu0 %v3887, 48
        %v4665 = vpop.permute.xlu0 %4664
        %4666 = vrot.lane.b32.xlu0 %v3888, 48
        %v4667 = vpop.permute.xlu0 %4666
        %4668 = vrot.lane.b32.xlu0 %v3889, 48
        %v4669 = vpop.permute.xlu0 %4668
        %4670 = vrot.lane.b32.xlu0 %v3890, 48
        %v4671 = vpop.permute.xlu0 %4670
        %4672 = vrot.lane.b32.xlu0 %v3891, 48
        %v4673 = vpop.permute.xlu0 %4672
        %4674 = vrot.lane.b32.xlu0 %v3892, 48
        %v4675 = vpop.permute.xlu0 %4674
        %4676 = vrot.lane.b32.xlu0 %v3893, 48
        %v4677 = vpop.permute.xlu0 %4676
        %4678 = vrot.lane.b32.xlu0 %v3894, 48
        %v4679 = vpop.permute.xlu0 %4678
        %4680 = vrot.lane.b32.xlu0 %v3895, 48
        %v4681 = vpop.permute.xlu0 %4680
        %4682 = vrot.lane.b32.xlu0 %v3896, 48
        %v4683 = vpop.permute.xlu0 %4682
        %4684 = vrot.lane.b32.xlu0 %v3897, 48
        %v4685 = vpop.permute.xlu0 %4684
        %4686 = vrot.lane.b32.xlu0 %v3898, 48
        %v4687 = vpop.permute.xlu0 %4686
        %4688 = vrot.lane.b32.xlu0 %v3899, 48
        %v4689 = vpop.permute.xlu0 %4688
        %4690 = vrot.lane.b32.xlu0 %v3900, 48
        %v4691 = vpop.permute.xlu0 %4690
        %4692 = vrot.lane.b32.xlu0 %v3901, 48
        %v4693 = vpop.permute.xlu0 %4692
        %4694 = vrot.lane.b32.xlu0 %v3902, 48
        %v4695 = vpop.permute.xlu0 %4694
        %4696 = vrot.lane.b32.xlu0 %v3903, 48
        %v4697 = vpop.permute.xlu0 %4696
        %4698 = vrot.lane.b32.xlu0 %v3904, 48
        %v4699 = vpop.permute.xlu0 %4698
        %4700 = vrot.lane.b32.xlu0 %v3905, 48
        %v4701 = vpop.permute.xlu0 %4700
        %4702 = vrot.lane.b32.xlu0 %v3906, 48
        %v4703 = vpop.permute.xlu0 %4702
        %4704 = vrot.lane.b32.xlu0 %v3907, 48
        %v4705 = vpop.permute.xlu0 %4704
        %4706 = vrot.lane.b32.xlu0 %v3908, 48
        %v4707 = vpop.permute.xlu0 %4706
        %4708 = vrot.lane.b32.xlu0 %v3909, 48
        %v4709 = vpop.permute.xlu0 %4708
        %4774 = vrot.lane.b32.xlu0 %v3910, 56
        %v4775 = vpop.permute.xlu0 %4774
        %4776 = vrot.lane.b32.xlu0 %v3911, 56
        %v4777 = vpop.permute.xlu0 %4776
        %4778 = vrot.lane.b32.xlu0 %v3912, 56
        %v4779 = vpop.permute.xlu0 %4778
        %4780 = vrot.lane.b32.xlu0 %v3913, 56
        %v4781 = vpop.permute.xlu0 %4780
        %4782 = vrot.lane.b32.xlu0 %v3914, 56
        %v4783 = vpop.permute.xlu0 %4782
        %4784 = vrot.lane.b32.xlu0 %v3915, 56
        %v4785 = vpop.permute.xlu0 %4784
        %4786 = vrot.lane.b32.xlu0 %v3916, 56
        %v4787 = vpop.permute.xlu0 %4786
        %4788 = vrot.lane.b32.xlu0 %v3917, 56
        %v4789 = vpop.permute.xlu0 %4788
        %4790 = vrot.lane.b32.xlu0 %v3918, 56
        %v4791 = vpop.permute.xlu0 %4790
        %4792 = vrot.lane.b32.xlu0 %v3919, 56
        %v4793 = vpop.permute.xlu0 %4792
        %4794 = vrot.lane.b32.xlu0 %v3920, 56
        %v4795 = vpop.permute.xlu0 %4794
        %4796 = vrot.lane.b32.xlu0 %v3921, 56
        %v4797 = vpop.permute.xlu0 %4796
        %4798 = vrot.lane.b32.xlu0 %v3922, 56
        %v4799 = vpop.permute.xlu0 %4798
        %4800 = vrot.lane.b32.xlu0 %v3923, 56
        %v4801 = vpop.permute.xlu0 %4800
        %4802 = vrot.lane.b32.xlu0 %v3924, 56
        %v4803 = vpop.permute.xlu0 %4802
        %4804 = vrot.lane.b32.xlu0 %v3925, 56
        %v4805 = vpop.permute.xlu0 %4804
        %4806 = vrot.lane.b32.xlu0 %v3926, 56
        %v4807 = vpop.permute.xlu0 %4806
        %4808 = vrot.lane.b32.xlu0 %v3927, 56
        %v4809 = vpop.permute.xlu0 %4808
        %4810 = vrot.lane.b32.xlu0 %v3928, 56
        %v4811 = vpop.permute.xlu0 %4810
        %4812 = vrot.lane.b32.xlu0 %v3929, 56
        %v4813 = vpop.permute.xlu0 %4812
        %4814 = vrot.lane.b32.xlu0 %v3930, 56
        %v4815 = vpop.permute.xlu0 %4814
        %4816 = vrot.lane.b32.xlu0 %v3931, 56
        %v4817 = vpop.permute.xlu0 %4816
        %4818 = vrot.lane.b32.xlu0 %v3932, 56
        %v4819 = vpop.permute.xlu0 %4818
        %4820 = vrot.lane.b32.xlu0 %v3933, 56
        %v4821 = vpop.permute.xlu0 %4820
        %4822 = vrot.lane.b32.xlu0 %v3934, 56
        %v4823 = vpop.permute.xlu0 %4822
        %4824 = vrot.lane.b32.xlu0 %v3935, 56
        %v4825 = vpop.permute.xlu0 %4824
        %4826 = vrot.lane.b32.xlu0 %v3936, 56
        %v4827 = vpop.permute.xlu0 %4826
        %4828 = vrot.lane.b32.xlu0 %v3937, 56
        %v4829 = vpop.permute.xlu0 %4828
        %4830 = vrot.lane.b32.xlu0 %v3938, 56
        %v4831 = vpop.permute.xlu0 %4830
        %4832 = vrot.lane.b32.xlu0 %v3939, 56
        %v4833 = vpop.permute.xlu0 %4832
        %4834 = vrot.lane.b32.xlu0 %v3940, 56
        %v4835 = vpop.permute.xlu0 %4834
        %4836 = vrot.lane.b32.xlu0 %v3941, 56
        %v4837 = vpop.permute.xlu0 %4836
        %4902 = vrot.lane.b32.xlu0 %v3942, 64
        %v4903 = vpop.permute.xlu0 %4902
        %4904 = vrot.lane.b32.xlu0 %v3943, 64
        %v4905 = vpop.permute.xlu0 %4904
        %4906 = vrot.lane.b32.xlu0 %v3944, 64
        %v4907 = vpop.permute.xlu0 %4906
        %4908 = vrot.lane.b32.xlu0 %v3945, 64
        %v4909 = vpop.permute.xlu0 %4908
        %4910 = vrot.lane.b32.xlu0 %v3946, 64
        %v4911 = vpop.permute.xlu0 %4910
        %4912 = vrot.lane.b32.xlu0 %v3947, 64
        %v4913 = vpop.permute.xlu0 %4912
        %4914 = vrot.lane.b32.xlu0 %v3948, 64
        %v4915 = vpop.permute.xlu0 %4914
        %4916 = vrot.lane.b32.xlu0 %v3949, 64
        %v4917 = vpop.permute.xlu0 %4916
        %4918 = vrot.lane.b32.xlu0 %v3950, 64
        %v4919 = vpop.permute.xlu0 %4918
        %4920 = vrot.lane.b32.xlu0 %v3951, 64
        %v4921 = vpop.permute.xlu0 %4920
        %4922 = vrot.lane.b32.xlu0 %v3952, 64
        %v4923 = vpop.permute.xlu0 %4922
        %4924 = vrot.lane.b32.xlu0 %v3953, 64
        %v4925 = vpop.permute.xlu0 %4924
        %4926 = vrot.lane.b32.xlu0 %v3954, 64
        %v4927 = vpop.permute.xlu0 %4926
        %4928 = vrot.lane.b32.xlu0 %v3955, 64
        %v4929 = vpop.permute.xlu0 %4928
        %4930 = vrot.lane.b32.xlu0 %v3956, 64
        %v4931 = vpop.permute.xlu0 %4930
        %4932 = vrot.lane.b32.xlu0 %v3957, 64
        %v4933 = vpop.permute.xlu0 %4932
        %4934 = vrot.lane.b32.xlu0 %v3958, 64
        %v4935 = vpop.permute.xlu0 %4934
        %4936 = vrot.lane.b32.xlu0 %v3959, 64
        %v4937 = vpop.permute.xlu0 %4936
        %4938 = vrot.lane.b32.xlu0 %v3960, 64
        %v4939 = vpop.permute.xlu0 %4938
        %4940 = vrot.lane.b32.xlu0 %v3961, 64
        %v4941 = vpop.permute.xlu0 %4940
        %4942 = vrot.lane.b32.xlu0 %v3962, 64
        %v4943 = vpop.permute.xlu0 %4942
        %4944 = vrot.lane.b32.xlu0 %v3963, 64
        %v4945 = vpop.permute.xlu0 %4944
        %4946 = vrot.lane.b32.xlu0 %v3964, 64
        %v4947 = vpop.permute.xlu0 %4946
        %4948 = vrot.lane.b32.xlu0 %v3965, 64
        %v4949 = vpop.permute.xlu0 %4948
        %4950 = vrot.lane.b32.xlu0 %v3966, 64
        %v4951 = vpop.permute.xlu0 %4950
        %4952 = vrot.lane.b32.xlu0 %v3967, 64
        %v4953 = vpop.permute.xlu0 %4952
        %4954 = vrot.lane.b32.xlu0 %v3968, 64
        %v4955 = vpop.permute.xlu0 %4954
        %4956 = vrot.lane.b32.xlu0 %v3969, 64
        %v4957 = vpop.permute.xlu0 %4956
        %4958 = vrot.lane.b32.xlu0 %v3970, 64
        %v4959 = vpop.permute.xlu0 %4958
        %4960 = vrot.lane.b32.xlu0 %v3971, 64
        %v4961 = vpop.permute.xlu0 %4960
        %4962 = vrot.lane.b32.xlu0 %v3972, 64
        %v4963 = vpop.permute.xlu0 %4962
        %4964 = vrot.lane.b32.xlu0 %v3973, 64
        %v4965 = vpop.permute.xlu0 %4964
        %v4998 = vsel %vm278, %v3685, %v4007
        %v4999 = vsel %vm278, %v3686, %v4009
        %v5000 = vsel %vm278, %v3687, %v4011
        %v5001 = vsel %vm278, %v3688, %v4013
        %v5002 = vsel %vm278, %v3689, %v4015
        %v5003 = vsel %vm278, %v3690, %v4017
        %v5004 = vsel %vm278, %v3691, %v4019
        %v5005 = vsel %vm278, %v3692, %v4021
        %v5006 = vsel %vm278, %v3693, %v4023
        %v5007 = vsel %vm278, %v3694, %v4025
        %v5008 = vsel %vm278, %v3695, %v4027
        %v5009 = vsel %vm278, %v3696, %v4029
        %v5010 = vsel %vm278, %v3697, %v4031
        %v5011 = vsel %vm278, %v3698, %v4033
        %v5012 = vsel %vm278, %v3699, %v4035
        %v5013 = vsel %vm278, %v3700, %v4037
        %v5014 = vsel %vm278, %v3701, %v4039
        %v5015 = vsel %vm278, %v3702, %v4041
        %v5016 = vsel %vm278, %v3703, %v4043
        %v5017 = vsel %vm278, %v3704, %v4045
        %v5018 = vsel %vm278, %v3705, %v4047
        %v5019 = vsel %vm278, %v3706, %v4049
        %v5020 = vsel %vm278, %v3707, %v4051
        %v5021 = vsel %vm278, %v3708, %v4053
        %v5022 = vsel %vm278, %v3709, %v4055
        %v5023 = vsel %vm278, %v3710, %v4057
        %v5024 = vsel %vm278, %v3711, %v4059
        %v5025 = vsel %vm278, %v3712, %v4061
        %v5026 = vsel %vm278, %v3713, %v4063
        %v5027 = vsel %vm278, %v3714, %v4065
        %v5028 = vsel %vm278, %v3715, %v4067
        %v5029 = vsel %vm278, %v3716, %v4069
        %v5030 = vsel %vm2476, %v4998, %v4135
        %v5031 = vsel %vm2476, %v4999, %v4137
        %v5032 = vsel %vm2476, %v5000, %v4139
        %v5033 = vsel %vm2476, %v5001, %v4141
        %v5034 = vsel %vm2476, %v5002, %v4143
        %v5035 = vsel %vm2476, %v5003, %v4145
        %v5036 = vsel %vm2476, %v5004, %v4147
        %v5037 = vsel %vm2476, %v5005, %v4149
        %v5038 = vsel %vm2476, %v5006, %v4151
        %v5039 = vsel %vm2476, %v5007, %v4153
        %v5040 = vsel %vm2476, %v5008, %v4155
        %v5041 = vsel %vm2476, %v5009, %v4157
        %v5042 = vsel %vm2476, %v5010, %v4159
        %v5043 = vsel %vm2476, %v5011, %v4161
        %v5044 = vsel %vm2476, %v5012, %v4163
        %v5045 = vsel %vm2476, %v5013, %v4165
        %v5046 = vsel %vm2476, %v5014, %v4167
        %v5047 = vsel %vm2476, %v5015, %v4169
        %v5048 = vsel %vm2476, %v5016, %v4171
        %v5049 = vsel %vm2476, %v5017, %v4173
        %v5050 = vsel %vm2476, %v5018, %v4175
        %v5051 = vsel %vm2476, %v5019, %v4177
        %v5052 = vsel %vm2476, %v5020, %v4179
        %v5053 = vsel %vm2476, %v5021, %v4181
        %v5054 = vsel %vm2476, %v5022, %v4183
        %v5055 = vsel %vm2476, %v5023, %v4185
        %v5056 = vsel %vm2476, %v5024, %v4187
        %v5057 = vsel %vm2476, %v5025, %v4189
        %v5058 = vsel %vm2476, %v5026, %v4191
        %v5059 = vsel %vm2476, %v5027, %v4193
        %v5060 = vsel %vm2476, %v5028, %v4195
        %v5061 = vsel %vm2476, %v5029, %v4197
        %v5062 = vsel %vm2509, %v5030, %v4263
        %v5063 = vsel %vm2509, %v5031, %v4265
        %v5064 = vsel %vm2509, %v5032, %v4267
        %v5065 = vsel %vm2509, %v5033, %v4269
        %v5066 = vsel %vm2509, %v5034, %v4271
        %v5067 = vsel %vm2509, %v5035, %v4273
        %v5068 = vsel %vm2509, %v5036, %v4275
        %v5069 = vsel %vm2509, %v5037, %v4277
        %v5070 = vsel %vm2509, %v5038, %v4279
        %v5071 = vsel %vm2509, %v5039, %v4281
        %v5072 = vsel %vm2509, %v5040, %v4283
        %v5073 = vsel %vm2509, %v5041, %v4285
        %v5074 = vsel %vm2509, %v5042, %v4287
        %v5075 = vsel %vm2509, %v5043, %v4289
        %v5076 = vsel %vm2509, %v5044, %v4291
        %v5077 = vsel %vm2509, %v5045, %v4293
        %v5078 = vsel %vm2509, %v5046, %v4295
        %v5079 = vsel %vm2509, %v5047, %v4297
        %v5080 = vsel %vm2509, %v5048, %v4299
        %v5081 = vsel %vm2509, %v5049, %v4301
        %v5082 = vsel %vm2509, %v5050, %v4303
        %v5083 = vsel %vm2509, %v5051, %v4305
        %v5084 = vsel %vm2509, %v5052, %v4307
        %v5085 = vsel %vm2509, %v5053, %v4309
        %v5086 = vsel %vm2509, %v5054, %v4311
        %v5087 = vsel %vm2509, %v5055, %v4313
        %v5088 = vsel %vm2509, %v5056, %v4315
        %v5089 = vsel %vm2509, %v5057, %v4317
        %v5090 = vsel %vm2509, %v5058, %v4319
        %v5091 = vsel %vm2509, %v5059, %v4321
        %v5092 = vsel %vm2509, %v5060, %v4323
        %v5093 = vsel %vm2509, %v5061, %v4325
        %v5094 = vsel %vm2542, %v5062, %v4391
        %v5095 = vsel %vm2542, %v5063, %v4393
        %v5096 = vsel %vm2542, %v5064, %v4395
        %v5097 = vsel %vm2542, %v5065, %v4397
        %v5098 = vsel %vm2542, %v5066, %v4399
        %v5099 = vsel %vm2542, %v5067, %v4401
        %v5100 = vsel %vm2542, %v5068, %v4403
        %v5101 = vsel %vm2542, %v5069, %v4405
        %v5102 = vsel %vm2542, %v5070, %v4407
        %v5103 = vsel %vm2542, %v5071, %v4409
        %v5104 = vsel %vm2542, %v5072, %v4411
        %v5105 = vsel %vm2542, %v5073, %v4413
        %v5106 = vsel %vm2542, %v5074, %v4415
        %v5107 = vsel %vm2542, %v5075, %v4417
        %v5108 = vsel %vm2542, %v5076, %v4419
        %v5109 = vsel %vm2542, %v5077, %v4421
        %v5110 = vsel %vm2542, %v5078, %v4423
        %v5111 = vsel %vm2542, %v5079, %v4425
        %v5112 = vsel %vm2542, %v5080, %v4427
        %v5113 = vsel %vm2542, %v5081, %v4429
        %v5114 = vsel %vm2542, %v5082, %v4431
        %v5115 = vsel %vm2542, %v5083, %v4433
        %v5116 = vsel %vm2542, %v5084, %v4435
        %v5117 = vsel %vm2542, %v5085, %v4437
        %v5118 = vsel %vm2542, %v5086, %v4439
        %v5119 = vsel %vm2542, %v5087, %v4441
        %v5120 = vsel %vm2542, %v5088, %v4443
        %v5121 = vsel %vm2542, %v5089, %v4445
        %v5122 = vsel %vm2542, %v5090, %v4447
        %v5123 = vsel %vm2542, %v5091, %v4449
        %v5124 = vsel %vm2542, %v5092, %v4451
        %v5125 = vsel %vm2542, %v5093, %v4453
        %v5126 = vsel %vm2575, %v5094, %v4519
        %v5127 = vsel %vm2575, %v5095, %v4521
        %v5128 = vsel %vm2575, %v5096, %v4523
        %v5129 = vsel %vm2575, %v5097, %v4525
        %v5130 = vsel %vm2575, %v5098, %v4527
        %v5131 = vsel %vm2575, %v5099, %v4529
        %v5132 = vsel %vm2575, %v5100, %v4531
        %v5133 = vsel %vm2575, %v5101, %v4533
        %v5134 = vsel %vm2575, %v5102, %v4535
        %v5135 = vsel %vm2575, %v5103, %v4537
        %v5136 = vsel %vm2575, %v5104, %v4539
        %v5137 = vsel %vm2575, %v5105, %v4541
        %v5138 = vsel %vm2575, %v5106, %v4543
        %v5139 = vsel %vm2575, %v5107, %v4545
        %v5140 = vsel %vm2575, %v5108, %v4547
        %v5141 = vsel %vm2575, %v5109, %v4549
        %v5142 = vsel %vm2575, %v5110, %v4551
        %v5143 = vsel %vm2575, %v5111, %v4553
        %v5144 = vsel %vm2575, %v5112, %v4555
        %v5145 = vsel %vm2575, %v5113, %v4557
        %v5146 = vsel %vm2575, %v5114, %v4559
        %v5147 = vsel %vm2575, %v5115, %v4561
        %v5148 = vsel %vm2575, %v5116, %v4563
        %v5149 = vsel %vm2575, %v5117, %v4565
        %v5150 = vsel %vm2575, %v5118, %v4567
        %v5151 = vsel %vm2575, %v5119, %v4569
        %v5152 = vsel %vm2575, %v5120, %v4571
        %v5153 = vsel %vm2575, %v5121, %v4573
        %v5154 = vsel %vm2575, %v5122, %v4575
        %v5155 = vsel %vm2575, %v5123, %v4577
        %v5156 = vsel %vm2575, %v5124, %v4579
        %v5157 = vsel %vm2575, %v5125, %v4581
        %v5158 = vsel %vm2608, %v5126, %v4647
        %v5159 = vsel %vm2608, %v5127, %v4649
        %v5160 = vsel %vm2608, %v5128, %v4651
        %v5161 = vsel %vm2608, %v5129, %v4653
        %v5162 = vsel %vm2608, %v5130, %v4655
        %v5163 = vsel %vm2608, %v5131, %v4657
        %v5164 = vsel %vm2608, %v5132, %v4659
        %v5165 = vsel %vm2608, %v5133, %v4661
        %v5166 = vsel %vm2608, %v5134, %v4663
        %v5167 = vsel %vm2608, %v5135, %v4665
        %v5168 = vsel %vm2608, %v5136, %v4667
        %v5169 = vsel %vm2608, %v5137, %v4669
        %v5170 = vsel %vm2608, %v5138, %v4671
        %v5171 = vsel %vm2608, %v5139, %v4673
        %v5172 = vsel %vm2608, %v5140, %v4675
        %v5173 = vsel %vm2608, %v5141, %v4677
        %v5174 = vsel %vm2608, %v5142, %v4679
        %v5175 = vsel %vm2608, %v5143, %v4681
        %v5176 = vsel %vm2608, %v5144, %v4683
        %v5177 = vsel %vm2608, %v5145, %v4685
        %v5178 = vsel %vm2608, %v5146, %v4687
        %v5179 = vsel %vm2608, %v5147, %v4689
        %v5180 = vsel %vm2608, %v5148, %v4691
        %v5181 = vsel %vm2608, %v5149, %v4693
        %v5182 = vsel %vm2608, %v5150, %v4695
        %v5183 = vsel %vm2608, %v5151, %v4697
        %v5184 = vsel %vm2608, %v5152, %v4699
        %v5185 = vsel %vm2608, %v5153, %v4701
        %v5186 = vsel %vm2608, %v5154, %v4703
        %v5187 = vsel %vm2608, %v5155, %v4705
        %v5188 = vsel %vm2608, %v5156, %v4707
        %v5189 = vsel %vm2608, %v5157, %v4709
        %v5190 = vsel %vm2641, %v5158, %v4775
        %v5191 = vsel %vm2641, %v5159, %v4777
        %v5192 = vsel %vm2641, %v5160, %v4779
        %v5193 = vsel %vm2641, %v5161, %v4781
        %v5194 = vsel %vm2641, %v5162, %v4783
        %v5195 = vsel %vm2641, %v5163, %v4785
        %v5196 = vsel %vm2641, %v5164, %v4787
        %v5197 = vsel %vm2641, %v5165, %v4789
        %v5198 = vsel %vm2641, %v5166, %v4791
        %v5199 = vsel %vm2641, %v5167, %v4793
        %v5200 = vsel %vm2641, %v5168, %v4795
        %v5201 = vsel %vm2641, %v5169, %v4797
        %v5202 = vsel %vm2641, %v5170, %v4799
        %v5203 = vsel %vm2641, %v5171, %v4801
        %v5204 = vsel %vm2641, %v5172, %v4803
        %v5205 = vsel %vm2641, %v5173, %v4805
        %v5206 = vsel %vm2641, %v5174, %v4807
        %v5207 = vsel %vm2641, %v5175, %v4809
        %v5208 = vsel %vm2641, %v5176, %v4811
        %v5209 = vsel %vm2641, %v5177, %v4813
        %v5210 = vsel %vm2641, %v5178, %v4815
        %v5211 = vsel %vm2641, %v5179, %v4817
        %v5212 = vsel %vm2641, %v5180, %v4819
        %v5213 = vsel %vm2641, %v5181, %v4821
        %v5214 = vsel %vm2641, %v5182, %v4823
        %v5215 = vsel %vm2641, %v5183, %v4825
        %v5216 = vsel %vm2641, %v5184, %v4827
        %v5217 = vsel %vm2641, %v5185, %v4829
        %v5218 = vsel %vm2641, %v5186, %v4831
        %v5219 = vsel %vm2641, %v5187, %v4833
        %v5220 = vsel %vm2641, %v5188, %v4835
        %v5221 = vsel %vm2641, %v5189, %v4837
        %v5222 = vsel %vm2674, %v5190, %v4903
        %v5223 = vsel %vm2674, %v5191, %v4905
        %v5224 = vsel %vm2674, %v5192, %v4907
        %v5225 = vsel %vm2674, %v5193, %v4909
        %v5226 = vsel %vm2674, %v5194, %v4911
        %v5227 = vsel %vm2674, %v5195, %v4913
        %v5228 = vsel %vm2674, %v5196, %v4915
        %v5229 = vsel %vm2674, %v5197, %v4917
        %v5230 = vsel %vm2674, %v5198, %v4919
        %v5231 = vsel %vm2674, %v5199, %v4921
        %v5232 = vsel %vm2674, %v5200, %v4923
        %v5233 = vsel %vm2674, %v5201, %v4925
        %v5234 = vsel %vm2674, %v5202, %v4927
        %v5235 = vsel %vm2674, %v5203, %v4929
        %v5236 = vsel %vm2674, %v5204, %v4931
        %v5237 = vsel %vm2674, %v5205, %v4933
        %v5238 = vsel %vm2674, %v5206, %v4935
        %v5239 = vsel %vm2674, %v5207, %v4937
        %v5240 = vsel %vm2674, %v5208, %v4939
        %v5241 = vsel %vm2674, %v5209, %v4941
        %v5242 = vsel %vm2674, %v5210, %v4943
        %v5243 = vsel %vm2674, %v5211, %v4945
        %v5244 = vsel %vm2674, %v5212, %v4947
        %v5245 = vsel %vm2674, %v5213, %v4949
        %v5246 = vsel %vm2674, %v5214, %v4951
        %v5247 = vsel %vm2674, %v5215, %v4953
        %v5248 = vsel %vm2674, %v5216, %v4955
        %v5249 = vsel %vm2674, %v5217, %v4957
        %v5250 = vsel %vm2674, %v5218, %v4959
        %v5251 = vsel %vm2674, %v5219, %v4961
        %v5252 = vsel %vm2674, %v5220, %v4963
        %v5253 = vsel %vm2674, %v5221, %v4965
        %v5254 = vpack.c.bf16 %v5223, %v5222
        %v5255 = vpack.c.bf16 %v5225, %v5224
        %v5256 = vpack.c.bf16 %v5227, %v5226
        %v5257 = vpack.c.bf16 %v5229, %v5228
        %v5258 = vpack.c.bf16 %v5231, %v5230
        %v5259 = vpack.c.bf16 %v5233, %v5232
        %v5260 = vpack.c.bf16 %v5235, %v5234
        %v5261 = vpack.c.bf16 %v5237, %v5236
        %v5262 = vpack.c.bf16 %v5239, %v5238
        %v5263 = vpack.c.bf16 %v5241, %v5240
        %v5264 = vpack.c.bf16 %v5243, %v5242
        %v5265 = vpack.c.bf16 %v5245, %v5244
        %v5266 = vpack.c.bf16 %v5247, %v5246
        %v5267 = vpack.c.bf16 %v5249, %v5248
        %v5268 = vpack.c.bf16 %v5251, %v5250
        %v5269 = vpack.c.bf16 %v5253, %v5252
        %v5270 = vld [vmem:[%s3] sm:$0xf]
        %v5271 = vld [vmem:[%s3 + $0x4] sm:$0xf]
        %v5272 = vld [vmem:[%s3 + $0x8] sm:$0xf]
        %v5273 = vld [vmem:[%s3 + $0xc] sm:$0xf]
        %v5274 = vld [vmem:[%s3 + $0x10] sm:$0xf]
        %v5275 = vld [vmem:[%s3 + $0x14] sm:$0xf]
        %v5276 = vld [vmem:[%s3 + $0x18] sm:$0xf]
        %v5277 = vld [vmem:[%s3 + $0x1c] sm:$0xf]
        %v5278 = vld [vmem:[%s3 + $0x20] sm:$0xf]
        %v5288 = vunpack.c.l.b16 %v5270
        %v5289 = vunpack.c.l.b16 %v5271
        %v5290 = vunpack.c.l.b16 %v5272
        %v5291 = vunpack.c.l.b16 %v5273
        %v5292 = vunpack.c.l.b16 %v5274
        %v5293 = vunpack.c.l.b16 %v5275
        %v5294 = vunpack.c.l.b16 %v5276
        %v5295 = vunpack.c.l.b16 %v5277
        %v5296 = vunpack.c.l.b16 %v5278
        %v5297 = vpack.c.b16 %v5289, %v5288
        %v5298 = vpack.c.b16 %v5291, %v5290
        %v5299 = vpack.c.b16 %v5293, %v5292
        %v5300 = vpack.c.b16 %v5295, %v5294
        %v5301 = vpack.c.b16 %v5296, %v5296
        %v5307 = vsel %vm2759, %v5254, 0
        %v5310 = vsel %vm2759, %v5255, 0
        %v5313 = vsel %vm2759, %v5256, 0
        %v5316 = vsel %vm2759, %v5257, 0
        %v5319 = vsel %vm2759, %v5258, 0
        %v5322 = vsel %vm2759, %v5259, 0
        %v5325 = vsel %vm2759, %v5260, 0
        %v5328 = vsel %vm2759, %v5261, 0
        %v5331 = vsel %vm2759, %v5262, 0
        %v5334 = vsel %vm2759, %v5263, 0
        %v5337 = vsel %vm2759, %v5264, 0
        %v5340 = vsel %vm2759, %v5265, 0
        %v5343 = vsel %vm2759, %v5266, 0
        %v5346 = vsel %vm2759, %v5267, 0
        %v5349 = vsel %vm2759, %v5268, 0
        %v5352 = vsel %vm2759, %v5269, 0
        %v5355 = vsel %vm2808, %v5301, 0
        %5357 = vmatprep.subr.bf16.mxu0 0
        %5358 = vmatpush1.bf16.msra.mxu0 %v5297
        %5359 = vmatprep.subr.bf16.mxu0 0
        %5360 = vmatpush1.bf16.msra.mxu0 %v5298
        %5361 = vmatprep.subr.bf16.mxu0 0
        %5362 = vmatpush1.bf16.msra.mxu0 %v5299
        %5363 = vmatprep.subr.bf16.mxu0 0
        %5364 = vmatpush1.bf16.msra.mxu0 %v5300
        %5365 = vmatprep.subr.bf16.mxu0 0
        %5366 = vmatpush1.bf16.msra.mxu0 %v5355
        %5367 = vmatprep.subr.bf16.mxu0 0
        %5368 = vmatpush1.bf16.msra.mxu0 0
        %5369 = vmatprep.subr.bf16.mxu0 0
        %5370 = vmatpush1.bf16.msra.mxu0 0
        %5371 = vmatprep.subr.bf16.mxu0 0
        %5372 = vmatpush1.bf16.msra.mxu0 0
        %5373 = vmatprep.subr.bf16.mxu0 0
        %5374 = vmatpush1.bf16.msra.mxu0 0
        %5375 = vmatprep.subr.bf16.mxu0 0
        %5376 = vmatpush1.bf16.msra.mxu0 0
        %5377 = vmatprep.subr.bf16.mxu0 0
        %5378 = vmatpush1.bf16.msra.mxu0 0
        %5379 = vmatprep.subr.bf16.mxu0 0
        %5380 = vmatpush1.bf16.msra.mxu0 0
        %5381 = vmatprep.subr.bf16.mxu0 0
        %5382 = vmatpush1.bf16.msra.mxu0 0
        %5383 = vmatprep.subr.bf16.mxu0 0
        %5384 = vmatpush1.bf16.msra.mxu0 0
        %5385 = vmatprep.subr.bf16.mxu0 0
        %5386 = vmatpush1.bf16.msra.mxu0 0
        %5387 = vmatprep.subr.bf16.mxu0 0
        %5388 = vmatpush1.bf16.msra.mxu0 0
        %5389 = vmatprep.mubr.bf16.mxu0 0
        %5390 = vmatmul.mubr.bf16.gmra.mrb[0].mxu0 %v5307
        %v5391 = vpop.f32.mrb[0].mxu0
        %v5392 = vadd.f32 0.0, %v5391
        %v5393 = vpop.f32.mrb[0].mxu0
        %v5394 = vpop.f32.mrb[0].mxu0
        %v5395 = vadd.f32 0.0, %v5394
        %v5396 = vpop.f32.mrb[0].mxu0
        %5397 = vmatprep.mubr.bf16.mxu0 0
        %5398 = vmatmul.mubr.bf16.gmra.mrb[0].mxu0 %v5310
        %v5399 = vpop.f32.mrb[0].mxu0
        %v5400 = vadd.f32 0.0, %v5399
        %v5401 = vpop.f32.mrb[0].mxu0
        %v5402 = vpop.f32.mrb[0].mxu0
        %v5403 = vadd.f32 0.0, %v5402
        %v5404 = vpop.f32.mrb[0].mxu0
        %5405 = vmatprep.mubr.bf16.mxu0 0
        %5406 = vmatmul.mubr.bf16.gmra.mrb[0].mxu0 %v5313
        %v5407 = vpop.f32.mrb[0].mxu0
        %v5408 = vadd.f32 0.0, %v5407
        %v5409 = vpop.f32.mrb[0].mxu0
        %v5410 = vpop.f32.mrb[0].mxu0
        %v5411 = vadd.f32 0.0, %v5410
        %v5412 = vpop.f32.mrb[0].mxu0
        %5413 = vmatprep.mubr.bf16.mxu0 0
        %5414 = vmatmul.mubr.bf16.gmra.mrb[0].mxu0 %v5316
        %v5415 = vpop.f32.mrb[0].mxu0
        %v5416 = vadd.f32 0.0, %v5415
        %v5417 = vpop.f32.mrb[0].mxu0
        %v5418 = vpop.f32.mrb[0].mxu0
        %v5419 = vadd.f32 0.0, %v5418
        %v5420 = vpop.f32.mrb[0].mxu0
        %5421 = vmatprep.mubr.bf16.mxu0 0
        %5422 = vmatmul.mubr.bf16.gmra.mrb[0].mxu0 %v5319
        %v5423 = vpop.f32.mrb[0].mxu0
        %v5424 = vadd.f32 0.0, %v5423
        %v5425 = vpop.f32.mrb[0].mxu0
        %v5426 = vpop.f32.mrb[0].mxu0
        %v5427 = vadd.f32 0.0, %v5426
        %v5428 = vpop.f32.mrb[0].mxu0
        %5429 = vmatprep.mubr.bf16.mxu0 0
        %5430 = vmatmul.mubr.bf16.gmra.mrb[0].mxu0 %v5322
        %v5431 = vpop.f32.mrb[0].mxu0
        %v5432 = vadd.f32 0.0, %v5431
        %v5433 = vpop.f32.mrb[0].mxu0
        %v5434 = vpop.f32.mrb[0].mxu0
        %v5435 = vadd.f32 0.0, %v5434
        %v5436 = vpop.f32.mrb[0].mxu0
        %5437 = vmatprep.mubr.bf16.mxu0 0
        %5438 = vmatmul.mubr.bf16.gmra.mrb[0].mxu0 %v5325
        %v5439 = vpop.f32.mrb[0].mxu0
        %v5440 = vadd.f32 0.0, %v5439
        %v5441 = vpop.f32.mrb[0].mxu0
        %v5442 = vpop.f32.mrb[0].mxu0
        %v5443 = vadd.f32 0.0, %v5442
        %v5444 = vpop.f32.mrb[0].mxu0
        %5445 = vmatprep.mubr.bf16.mxu0 0
        %5446 = vmatmul.mubr.bf16.gmra.mrb[0].mxu0 %v5328
        %v5447 = vpop.f32.mrb[0].mxu0
        %v5448 = vadd.f32 0.0, %v5447
        %v5449 = vpop.f32.mrb[0].mxu0
        %v5450 = vpop.f32.mrb[0].mxu0
        %v5451 = vadd.f32 0.0, %v5450
        %v5452 = vpop.f32.mrb[0].mxu0
        %5453 = vmatprep.mubr.bf16.mxu0 0
        %5454 = vmatmul.mubr.bf16.gmra.mrb[0].mxu0 %v5331
        %v5455 = vpop.f32.mrb[0].mxu0
        %v5456 = vadd.f32 0.0, %v5455
        %v5457 = vpop.f32.mrb[0].mxu0
        %v5458 = vpop.f32.mrb[0].mxu0
        %v5459 = vadd.f32 0.0, %v5458
        %v5460 = vpop.f32.mrb[0].mxu0
        %5461 = vmatprep.mubr.bf16.mxu0 0
        %5462 = vmatmul.mubr.bf16.gmra.mrb[0].mxu0 %v5334
        %v5463 = vpop.f32.mrb[0].mxu0
        %v5464 = vadd.f32 0.0, %v5463
        %v5465 = vpop.f32.mrb[0].mxu0
        %v5466 = vpop.f32.mrb[0].mxu0
        %v5467 = vadd.f32 0.0, %v5466
        %v5468 = vpop.f32.mrb[0].mxu0
        %5469 = vmatprep.mubr.bf16.mxu0 0
        %5470 = vmatmul.mubr.bf16.gmra.mrb[0].mxu0 %v5337
        %v5471 = vpop.f32.mrb[0].mxu0
        %v5472 = vadd.f32 0.0, %v5471
        %v5473 = vpop.f32.mrb[0].mxu0
        %v5474 = vpop.f32.mrb[0].mxu0
        %v5475 = vadd.f32 0.0, %v5474
        %v5476 = vpop.f32.mrb[0].mxu0
        %5477 = vmatprep.mubr.bf16.mxu0 0
        %5478 = vmatmul.mubr.bf16.gmra.mrb[0].mxu0 %v5340
        %v5479 = vpop.f32.mrb[0].mxu0
        %v5480 = vadd.f32 0.0, %v5479
        %v5481 = vpop.f32.mrb[0].mxu0
        %v5482 = vpop.f32.mrb[0].mxu0
        %v5483 = vadd.f32 0.0, %v5482
        %v5484 = vpop.f32.mrb[0].mxu0
        %5485 = vmatprep.mubr.bf16.mxu0 0
        %5486 = vmatmul.mubr.bf16.gmra.mrb[0].mxu0 %v5343
        %v5487 = vpop.f32.mrb[0].mxu0
        %v5488 = vadd.f32 0.0, %v5487
        %v5489 = vpop.f32.mrb[0].mxu0
        %v5490 = vpop.f32.mrb[0].mxu0
        %v5491 = vadd.f32 0.0, %v5490
        %v5492 = vpop.f32.mrb[0].mxu0
        %5493 = vmatprep.mubr.bf16.mxu0 0
        %5494 = vmatmul.mubr.bf16.gmra.mrb[0].mxu0 %v5346
        %v5495 = vpop.f32.mrb[0].mxu0
        %v5496 = vadd.f32 0.0, %v5495
        %v5497 = vpop.f32.mrb[0].mxu0
        %v5498 = vpop.f32.mrb[0].mxu0
        %v5499 = vadd.f32 0.0, %v5498
        %v5500 = vpop.f32.mrb[0].mxu0
        %5501 = vmatprep.mubr.bf16.mxu0 0
        %5502 = vmatmul.mubr.bf16.gmra.mrb[0].mxu0 %v5349
        %v5503 = vpop.f32.mrb[0].mxu0
        %v5504 = vadd.f32 0.0, %v5503
        %v5505 = vpop.f32.mrb[0].mxu0
        %v5506 = vpop.f32.mrb[0].mxu0
        %v5507 = vadd.f32 0.0, %v5506
        %v5508 = vpop.f32.mrb[0].mxu0
        %5509 = vmatprep.mubr.bf16.mxu0 0
        %5510 = vmatmul.mubr.bf16.gmra.mrb[0].mxu0 %v5352
        %v5511 = vpop.f32.mrb[0].mxu0
        %v5512 = vadd.f32 0.0, %v5511
        %v5513 = vpop.f32.mrb[0].mxu0
        %v5514 = vpop.f32.mrb[0].mxu0
        %v5515 = vadd.f32 0.0, %v5514
        %v5516 = vpop.f32.mrb[0].mxu0
        %5517 = vdwg.mxu0
        %5550 = vrot.lane.b32.xlu0 %v5392, 16
        %v5551 = vpop.permute.xlu0 %5550
        %5552 = vrot.lane.b32.xlu0 %v5395, 16
        %v5553 = vpop.permute.xlu0 %5552
        %5554 = vrot.lane.b32.xlu0 %v5400, 16
        %v5555 = vpop.permute.xlu0 %5554
        %5556 = vrot.lane.b32.xlu0 %v5403, 16
        %v5557 = vpop.permute.xlu0 %5556
        %5558 = vrot.lane.b32.xlu0 %v5408, 16
        %v5559 = vpop.permute.xlu0 %5558
        %5560 = vrot.lane.b32.xlu0 %v5411, 16
        %v5561 = vpop.permute.xlu0 %5560
        %5562 = vrot.lane.b32.xlu0 %v5416, 16
        %v5563 = vpop.permute.xlu0 %5562
        %5564 = vrot.lane.b32.xlu0 %v5419, 16
        %v5565 = vpop.permute.xlu0 %5564
        %5566 = vrot.lane.b32.xlu0 %v5424, 16
        %v5567 = vpop.permute.xlu0 %5566
        %5568 = vrot.lane.b32.xlu0 %v5427, 16
        %v5569 = vpop.permute.xlu0 %5568
        %5570 = vrot.lane.b32.xlu0 %v5432, 16
        %v5571 = vpop.permute.xlu0 %5570
        %5572 = vrot.lane.b32.xlu0 %v5435, 16
        %v5573 = vpop.permute.xlu0 %5572
        %5574 = vrot.lane.b32.xlu0 %v5440, 16
        %v5575 = vpop.permute.xlu0 %5574
        %5576 = vrot.lane.b32.xlu0 %v5443, 16
        %v5577 = vpop.permute.xlu0 %5576
        %5578 = vrot.lane.b32.xlu0 %v5448, 16
        %v5579 = vpop.permute.xlu0 %5578
        %5580 = vrot.lane.b32.xlu0 %v5451, 16
        %v5581 = vpop.permute.xlu0 %5580
        %5582 = vrot.lane.b32.xlu0 %v5456, 16
        %v5583 = vpop.permute.xlu0 %5582
        %5584 = vrot.lane.b32.xlu0 %v5459, 16
        %v5585 = vpop.permute.xlu0 %5584
        %5586 = vrot.lane.b32.xlu0 %v5464, 16
        %v5587 = vpop.permute.xlu0 %5586
        %5588 = vrot.lane.b32.xlu0 %v5467, 16
        %v5589 = vpop.permute.xlu0 %5588
        %5590 = vrot.lane.b32.xlu0 %v5472, 16
        %v5591 = vpop.permute.xlu0 %5590
        %5592 = vrot.lane.b32.xlu0 %v5475, 16
        %v5593 = vpop.permute.xlu0 %5592
        %5594 = vrot.lane.b32.xlu0 %v5480, 16
        %v5595 = vpop.permute.xlu0 %5594
        %5596 = vrot.lane.b32.xlu0 %v5483, 16
        %v5597 = vpop.permute.xlu0 %5596
        %5598 = vrot.lane.b32.xlu0 %v5488, 16
        %v5599 = vpop.permute.xlu0 %5598
        %5600 = vrot.lane.b32.xlu0 %v5491, 16
        %v5601 = vpop.permute.xlu0 %5600
        %5602 = vrot.lane.b32.xlu0 %v5496, 16
        %v5603 = vpop.permute.xlu0 %5602
        %5604 = vrot.lane.b32.xlu0 %v5499, 16
        %v5605 = vpop.permute.xlu0 %5604
        %5606 = vrot.lane.b32.xlu0 %v5504, 16
        %v5607 = vpop.permute.xlu0 %5606
        %5608 = vrot.lane.b32.xlu0 %v5507, 16
        %v5609 = vpop.permute.xlu0 %5608
        %5610 = vrot.lane.b32.xlu0 %v5512, 16
        %v5611 = vpop.permute.xlu0 %5610
        %5612 = vrot.lane.b32.xlu0 %v5515, 16
        %v5613 = vpop.permute.xlu0 %5612
        %v5646 = vadd.f32 %v3101, %v5551
        %v5647 = vadd.f32 %v3102, %v5553
        %v5648 = vadd.f32 %v3103, %v5555
        %v5649 = vadd.f32 %v3104, %v5557
        %v5650 = vadd.f32 %v3105, %v5559
        %v5651 = vadd.f32 %v3106, %v5561
        %v5652 = vadd.f32 %v3107, %v5563
        %v5653 = vadd.f32 %v3108, %v5565
        %v5654 = vadd.f32 %v3109, %v5567
        %v5655 = vadd.f32 %v3110, %v5569
        %v5656 = vadd.f32 %v3111, %v5571
        %v5657 = vadd.f32 %v3112, %v5573
        %v5658 = vadd.f32 %v3113, %v5575
        %v5659 = vadd.f32 %v3114, %v5577
        %v5660 = vadd.f32 %v3115, %v5579
        %v5661 = vadd.f32 %v3116, %v5581
        %v5662 = vadd.f32 %v3117, %v5583
        %v5663 = vadd.f32 %v3118, %v5585
        %v5664 = vadd.f32 %v3119, %v5587
        %v5665 = vadd.f32 %v3120, %v5589
        %v5666 = vadd.f32 %v3121, %v5591
        %v5667 = vadd.f32 %v3122, %v5593
        %v5668 = vadd.f32 %v3123, %v5595
        %v5669 = vadd.f32 %v3124, %v5597
        %v5670 = vadd.f32 %v3125, %v5599
        %v5671 = vadd.f32 %v3126, %v5601
        %v5672 = vadd.f32 %v3127, %v5603
        %v5673 = vadd.f32 %v3128, %v5605
        %v5674 = vadd.f32 %v3129, %v5607
        %v5675 = vadd.f32 %v3130, %v5609
        %v5676 = vadd.f32 %v3131, %v5611
        %v5677 = vadd.f32 %v3132, %v5613
        %v5678 = vld [vmem:[%s5] sm:$0x1]
        %v5680 = vlaneseq
        %v5681 = vshrl.u32 %v5680, 7
        %v5682 = vsub.s32 0, %v5681
        %v5683 = vrot.slane %v5678, %v5682
        %5684 = vrot.lane.b32.xlu0 %v5683, 16
        %v5685 = vpop.permute.xlu0 %5684
        %v5687 = vadd.f32 %v5646, %v5685
        %v5688 = vadd.f32 %v5647, %v5685
        %v5689 = vadd.f32 %v5648, %v5685
        %v5690 = vadd.f32 %v5649, %v5685
        %v5691 = vadd.f32 %v5650, %v5685
        %v5692 = vadd.f32 %v5651, %v5685
        %v5693 = vadd.f32 %v5652, %v5685
        %v5694 = vadd.f32 %v5653, %v5685
        %v5695 = vadd.f32 %v5654, %v5685
        %v5696 = vadd.f32 %v5655, %v5685
        %v5697 = vadd.f32 %v5656, %v5685
        %v5698 = vadd.f32 %v5657, %v5685
        %v5699 = vadd.f32 %v5658, %v5685
        %v5700 = vadd.f32 %v5659, %v5685
        %v5701 = vadd.f32 %v5660, %v5685
        %v5702 = vadd.f32 %v5661, %v5685
        %v5703 = vadd.f32 %v5662, %v5685
        %v5704 = vadd.f32 %v5663, %v5685
        %v5705 = vadd.f32 %v5664, %v5685
        %v5706 = vadd.f32 %v5665, %v5685
        %v5707 = vadd.f32 %v5666, %v5685
        %v5708 = vadd.f32 %v5667, %v5685
        %v5709 = vadd.f32 %v5668, %v5685
        %v5710 = vadd.f32 %v5669, %v5685
        %v5711 = vadd.f32 %v5670, %v5685
        %v5712 = vadd.f32 %v5671, %v5685
        %v5713 = vadd.f32 %v5672, %v5685
        %v5714 = vadd.f32 %v5673, %v5685
        %v5715 = vadd.f32 %v5674, %v5685
        %v5716 = vadd.f32 %v5675, %v5685
        %v5717 = vadd.f32 %v5676, %v5685
        %v5718 = vadd.f32 %v5677, %v5685
        %v5719 = vld [vmem:[%s6] sm:$0xff]
        %v5720 = vld [vmem:[%s6 + $0x8] sm:$0xff]
        %v5721 = vld [vmem:[%s6 + $0x10] sm:$0xff]
        %v5722 = vld [vmem:[%s6 + $0x18] sm:$0xff]
        %v5723 = vld [vmem:[%s6 + $0x20] sm:$0xff]
        %v5724 = vld [vmem:[%s6 + $0x28] sm:$0xff]
        %v5725 = vld [vmem:[%s6 + $0x30] sm:$0xff]
        %v5726 = vld [vmem:[%s6 + $0x38] sm:$0xff]
        %v5727 = vld [vmem:[%s6 + $0x40] sm:$0xff]
        %v5728 = vld [vmem:[%s6 + $0x48] sm:$0xff]
        %v5729 = vld [vmem:[%s6 + $0x50] sm:$0xff]
        %v5730 = vld [vmem:[%s6 + $0x58] sm:$0xff]
        %v5731 = vld [vmem:[%s6 + $0x60] sm:$0xff]
        %v5732 = vld [vmem:[%s6 + $0x68] sm:$0xff]
        %v5733 = vld [vmem:[%s6 + $0x70] sm:$0xff]
        %v5734 = vld [vmem:[%s6 + $0x78] sm:$0xff]
        %5767 = vrot.lane.b32.xlu0 %v5687, 112
        %v5768 = vpop.permute.xlu0 %5767
        %5769 = vrot.lane.b32.xlu0 %v5688, 112
        %v5770 = vpop.permute.xlu0 %5769
        %5771 = vrot.lane.b32.xlu0 %v5689, 112
        %v5772 = vpop.permute.xlu0 %5771
        %5773 = vrot.lane.b32.xlu0 %v5690, 112
        %v5774 = vpop.permute.xlu0 %5773
        %5775 = vrot.lane.b32.xlu0 %v5691, 112
        %v5776 = vpop.permute.xlu0 %5775
        %5777 = vrot.lane.b32.xlu0 %v5692, 112
        %v5778 = vpop.permute.xlu0 %5777
        %5779 = vrot.lane.b32.xlu0 %v5693, 112
        %v5780 = vpop.permute.xlu0 %5779
        %5781 = vrot.lane.b32.xlu0 %v5694, 112
        %v5782 = vpop.permute.xlu0 %5781
        %5783 = vrot.lane.b32.xlu0 %v5695, 112
        %v5784 = vpop.permute.xlu0 %5783
        %5785 = vrot.lane.b32.xlu0 %v5696, 112
        %v5786 = vpop.permute.xlu0 %5785
        %5787 = vrot.lane.b32.xlu0 %v5697, 112
        %v5788 = vpop.permute.xlu0 %5787
        %5789 = vrot.lane.b32.xlu0 %v5698, 112
        %v5790 = vpop.permute.xlu0 %5789
        %5791 = vrot.lane.b32.xlu0 %v5699, 112
        %v5792 = vpop.permute.xlu0 %5791
        %5793 = vrot.lane.b32.xlu0 %v5700, 112
        %v5794 = vpop.permute.xlu0 %5793
        %5795 = vrot.lane.b32.xlu0 %v5701, 112
        %v5796 = vpop.permute.xlu0 %5795
        %5797 = vrot.lane.b32.xlu0 %v5702, 112
        %v5798 = vpop.permute.xlu0 %5797
        %5799 = vrot.lane.b32.xlu0 %v5703, 112
        %v5800 = vpop.permute.xlu0 %5799
        %5801 = vrot.lane.b32.xlu0 %v5704, 112
        %v5802 = vpop.permute.xlu0 %5801
        %5803 = vrot.lane.b32.xlu0 %v5705, 112
        %v5804 = vpop.permute.xlu0 %5803
        %5805 = vrot.lane.b32.xlu0 %v5706, 112
        %v5806 = vpop.permute.xlu0 %5805
        %5807 = vrot.lane.b32.xlu0 %v5707, 112
        %v5808 = vpop.permute.xlu0 %5807
        %5809 = vrot.lane.b32.xlu0 %v5708, 112
        %v5810 = vpop.permute.xlu0 %5809
        %5811 = vrot.lane.b32.xlu0 %v5709, 112
        %v5812 = vpop.permute.xlu0 %5811
        %5813 = vrot.lane.b32.xlu0 %v5710, 112
        %v5814 = vpop.permute.xlu0 %5813
        %5815 = vrot.lane.b32.xlu0 %v5711, 112
        %v5816 = vpop.permute.xlu0 %5815
        %5817 = vrot.lane.b32.xlu0 %v5712, 112
        %v5818 = vpop.permute.xlu0 %5817
        %5819 = vrot.lane.b32.xlu0 %v5713, 112
        %v5820 = vpop.permute.xlu0 %5819
        %5821 = vrot.lane.b32.xlu0 %v5714, 112
        %v5822 = vpop.permute.xlu0 %5821
        %5823 = vrot.lane.b32.xlu0 %v5715, 112
        %v5824 = vpop.permute.xlu0 %5823
        %5825 = vrot.lane.b32.xlu0 %v5716, 112
        %v5826 = vpop.permute.xlu0 %5825
        %5827 = vrot.lane.b32.xlu0 %v5717, 112
        %v5828 = vpop.permute.xlu0 %5827
        %5829 = vrot.lane.b32.xlu0 %v5718, 112
        %v5830 = vpop.permute.xlu0 %5829
        %5863 = vmatprep.subr.mxu0 0.0
        %5864 = vmatpush1.msra.mxu0 %v5768
        %5865 = vmatprep.subr.mxu0 0.0
        %5866 = vmatpush1.msra.mxu0 %v5770
        %5867 = vmatprep.subr.mxu0 0.0
        %5868 = vmatpush1.msra.mxu0 %v5772
        %5869 = vmatprep.subr.mxu0 0.0
        %5870 = vmatpush1.msra.mxu0 %v5774
        %5871 = vmatprep.subr.mxu0 0.0
        %5872 = vmatpush1.msra.mxu0 %v5776
        %5873 = vmatprep.subr.mxu0 0.0
        %5874 = vmatpush1.msra.mxu0 %v5778
        %5875 = vmatprep.subr.mxu0 0.0
        %5876 = vmatpush1.msra.mxu0 %v5780
        %5877 = vmatprep.subr.mxu0 0.0
        %5878 = vmatpush1.msra.mxu0 %v5782
        %5879 = vmatprep.subr.mxu0 0.0
        %5880 = vmatpush1.msra.mxu0 %v5784
        %5881 = vmatprep.subr.mxu0 0.0
        %5882 = vmatpush1.msra.mxu0 %v5786
        %5883 = vmatprep.subr.mxu0 0.0
        %5884 = vmatpush1.msra.mxu0 %v5788
        %5885 = vmatprep.subr.mxu0 0.0
        %5886 = vmatpush1.msra.mxu0 %v5790
        %5887 = vmatprep.subr.mxu0 0.0
        %5888 = vmatpush1.msra.mxu0 %v5792
        %5889 = vmatprep.subr.mxu0 0.0
        %5890 = vmatpush1.msra.mxu0 %v5794
        %5891 = vmatprep.subr.mxu0 0.0
        %5892 = vmatpush1.msra.mxu0 %v5796
        %5893 = vmatprep.subr.mxu0 0.0
        %5894 = vmatpush1.msra.mxu0 %v5798
        %5895 = vmatprep.subr.mxu0 0.0
        %5896 = vmatpush1.msra.mxu0 %v5800
        %5897 = vmatprep.subr.mxu0 0.0
        %5898 = vmatpush1.msra.mxu0 %v5802
        %5899 = vmatprep.subr.mxu0 0.0
        %5900 = vmatpush1.msra.mxu0 %v5804
        %5901 = vmatprep.subr.mxu0 0.0
        %5902 = vmatpush1.msra.mxu0 %v5806
        %5903 = vmatprep.subr.mxu0 0.0
        %5904 = vmatpush1.msra.mxu0 %v5808
        %5905 = vmatprep.subr.mxu0 0.0
        %5906 = vmatpush1.msra.mxu0 %v5810
        %5907 = vmatprep.subr.mxu0 0.0
        %5908 = vmatpush1.msra.mxu0 %v5812
        %5909 = vmatprep.subr.mxu0 0.0
        %5910 = vmatpush1.msra.mxu0 %v5814
        %5911 = vmatprep.subr.mxu0 0.0
        %5912 = vmatpush1.msra.mxu0 %v5816
        %5913 = vmatprep.subr.mxu0 0.0
        %5914 = vmatpush1.msra.mxu0 %v5818
        %5915 = vmatprep.subr.mxu0 0.0
        %5916 = vmatpush1.msra.mxu0 %v5820
        %5917 = vmatprep.subr.mxu0 0.0
        %5918 = vmatpush1.msra.mxu0 %v5822
        %5919 = vmatprep.subr.mxu0 0.0
        %5920 = vmatpush1.msra.mxu0 %v5824
        %5921 = vmatprep.subr.mxu0 0.0
        %5922 = vmatpush1.msra.mxu0 %v5826
        %5923 = vmatprep.subr.mxu0 0.0
        %5924 = vmatpush1.msra.mxu0 %v5828
        %5925 = vmatprep.subr.mxu0 0.0
        %5926 = vmatpush1.msra.mxu0 %v5830
        %5927 = vmatprep.mubr.f32.mxu0 %v5720
        %5928 = vmatmul.mubr.f32.gmra.mrb[0].mxu0 %v5719
        %v5929 = vpop.f32.mrb[0].mxu0
        %v5930 = vadd.f32 0.0, %v5929
        %v5931 = vpop.f32.mrb[0].mxu0
        %5932 = vmatprep.mubr.f32.mxu0 %v5722
        %5933 = vmatmul.mubr.f32.gmra.mrb[0].mxu0 %v5721
        %v5934 = vpop.f32.mrb[0].mxu0
        %v5935 = vadd.f32 0.0, %v5934
        %v5936 = vpop.f32.mrb[0].mxu0
        %5937 = vmatprep.mubr.f32.mxu0 %v5724
        %5938 = vmatmul.mubr.f32.gmra.mrb[0].mxu0 %v5723
        %v5939 = vpop.f32.mrb[0].mxu0
        %v5940 = vadd.f32 0.0, %v5939
        %v5941 = vpop.f32.mrb[0].mxu0
        %5942 = vmatprep.mubr.f32.mxu0 %v5726
        %5943 = vmatmul.mubr.f32.gmra.mrb[0].mxu0 %v5725
        %v5944 = vpop.f32.mrb[0].mxu0
        %v5945 = vadd.f32 0.0, %v5944
        %v5946 = vpop.f32.mrb[0].mxu0
        %5947 = vmatprep.mubr.f32.mxu0 %v5728
        %5948 = vmatmul.mubr.f32.gmra.mrb[0].mxu0 %v5727
        %v5949 = vpop.f32.mrb[0].mxu0
        %v5950 = vadd.f32 0.0, %v5949
        %v5951 = vpop.f32.mrb[0].mxu0
        %5952 = vmatprep.mubr.f32.mxu0 %v5730
        %5953 = vmatmul.mubr.f32.gmra.mrb[0].mxu0 %v5729
        %v5954 = vpop.f32.mrb[0].mxu0
        %v5955 = vadd.f32 0.0, %v5954
        %v5956 = vpop.f32.mrb[0].mxu0
        %5957 = vmatprep.mubr.f32.mxu0 %v5732
        %5958 = vmatmul.mubr.f32.gmra.mrb[0].mxu0 %v5731
        %v5959 = vpop.f32.mrb[0].mxu0
        %v5960 = vadd.f32 0.0, %v5959
        %v5961 = vpop.f32.mrb[0].mxu0
        %5962 = vmatprep.mubr.f32.mxu0 %v5734
        %5963 = vmatmul.mubr.f32.gmra.mrb[0].mxu0 %v5733
        %v5964 = vpop.f32.mrb[0].mxu0
        %v5965 = vadd.f32 0.0, %v5964
        %v5966 = vpop.f32.mrb[0].mxu0
        %5967 = vdwg.mxu0
        %5968 = vst.msk [vmem:[%s271] sm:$0xff] %vm278, %v5930
        %5969 = vst.msk [vmem:[%s271 + $0x8] sm:$0xff] %vm278, %v5935
        %5970 = vst.msk [vmem:[%s271 + $0x10] sm:$0xff] %vm278, %v5940
        %5971 = vst.msk [vmem:[%s271 + $0x18] sm:$0xff] %vm278, %v5945
        %5972 = vst.msk [vmem:[%s271 + $0x20] sm:$0xff] %vm278, %v5950
        %5973 = vst.msk [vmem:[%s271 + $0x28] sm:$0xff] %vm278, %v5955
        %5974 = vst.msk [vmem:[%s271 + $0x30] sm:$0xff] %vm278, %v5960
        %5975 = vst.msk [vmem:[%s271 + $0x38] sm:$0xff] %vm278, %v5965
        %s5976 = sand.u32 %s181, 1
        %s5977 = scalar_lea.sflag [#allocation5], %s5976
        %s5978 = sand.u32 %s181, 1
        %s5979 = smul.addr %s5978, 64
        %s5980 = scalar_lea.vmem [#allocation4], %s5979
        // Predicated region
        $region49: #{tpu_custom_call.1} parent=47 // pred_check
          %p5981 = pneg %p191
        $region50: #{tpu_custom_call.1} parent=47 // pred_check_branch
          %5983 = sbr.rel (%p5981) target = $region52
        $region51: #{tpu_custom_call.1} parent=47 // pred_region
          %s5985 = ssub.s32 1024, 1024
          %5986 = vsyncadd %s5977, %s5985
          %s5987 = smul.addr %s21, 8
          %s5988 = smul.addr %s5987, 128
          %s5989 = scalar_lea.hbm %s7, %s5988
          %s5990 = sshll.u32 %s5980, 4
          %s5991 = int_to_ptr.vmem [resolvable:$true] %s5990
          %5996 = dma.vmem_to_hbm [thread:$0]  %s5991, 1024, %s5989, %s5977, 128, 128, 8
        $region52: #{tpu_custom_call.1} parent=47 // pred_fallthru
          _
      $region48: #{tpu_custom_call.1} parent=5 // pred_fallthru
        _
      %p5997 = scmp.le.s32.totalorder 2, %s16
      // Predicated region
      $region53: #{tpu_custom_call.1} parent=5 // pred_check
        %p5998 = pneg %p5997
      $region54: #{tpu_custom_call.1} parent=5 // pred_check_branch
        %6000 = sbr.rel (%p5998) target = $region56
      $region55: #{tpu_custom_call.1} parent=5 // pred_region
        %s6001 = ssub.s32 %s16, 2
        // Predicated region
        $region57: #{tpu_custom_call.1} parent=55 // pred_check
          %p6002 = pneg %p197
        $region58: #{tpu_custom_call.1} parent=55 // pred_check_branch
          %6004 = sbr.rel (%p6002) target = $region60
        $region59: #{tpu_custom_call.1} parent=55 // pred_region
          %s6005 = sand.u32 %s182, 1
          %s6006 = scalar_lea.sflag [#allocation5], %s6005
          %s6007 = sand.u32 %s182, 1
          %s6008 = smul.addr %s6007, 64
          %s6009 = scalar_lea.vmem [#allocation4], %s6008
          %6010 = dma.done %s6006, 1024
        $region60: #{tpu_custom_call.1} parent=55 // pred_fallthru
          _
      $region56: #{tpu_custom_call.1} parent=5 // pred_fallthru
        _
    $region6: #{tpu_custom_call.1} parent=1 // loop_footer
      %s20 = sadd.s32 1, %s16
    $region7: #{tpu_custom_call.1} parent=1 // loop_footer_branch
      %15 = sbr.rel target = $region3
    $region8: #{tpu_custom_call.1} parent=1 // loop_exit
      _
    %6011 = vsyncpa [#allocation5], 1
    %s6012 = scalar_lea.sflag [#allocation5], 1
    %6013 = vsyncpa %s6012, 1

</llo_original>
